<compile_context>
chip_gen: v5e
topology: v5e:2x2
jax: 0.10.0
libtpu: 0.0.40
codegen_flags: <defaults>
</compile_context>

<pallas_src>
import functools

import jax
import jax.numpy as jnp
from jax.experimental import pallas as pl
from jax.experimental.pallas import tpu as pltpu

HP = 128  # lane-padded per-direction hidden slot (= one full vreg lane width)


def _round_up(x, m):
    return ((x + m - 1) // m) * m


# ----------------------------------------------------------------------------- kernel
def _bigru_kernel(idx_ref, proj_ref, whhf_ref, whhb_ref, bhhf_ref, bhhb_ref,
                  out_ref, *, T, Bp, Vpad):
    """Fused bidirectional GRU (embedding/input-projection gather + recurrence).

    idx_ref:  (2*T*Bp, 1) int32  rows 0:T*Bp  -> token id at time t (forward order)
                                 rows T*Bp:   -> Vpad + token id at time T-1-t (backward)
    proj_ref: (2*Vpad, 3*HP) f32 per-token gate inputs (emb @ W_ih.T + b_ih), rows 0:Vpad
                                 forward table, rows Vpad: backward table; gate slots [r|z|n]
    whh*_ref: (HP, 3*HP) f32     hidden->gate weights per direction (rows H: are zero)
    bhh*_ref: (1, 3*HP)  f32
    out_ref:  (2*Bp, HP) f32     rows 0:Bp = final forward h, rows Bp: = final backward h
    """
    n_rows = 2 * T * Bp

    # ---- fused "embedding -> input projection" for every step of both directions ----
    # One-hot gather on the MXU: gx[i] = proj[idx[i]] (exact, one-hot rows). Replaces the
    # XLA embedding gather + transpose/reshape + per-call input matmul of the old version.
    lanes = jax.lax.broadcasted_iota(jnp.int32, (n_rows, 2 * Vpad), 1)
    onehot = (idx_ref[...] == lanes).astype(jnp.float32)
    gx = jnp.dot(onehot, proj_ref[...], preferred_element_type=jnp.float32)  # (2*T*Bp, 3*HP)

    # Loop-invariant operands loaded once.
    whh_f = whhf_ref[...]
    whh_b = whhb_ref[...]
    bhh_f = bhhf_ref[...]
    bhh_b = bhhb_ref[...]

    # Padded lanes (H:HP) stay exactly zero through the recurrence (zero weights/biases
    # there); padded batch rows are computed but never read back.
    h_f = jnp.zeros((Bp, HP), jnp.float32)
    h_b = jnp.zeros((Bp, HP), jnp.float32)

    # T is small & static -> fully unrolled. Both directions advance in the same step and
    # are independent, so the serial matmul->sigmoid/tanh chain is T stages long.
    # TODO(synk): for large T*Bp, chunk gx via a grid / lax.fori_loop + VMEM scratch
    # (v7x has only 64 MiB VMEM) and shard a batch grid axis across TensorCores with
    # dimension_semantics=("parallel",); if bundle dumps show per-step whh weight
    # re-pushes, keep the RHS resident via pltpu.matmul_push_rhs / matmul_acc_lhs.
    for t in range(T):
        gx_f = gx[t * Bp:(t + 1) * Bp, :]                 # whole (8, 384) tile slices
        gx_b = gx[(T + t) * Bp:(T + t + 1) * Bp, :]

        gh_f = jnp.dot(h_f, whh_f, preferred_element_type=jnp.float32) + bhh_f
        gh_b = jnp.dot(h_b, whh_b, preferred_element_type=jnp.float32) + bhh_b

        r_f = jax.nn.sigmoid(gx_f[:, 0:HP] + gh_f[:, 0:HP])
        z_f = jax.nn.sigmoid(gx_f[:, HP:2 * HP] + gh_f[:, HP:2 * HP])
        n_f = jnp.tanh(gx_f[:, 2 * HP:3 * HP] + r_f * gh_f[:, 2 * HP:3 * HP])
        h_f = n_f + z_f * (h_f - n_f)

        r_b = jax.nn.sigmoid(gx_b[:, 0:HP] + gh_b[:, 0:HP])
        z_b = jax.nn.sigmoid(gx_b[:, HP:2 * HP] + gh_b[:, HP:2 * HP])
        n_b = jnp.tanh(gx_b[:, 2 * HP:3 * HP] + r_b * gh_b[:, 2 * HP:3 * HP])
        h_b = n_b + z_b * (h_b - n_b)

    out_ref[0:Bp, :] = h_f
    out_ref[Bp:2 * Bp, :] = h_b


# --------------------------------------------------------------- one-time weight packing
def pack_params(params):
    """Pack PyTorch-layout weights into the kernel layout. Call ONCE at init.

    Also folds embedding + W_ih + b_ih into a per-token gate table, so the per-call path
    never re-traces any packing. Returns (arrays_dict, hidden_size).
    """
    emb = params["embedding"].astype(jnp.float32)          # (V, E), row 0 == 0 (padding)
    V, E = emb.shape
    H = params["whh_f"].shape[1]
    assert H <= HP, f"hidden_size={H} > {HP}: enlarge HP or add lane tiling"
    assert params["wih_f"].shape == (3 * H, E)
    Vpad = max(128, _round_up(V, 128))
    # TODO(synk): for large vocabularies the (2*Vpad, 3*HP) VMEM-resident table gets too
    # big — switch the kernel's one-hot gather to an XLA/DMA row gather feeding gx.

    proj = jnp.zeros((2 * Vpad, 3 * HP), jnp.float32)
    packed = {}
    for d, suf in enumerate(("f", "b")):                   # 0 = forward, 1 = backward
        wih = params[f"wih_{suf}"].astype(jnp.float32)     # (3H, E), gate rows [r|z|n]
        whh = params[f"whh_{suf}"].astype(jnp.float32)     # (3H, H)
        bih = params[f"bih_{suf}"].astype(jnp.float32)     # (3H,)
        bhh = params[f"bhh_{suf}"].astype(jnp.float32)     # (3H,)
        whh_d = jnp.zeros((HP, 3 * HP), jnp.float32)
        bhh_d = jnp.zeros((1, 3 * HP), jnp.float32)
        for g in range(3):                                 # r, z, n
            col = g * HP
            proj = proj.at[d * Vpad:d * Vpad + V, col:col + H].set(
                emb @ wih[g * H:(g + 1) * H, :].T + bih[g * H:(g + 1) * H])
            whh_d = whh_d.at[0:H, col:col + H].set(whh[g * H:(g + 1) * H, :].T)
            bhh_d = bhh_d.at[0, col:col + H].set(bhh[g * H:(g + 1) * H])
        packed[f"whh_{suf}"] = whh_d
        packed[f"bhh_{suf}"] = bhh_d
    packed["proj"] = proj
    return packed, H


# --------------------------------------------------------------------------- wrapper
def text_recurrent_layer(tokens, packed, *, hidden_size):
    """tokens: (B, T) int32 -> (B, 2*hidden_size) f32 (== [h_fwd_final || h_bwd_final])."""
    B, T = tokens.shape
    Bp = _round_up(max(B, 1), 8)                           # full sublane tile
    proj = packed["proj"]
    Vpad = proj.shape[0] // 2
    H = hidden_size

    # Tiny int index plumbing (fuses into one XLA op): forward time order for rows
    # 0:T*Bp, reversed time order (+Vpad table offset) for the backward direction.
    tok_tm = jnp.pad(tokens.T.astype(jnp.int32), ((0, 0), (0, Bp - B)))   # (T, Bp)
    idx = jnp.concatenate(
        [tok_tm.reshape(-1), jnp.flip(tok_tm, axis=0).reshape(-1) + Vpad]
    ).reshape(2 * T * Bp, 1)

    kernel = functools.partial(_bigru_kernel, T=T, Bp=Bp, Vpad=Vpad)
    out = pl.pallas_call(
        kernel,
        out_shape=jax.ShapeDtypeStruct((2 * Bp, HP), jnp.float32),
        # No grid: all operands are tiny and live whole in VMEM.
        in_specs=[pl.BlockSpec(memory_space=pltpu.VMEM)] * 6,
        out_specs=pl.BlockSpec(memory_space=pltpu.VMEM),
    )(idx, proj, packed["whh_f"], packed["whh_b"], packed["bhh_f"], packed["bhh_b"])

    # LastTimeStep extraction: [h_forward_final || h_backward_final]
    return jnp.concatenate([out[0:B, 0:H], out[Bp:Bp + B, 0:H]], axis=-1)


# -------------------------------------------------------------------- pure-JAX reference
def _gru_direction_ref(x, wih, whh, bih, bhh, H, reverse):
    """Plain-JAX single-direction GRU with native PyTorch weight layout. x: (T,B,E)."""
    T, B, _ = x.shape
    h = jnp.zeros((B, H), jnp.float32)
    order = range(T - 1, -1, -1) if reverse else range(T)
    for t in order:
        gx = x[t] @ wih.T + bih
        gh = h @ whh.T + bhh
        r = jax.nn.sigmoid(gx[:, :H] + gh[:, :H])
        z = jax.nn.sigmoid(gx[:, H:2 * H] + gh[:, H:2 * H])
        n = jnp.tanh(gx[:, 2 * H:] + r * gh[:, 2 * H:])
        h = (1.0 - z) * n + z * h
    return h


def reference_jax(tokens, params):
    emb = params["embedding"]
    H = params["whh_f"].shape[1]
    x = jnp.take(emb, tokens, axis=0)
    x = jnp.transpose(x, (1, 0, 2)).astype(jnp.float32)
    h_f = _gru_direction_ref(x, params["wih_f"], params["whh_f"],
                             params["bih_f"], params["bhh_f"], H, reverse=False)
    h_b = _gru_direction_ref(x, params["wih_b"], params["whh_b"],
                             params["bih_b"], params["bhh_b"], H, reverse=True)
    return jnp.concatenate([h_f, h_b], axis=-1)


# ----------------------------------------------------------------------------- params
def init_params(key, vocab_size, emb_dim, hidden):
    """Synthetic parameters in native PyTorch nn.Embedding / nn.GRU layout."""
    ks = jax.random.split(key, 9)
    bound = 1.0 / jnp.sqrt(hidden * 1.0)

    emb = jax.random.normal(ks[0], (vocab_size, emb_dim), jnp.float32)
    emb = emb.at[0].set(0.0)                          # padding_idx=0

    def u(k, shape):
        return jax.random.uniform(k, shape, jnp.float32, -bound, bound)

    return dict(
        embedding=emb,
        # PyTorch layout: weight_ih (3H, E), weight_hh (3H, H), biases (3H,), gates [r|z|n]
        wih_f=u(ks[1], (3 * hidden, emb_dim)),
        whh_f=u(ks[2], (3 * hidden, hidden)),
        bih_f=u(ks[3], (3 * hidden,)),
        bhh_f=u(ks[4], (3 * hidden,)),
        wih_b=u(ks[5], (3 * hidden, emb_dim)),
        whh_b=u(ks[6], (3 * hidden, hidden)),
        bih_b=u(ks[7], (3 * hidden,)),
        bhh_b=u(ks[8], (3 * hidden,)),
    )


if __name__ == "__main__":
    B, T = 2, 8
    VOCAB, EMB, HID = 50, 20, 20   # module defaults: emb_dim=20, hidden=20, bidirectional

    key = jax.random.PRNGKey(0)
    k_par, k_tok = jax.random.split(key)
    params = init_params(k_par, VOCAB, EMB, HID)
    tokens = jax.random.randint(k_tok, (B, T), 0, VOCAB, dtype=jnp.int32)
    tokens = tokens.at[0, -2:].set(0)  # include some padding tokens

    # One-time packing (outside the per-call hot path), then a jitted forward.
    packed, H = pack_params(params)
    fwd = jax.jit(functools.partial(text_recurrent_layer, hidden_size=H))

    out = jax.block_until_ready(fwd(tokens, packed))
    ref = jax.block_until_ready(reference_jax(tokens, params))

    assert out.shape == (B, 2 * HID), out.shape
    max_err = float(jnp.max(jnp.abs(out - ref)))
    assert jnp.allclose(out, ref, atol=1e-4, rtol=1e-4), f"max err {max_err}"

    print("KERNEL_OK")
</pallas_src>

<mosaic_0001>
module attributes {stable_mosaic.version = 11 : i64} {
  func.func @_bigru_kernel(%arg0: memref<128x1xi32, #tpu.memory_space<vmem>>, %arg1: memref<256x384xf32, #tpu.memory_space<vmem>>, %arg2: memref<128x384xf32, #tpu.memory_space<vmem>>, %arg3: memref<128x384xf32, #tpu.memory_space<vmem>>, %arg4: memref<1x384xf32, #tpu.memory_space<vmem>>, %arg5: memref<1x384xf32, #tpu.memory_space<vmem>>, %arg6: memref<16x128xf32, #tpu.memory_space<vmem>>) attributes {dimension_semantics = [], scalar_prefetch = 0 : i64, scratch_operands = 0 : i64, tpu.core_type = #tpu.core_type<tc>} {
    %0 = tpu.iota {dimensions = array<i32: 1>} : vector<128x256xi32>
    %c0 = arith.constant 0 : index
    %c0_0 = arith.constant 0 : index
    %1 = vector.load %arg0[%c0, %c0_0] : memref<128x1xi32, #tpu.memory_space<vmem>>, vector<128x1xi32>
    %2 = vector.broadcast %1 : vector<128x1xi32> to vector<128x256xi32>
    %3 = arith.cmpi eq, %2, %0 : vector<128x256xi32>
    %4 = arith.extui %3 : vector<128x256xi1> to vector<128x256xi32>
    %5 = arith.sitofp %4 : vector<128x256xi32> to vector<128x256xf32>
    %c0_1 = arith.constant 0 : index
    %c0_2 = arith.constant 0 : index
    %6 = vector.load %arg1[%c0_1, %c0_2] : memref<256x384xf32, #tpu.memory_space<vmem>>, vector<256x384xf32>
    %cst = arith.constant dense<0.000000e+00> : vector<128x384xf32>
    %7 = tpu.matmul %5, %6, %cst {dimension_numbers = #tpu.dot_dimension_numbers<[1], [0], [0], [1], [0, 0, 1, 1], [], []>} : vector<128x256xf32>, vector<256x384xf32>, vector<128x384xf32> -> vector<128x384xf32>
    %c0_3 = arith.constant 0 : index
    %c0_4 = arith.constant 0 : index
    %8 = vector.load %arg2[%c0_3, %c0_4] : memref<128x384xf32, #tpu.memory_space<vmem>>, vector<128x384xf32>
    %c0_5 = arith.constant 0 : index
    %c0_6 = arith.constant 0 : index
    %9 = vector.load %arg3[%c0_5, %c0_6] : memref<128x384xf32, #tpu.memory_space<vmem>>, vector<128x384xf32>
    %c0_7 = arith.constant 0 : index
    %c0_8 = arith.constant 0 : index
    %10 = vector.load %arg4[%c0_7, %c0_8] : memref<1x384xf32, #tpu.memory_space<vmem>>, vector<1x384xf32>
    %c0_9 = arith.constant 0 : index
    %c0_10 = arith.constant 0 : index
    %11 = vector.load %arg5[%c0_9, %c0_10] : memref<1x384xf32, #tpu.memory_space<vmem>>, vector<1x384xf32>
    %cst_11 = arith.constant 0.000000e+00 : f32
    %12 = vector.broadcast %cst_11 : f32 to vector<8x128xf32>
    %cst_12 = arith.constant 0.000000e+00 : f32
    %13 = vector.broadcast %cst_12 : f32 to vector<8x128xf32>
    %14 = vector.extract_strided_slice %7 {offsets = [0, 0], sizes = [8, 384], strides = [1, 1]} : vector<128x384xf32> to vector<8x384xf32>
    %15 = vector.extract_strided_slice %7 {offsets = [64, 0], sizes = [8, 384], strides = [1, 1]} : vector<128x384xf32> to vector<8x384xf32>
    %cst_13 = arith.constant dense<0.000000e+00> : vector<8x384xf32>
    %16 = tpu.matmul %12, %8, %cst_13 {dimension_numbers = #tpu.dot_dimension_numbers<[1], [0], [0], [1], [0, 0, 1, 1], [], []>} : vector<8x128xf32>, vector<128x384xf32>, vector<8x384xf32> -> vector<8x384xf32>
    %17 = vector.broadcast %10 : vector<1x384xf32> to vector<8x384xf32>
    %18 = arith.addf %16, %17 : vector<8x384xf32>
    %cst_14 = arith.constant dense<0.000000e+00> : vector<8x384xf32>
    %19 = tpu.matmul %13, %9, %cst_14 {dimension_numbers = #tpu.dot_dimension_numbers<[1], [0], [0], [1], [0, 0, 1, 1], [], []>} : vector<8x128xf32>, vector<128x384xf32>, vector<8x384xf32> -> vector<8x384xf32>
    %20 = vector.broadcast %11 : vector<1x384xf32> to vector<8x384xf32>
    %21 = arith.addf %19, %20 : vector<8x384xf32>
    %22 = vector.extract_strided_slice %14 {offsets = [0, 0], sizes = [8, 128], strides = [1, 1]} : vector<8x384xf32> to vector<8x128xf32>
    %23 = vector.extract_strided_slice %18 {offsets = [0, 0], sizes = [8, 128], strides = [1, 1]} : vector<8x384xf32> to vector<8x128xf32>
    %24 = arith.addf %22, %23 : vector<8x128xf32>
    %25 = arith.negf %24 : vector<8x128xf32>
    %26 = math.exp %25 : vector<8x128xf32>
    %cst_15 = arith.constant 1.000000e+00 : f32
    %27 = vector.broadcast %cst_15 : f32 to vector<8x128xf32>
    %28 = arith.addf %27, %26 : vector<8x128xf32>
    %29 = arith.divf %27, %28 : vector<8x128xf32>
    %30 = vector.extract_strided_slice %14 {offsets = [0, 128], sizes = [8, 128], strides = [1, 1]} : vector<8x384xf32> to vector<8x128xf32>
    %31 = vector.extract_strided_slice %18 {offsets = [0, 128], sizes = [8, 128], strides = [1, 1]} : vector<8x384xf32> to vector<8x128xf32>
    %32 = arith.addf %30, %31 : vector<8x128xf32>
    %33 = arith.negf %32 : vector<8x128xf32>
    %34 = math.exp %33 : vector<8x128xf32>
    %cst_16 = arith.constant 1.000000e+00 : f32
    %35 = vector.broadcast %cst_16 : f32 to vector<8x128xf32>
    %36 = arith.addf %35, %34 : vector<8x128xf32>
    %37 = arith.divf %35, %36 : vector<8x128xf32>
    %38 = vector.extract_strided_slice %14 {offsets = [0, 256], sizes = [8, 128], strides = [1, 1]} : vector<8x384xf32> to vector<8x128xf32>
    %39 = vector.extract_strided_slice %18 {offsets = [0, 256], sizes = [8, 128], strides = [1, 1]} : vector<8x384xf32> to vector<8x128xf32>
    %40 = arith.mulf %29, %39 : vector<8x128xf32>
    %41 = arith.addf %38, %40 : vector<8x128xf32>
    %42 = math.tanh %41 : vector<8x128xf32>
    %43 = arith.subf %12, %42 : vector<8x128xf32>
    %44 = arith.mulf %37, %43 : vector<8x128xf32>
    %45 = arith.addf %42, %44 : vector<8x128xf32>
    %46 = vector.extract_strided_slice %15 {offsets = [0, 0], sizes = [8, 128], strides = [1, 1]} : vector<8x384xf32> to vector<8x128xf32>
    %47 = vector.extract_strided_slice %21 {offsets = [0, 0], sizes = [8, 128], strides = [1, 1]} : vector<8x384xf32> to vector<8x128xf32>
    %48 = arith.addf %46, %47 : vector<8x128xf32>
    %49 = arith.negf %48 : vector<8x128xf32>
    %50 = math.exp %49 : vector<8x128xf32>
    %cst_17 = arith.constant 1.000000e+00 : f32
    %51 = vector.broadcast %cst_17 : f32 to vector<8x128xf32>
    %52 = arith.addf %51, %50 : vector<8x128xf32>
    %53 = arith.divf %51, %52 : vector<8x128xf32>
    %54 = vector.extract_strided_slice %15 {offsets = [0, 128], sizes = [8, 128], strides = [1, 1]} : vector<8x384xf32> to vector<8x128xf32>
    %55 = vector.extract_strided_slice %21 {offsets = [0, 128], sizes = [8, 128], strides = [1, 1]} : vector<8x384xf32> to vector<8x128xf32>
    %56 = arith.addf %54, %55 : vector<8x128xf32>
    %57 = arith.negf %56 : vector<8x128xf32>
    %58 = math.exp %57 : vector<8x128xf32>
    %cst_18 = arith.constant 1.000000e+00 : f32
    %59 = vector.broadcast %cst_18 : f32 to vector<8x128xf32>
    %60 = arith.addf %59, %58 : vector<8x128xf32>
    %61 = arith.divf %59, %60 : vector<8x128xf32>
    %62 = vector.extract_strided_slice %15 {offsets = [0, 256], sizes = [8, 128], strides = [1, 1]} : vector<8x384xf32> to vector<8x128xf32>
    %63 = vector.extract_strided_slice %21 {offsets = [0, 256], sizes = [8, 128], strides = [1, 1]} : vector<8x384xf32> to vector<8x128xf32>
    %64 = arith.mulf %53, %63 : vector<8x128xf32>
    %65 = arith.addf %62, %64 : vector<8x128xf32>
    %66 = math.tanh %65 : vector<8x128xf32>
    %67 = arith.subf %13, %66 : vector<8x128xf32>
    %68 = arith.mulf %61, %67 : vector<8x128xf32>
    %69 = arith.addf %66, %68 : vector<8x128xf32>
    %70 = vector.extract_strided_slice %7 {offsets = [8, 0], sizes = [8, 384], strides = [1, 1]} : vector<128x384xf32> to vector<8x384xf32>
    %71 = vector.extract_strided_slice %7 {offsets = [72, 0], sizes = [8, 384], strides = [1, 1]} : vector<128x384xf32> to vector<8x384xf32>
    %cst_19 = arith.constant dense<0.000000e+00> : vector<8x384xf32>
    %72 = tpu.matmul %45, %8, %cst_19 {dimension_numbers = #tpu.dot_dimension_numbers<[1], [0], [0], [1], [0, 0, 1, 1], [], []>} : vector<8x128xf32>, vector<128x384xf32>, vector<8x384xf32> -> vector<8x384xf32>
    %73 = vector.broadcast %10 : vector<1x384xf32> to vector<8x384xf32>
    %74 = arith.addf %72, %73 : vector<8x384xf32>
    %cst_20 = arith.constant dense<0.000000e+00> : vector<8x384xf32>
    %75 = tpu.matmul %69, %9, %cst_20 {dimension_numbers = #tpu.dot_dimension_numbers<[1], [0], [0], [1], [0, 0, 1, 1], [], []>} : vector<8x128xf32>, vector<128x384xf32>, vector<8x384xf32> -> vector<8x384xf32>
    %76 = vector.broadcast %11 : vector<1x384xf32> to vector<8x384xf32>
    %77 = arith.addf %75, %76 : vector<8x384xf32>
    %78 = vector.extract_strided_slice %70 {offsets = [0, 0], sizes = [8, 128], strides = [1, 1]} : vector<8x384xf32> to vector<8x128xf32>
    %79 = vector.extract_strided_slice %74 {offsets = [0, 0], sizes = [8, 128], strides = [1, 1]} : vector<8x384xf32> to vector<8x128xf32>
    %80 = arith.addf %78, %79 : vector<8x128xf32>
    %81 = arith.negf %80 : vector<8x128xf32>
    %82 = math.exp %81 : vector<8x128xf32>
    %cst_21 = arith.constant 1.000000e+00 : f32
    %83 = vector.broadcast %cst_21 : f32 to vector<8x128xf32>
    %84 = arith.addf %83, %82 : vector<8x128xf32>
    %85 = arith.divf %83, %84 : vector<8x128xf32>
    %86 = vector.extract_strided_slice %70 {offsets = [0, 128], sizes = [8, 128], strides = [1, 1]} : vector<8x384xf32> to vector<8x128xf32>
    %87 = vector.extract_strided_slice %74 {offsets = [0, 128], sizes = [8, 128], strides = [1, 1]} : vector<8x384xf32> to vector<8x128xf32>
    %88 = arith.addf %86, %87 : vector<8x128xf32>
    %89 = arith.negf %88 : vector<8x128xf32>
    %90 = math.exp %89 : vector<8x128xf32>
    %cst_22 = arith.constant 1.000000e+00 : f32
    %91 = vector.broadcast %cst_22 : f32 to vector<8x128xf32>
    %92 = arith.addf %91, %90 : vector<8x128xf32>
    %93 = arith.divf %91, %92 : vector<8x128xf32>
    %94 = vector.extract_strided_slice %70 {offsets = [0, 256], sizes = [8, 128], strides = [1, 1]} : vector<8x384xf32> to vector<8x128xf32>
    %95 = vector.extract_strided_slice %74 {offsets = [0, 256], sizes = [8, 128], strides = [1, 1]} : vector<8x384xf32> to vector<8x128xf32>
    %96 = arith.mulf %85, %95 : vector<8x128xf32>
    %97 = arith.addf %94, %96 : vector<8x128xf32>
    %98 = math.tanh %97 : vector<8x128xf32>
    %99 = arith.subf %45, %98 : vector<8x128xf32>
    %100 = arith.mulf %93, %99 : vector<8x128xf32>
    %101 = arith.addf %98, %100 : vector<8x128xf32>
    %102 = vector.extract_strided_slice %71 {offsets = [0, 0], sizes = [8, 128], strides = [1, 1]} : vector<8x384xf32> to vector<8x128xf32>
    %103 = vector.extract_strided_slice %77 {offsets = [0, 0], sizes = [8, 128], strides = [1, 1]} : vector<8x384xf32> to vector<8x128xf32>
    %104 = arith.addf %102, %103 : vector<8x128xf32>
    %105 = arith.negf %104 : vector<8x128xf32>
    %106 = math.exp %105 : vector<8x128xf32>
    %cst_23 = arith.constant 1.000000e+00 : f32
    %107 = vector.broadcast %cst_23 : f32 to vector<8x128xf32>
    %108 = arith.addf %107, %106 : vector<8x128xf32>
    %109 = arith.divf %107, %108 : vector<8x128xf32>
    %110 = vector.extract_strided_slice %71 {offsets = [0, 128], sizes = [8, 128], strides = [1, 1]} : vector<8x384xf32> to vector<8x128xf32>
    %111 = vector.extract_strided_slice %77 {offsets = [0, 128], sizes = [8, 128], strides = [1, 1]} : vector<8x384xf32> to vector<8x128xf32>
    %112 = arith.addf %110, %111 : vector<8x128xf32>
    %113 = arith.negf %112 : vector<8x128xf32>
    %114 = math.exp %113 : vector<8x128xf32>
    %cst_24 = arith.constant 1.000000e+00 : f32
    %115 = vector.broadcast %cst_24 : f32 to vector<8x128xf32>
    %116 = arith.addf %115, %114 : vector<8x128xf32>
    %117 = arith.divf %115, %116 : vector<8x128xf32>
    %118 = vector.extract_strided_slice %71 {offsets = [0, 256], sizes = [8, 128], strides = [1, 1]} : vector<8x384xf32> to vector<8x128xf32>
    %119 = vector.extract_strided_slice %77 {offsets = [0, 256], sizes = [8, 128], strides = [1, 1]} : vector<8x384xf32> to vector<8x128xf32>
    %120 = arith.mulf %109, %119 : vector<8x128xf32>
    %121 = arith.addf %118, %120 : vector<8x128xf32>
    %122 = math.tanh %121 : vector<8x128xf32>
    %123 = arith.subf %69, %122 : vector<8x128xf32>
    %124 = arith.mulf %117, %123 : vector<8x128xf32>
    %125 = arith.addf %122, %124 : vector<8x128xf32>
    %126 = vector.extract_strided_slice %7 {offsets = [16, 0], sizes = [8, 384], strides = [1, 1]} : vector<128x384xf32> to vector<8x384xf32>
    %127 = vector.extract_strided_slice %7 {offsets = [80, 0], sizes = [8, 384], strides = [1, 1]} : vector<128x384xf32> to vector<8x384xf32>
    %cst_25 = arith.constant dense<0.000000e+00> : vector<8x384xf32>
    %128 = tpu.matmul %101, %8, %cst_25 {dimension_numbers = #tpu.dot_dimension_numbers<[1], [0], [0], [1], [0, 0, 1, 1], [], []>} : vector<8x128xf32>, vector<128x384xf32>, vector<8x384xf32> -> vector<8x384xf32>
    %129 = vector.broadcast %10 : vector<1x384xf32> to vector<8x384xf32>
    %130 = arith.addf %128, %129 : vector<8x384xf32>
    %cst_26 = arith.constant dense<0.000000e+00> : vector<8x384xf32>
    %131 = tpu.matmul %125, %9, %cst_26 {dimension_numbers = #tpu.dot_dimension_numbers<[1], [0], [0], [1], [0, 0, 1, 1], [], []>} : vector<8x128xf32>, vector<128x384xf32>, vector<8x384xf32> -> vector<8x384xf32>
    %132 = vector.broadcast %11 : vector<1x384xf32> to vector<8x384xf32>
    %133 = arith.addf %131, %132 : vector<8x384xf32>
    %134 = vector.extract_strided_slice %126 {offsets = [0, 0], sizes = [8, 128], strides = [1, 1]} : vector<8x384xf32> to vector<8x128xf32>
    %135 = vector.extract_strided_slice %130 {offsets = [0, 0], sizes = [8, 128], strides = [1, 1]} : vector<8x384xf32> to vector<8x128xf32>
    %136 = arith.addf %134, %135 : vector<8x128xf32>
    %137 = arith.negf %136 : vector<8x128xf32>
    %138 = math.exp %137 : vector<8x128xf32>
    %cst_27 = arith.constant 1.000000e+00 : f32
    %139 = vector.broadcast %cst_27 : f32 to vector<8x128xf32>
    %140 = arith.addf %139, %138 : vector<8x128xf32>
    %141 = arith.divf %139, %140 : vector<8x128xf32>
    %142 = vector.extract_strided_slice %126 {offsets = [0, 128], sizes = [8, 128], strides = [1, 1]} : vector<8x384xf32> to vector<8x128xf32>
    %143 = vector.extract_strided_slice %130 {offsets = [0, 128], sizes = [8, 128], strides = [1, 1]} : vector<8x384xf32> to vector<8x128xf32>
    %144 = arith.addf %142, %143 : vector<8x128xf32>
    %145 = arith.negf %144 : vector<8x128xf32>
    %146 = math.exp %145 : vector<8x128xf32>
    %cst_28 = arith.constant 1.000000e+00 : f32
    %147 = vector.broadcast %cst_28 : f32 to vector<8x128xf32>
    %148 = arith.addf %147, %146 : vector<8x128xf32>
    %149 = arith.divf %147, %148 : vector<8x128xf32>
    %150 = vector.extract_strided_slice %126 {offsets = [0, 256], sizes = [8, 128], strides = [1, 1]} : vector<8x384xf32> to vector<8x128xf32>
    %151 = vector.extract_strided_slice %130 {offsets = [0, 256], sizes = [8, 128], strides = [1, 1]} : vector<8x384xf32> to vector<8x128xf32>
    %152 = arith.mulf %141, %151 : vector<8x128xf32>
    %153 = arith.addf %150, %152 : vector<8x128xf32>
    %154 = math.tanh %153 : vector<8x128xf32>
    %155 = arith.subf %101, %154 : vector<8x128xf32>
    %156 = arith.mulf %149, %155 : vector<8x128xf32>
    %157 = arith.addf %154, %156 : vector<8x128xf32>
    %158 = vector.extract_strided_slice %127 {offsets = [0, 0], sizes = [8, 128], strides = [1, 1]} : vector<8x384xf32> to vector<8x128xf32>
    %159 = vector.extract_strided_slice %133 {offsets = [0, 0], sizes = [8, 128], strides = [1, 1]} : vector<8x384xf32> to vector<8x128xf32>
    %160 = arith.addf %158, %159 : vector<8x128xf32>
    %161 = arith.negf %160 : vector<8x128xf32>
    %162 = math.exp %161 : vector<8x128xf32>
    %cst_29 = arith.constant 1.000000e+00 : f32
    %163 = vector.broadcast %cst_29 : f32 to vector<8x128xf32>
    %164 = arith.addf %163, %162 : vector<8x128xf32>
    %165 = arith.divf %163, %164 : vector<8x128xf32>
    %166 = vector.extract_strided_slice %127 {offsets = [0, 128], sizes = [8, 128], strides = [1, 1]} : vector<8x384xf32> to vector<8x128xf32>
    %167 = vector.extract_strided_slice %133 {offsets = [0, 128], sizes = [8, 128], strides = [1, 1]} : vector<8x384xf32> to vector<8x128xf32>
    %168 = arith.addf %166, %167 : vector<8x128xf32>
    %169 = arith.negf %168 : vector<8x128xf32>
    %170 = math.exp %169 : vector<8x128xf32>
    %cst_30 = arith.constant 1.000000e+00 : f32
    %171 = vector.broadcast %cst_30 : f32 to vector<8x128xf32>
    %172 = arith.addf %171, %170 : vector<8x128xf32>
    %173 = arith.divf %171, %172 : vector<8x128xf32>
    %174 = vector.extract_strided_slice %127 {offsets = [0, 256], sizes = [8, 128], strides = [1, 1]} : vector<8x384xf32> to vector<8x128xf32>
    %175 = vector.extract_strided_slice %133 {offsets = [0, 256], sizes = [8, 128], strides = [1, 1]} : vector<8x384xf32> to vector<8x128xf32>
    %176 = arith.mulf %165, %175 : vector<8x128xf32>
    %177 = arith.addf %174, %176 : vector<8x128xf32>
    %178 = math.tanh %177 : vector<8x128xf32>
    %179 = arith.subf %125, %178 : vector<8x128xf32>
    %180 = arith.mulf %173, %179 : vector<8x128xf32>
    %181 = arith.addf %178, %180 : vector<8x128xf32>
    %182 = vector.extract_strided_slice %7 {offsets = [24, 0], sizes = [8, 384], strides = [1, 1]} : vector<128x384xf32> to vector<8x384xf32>
    %183 = vector.extract_strided_slice %7 {offsets = [88, 0], sizes = [8, 384], strides = [1, 1]} : vector<128x384xf32> to vector<8x384xf32>
    %cst_31 = arith.constant dense<0.000000e+00> : vector<8x384xf32>
    %184 = tpu.matmul %157, %8, %cst_31 {dimension_numbers = #tpu.dot_dimension_numbers<[1], [0], [0], [1], [0, 0, 1, 1], [], []>} : vector<8x128xf32>, vector<128x384xf32>, vector<8x384xf32> -> vector<8x384xf32>
    %185 = vector.broadcast %10 : vector<1x384xf32> to vector<8x384xf32>
    %186 = arith.addf %184, %185 : vector<8x384xf32>
    %cst_32 = arith.constant dense<0.000000e+00> : vector<8x384xf32>
    %187 = tpu.matmul %181, %9, %cst_32 {dimension_numbers = #tpu.dot_dimension_numbers<[1], [0], [0], [1], [0, 0, 1, 1], [], []>} : vector<8x128xf32>, vector<128x384xf32>, vector<8x384xf32> -> vector<8x384xf32>
    %188 = vector.broadcast %11 : vector<1x384xf32> to vector<8x384xf32>
    %189 = arith.addf %187, %188 : vector<8x384xf32>
    %190 = vector.extract_strided_slice %182 {offsets = [0, 0], sizes = [8, 128], strides = [1, 1]} : vector<8x384xf32> to vector<8x128xf32>
    %191 = vector.extract_strided_slice %186 {offsets = [0, 0], sizes = [8, 128], strides = [1, 1]} : vector<8x384xf32> to vector<8x128xf32>
    %192 = arith.addf %190, %191 : vector<8x128xf32>
    %193 = arith.negf %192 : vector<8x128xf32>
    %194 = math.exp %193 : vector<8x128xf32>
    %cst_33 = arith.constant 1.000000e+00 : f32
    %195 = vector.broadcast %cst_33 : f32 to vector<8x128xf32>
    %196 = arith.addf %195, %194 : vector<8x128xf32>
    %197 = arith.divf %195, %196 : vector<8x128xf32>
    %198 = vector.extract_strided_slice %182 {offsets = [0, 128], sizes = [8, 128], strides = [1, 1]} : vector<8x384xf32> to vector<8x128xf32>
    %199 = vector.extract_strided_slice %186 {offsets = [0, 128], sizes = [8, 128], strides = [1, 1]} : vector<8x384xf32> to vector<8x128xf32>
    %200 = arith.addf %198, %199 : vector<8x128xf32>
    %201 = arith.negf %200 : vector<8x128xf32>
    %202 = math.exp %201 : vector<8x128xf32>
    %cst_34 = arith.constant 1.000000e+00 : f32
    %203 = vector.broadcast %cst_34 : f32 to vector<8x128xf32>
    %204 = arith.addf %203, %202 : vector<8x128xf32>
    %205 = arith.divf %203, %204 : vector<8x128xf32>
    %206 = vector.extract_strided_slice %182 {offsets = [0, 256], sizes = [8, 128], strides = [1, 1]} : vector<8x384xf32> to vector<8x128xf32>
    %207 = vector.extract_strided_slice %186 {offsets = [0, 256], sizes = [8, 128], strides = [1, 1]} : vector<8x384xf32> to vector<8x128xf32>
    %208 = arith.mulf %197, %207 : vector<8x128xf32>
    %209 = arith.addf %206, %208 : vector<8x128xf32>
    %210 = math.tanh %209 : vector<8x128xf32>
    %211 = arith.subf %157, %210 : vector<8x128xf32>
    %212 = arith.mulf %205, %211 : vector<8x128xf32>
    %213 = arith.addf %210, %212 : vector<8x128xf32>
    %214 = vector.extract_strided_slice %183 {offsets = [0, 0], sizes = [8, 128], strides = [1, 1]} : vector<8x384xf32> to vector<8x128xf32>
    %215 = vector.extract_strided_slice %189 {offsets = [0, 0], sizes = [8, 128], strides = [1, 1]} : vector<8x384xf32> to vector<8x128xf32>
    %216 = arith.addf %214, %215 : vector<8x128xf32>
    %217 = arith.negf %216 : vector<8x128xf32>
    %218 = math.exp %217 : vector<8x128xf32>
    %cst_35 = arith.constant 1.000000e+00 : f32
    %219 = vector.broadcast %cst_35 : f32 to vector<8x128xf32>
    %220 = arith.addf %219, %218 : vector<8x128xf32>
    %221 = arith.divf %219, %220 : vector<8x128xf32>
    %222 = vector.extract_strided_slice %183 {offsets = [0, 128], sizes = [8, 128], strides = [1, 1]} : vector<8x384xf32> to vector<8x128xf32>
    %223 = vector.extract_strided_slice %189 {offsets = [0, 128], sizes = [8, 128], strides = [1, 1]} : vector<8x384xf32> to vector<8x128xf32>
    %224 = arith.addf %222, %223 : vector<8x128xf32>
    %225 = arith.negf %224 : vector<8x128xf32>
    %226 = math.exp %225 : vector<8x128xf32>
    %cst_36 = arith.constant 1.000000e+00 : f32
    %227 = vector.broadcast %cst_36 : f32 to vector<8x128xf32>
    %228 = arith.addf %227, %226 : vector<8x128xf32>
    %229 = arith.divf %227, %228 : vector<8x128xf32>
    %230 = vector.extract_strided_slice %183 {offsets = [0, 256], sizes = [8, 128], strides = [1, 1]} : vector<8x384xf32> to vector<8x128xf32>
    %231 = vector.extract_strided_slice %189 {offsets = [0, 256], sizes = [8, 128], strides = [1, 1]} : vector<8x384xf32> to vector<8x128xf32>
    %232 = arith.mulf %221, %231 : vector<8x128xf32>
    %233 = arith.addf %230, %232 : vector<8x128xf32>
    %234 = math.tanh %233 : vector<8x128xf32>
    %235 = arith.subf %181, %234 : vector<8x128xf32>
    %236 = arith.mulf %229, %235 : vector<8x128xf32>
    %237 = arith.addf %234, %236 : vector<8x128xf32>
    %238 = vector.extract_strided_slice %7 {offsets = [32, 0], sizes = [8, 384], strides = [1, 1]} : vector<128x384xf32> to vector<8x384xf32>
    %239 = vector.extract_strided_slice %7 {offsets = [96, 0], sizes = [8, 384], strides = [1, 1]} : vector<128x384xf32> to vector<8x384xf32>
    %cst_37 = arith.constant dense<0.000000e+00> : vector<8x384xf32>
    %240 = tpu.matmul %213, %8, %cst_37 {dimension_numbers = #tpu.dot_dimension_numbers<[1], [0], [0], [1], [0, 0, 1, 1], [], []>} : vector<8x128xf32>, vector<128x384xf32>, vector<8x384xf32> -> vector<8x384xf32>
    %241 = vector.broadcast %10 : vector<1x384xf32> to vector<8x384xf32>
    %242 = arith.addf %240, %241 : vector<8x384xf32>
    %cst_38 = arith.constant dense<0.000000e+00> : vector<8x384xf32>
    %243 = tpu.matmul %237, %9, %cst_38 {dimension_numbers = #tpu.dot_dimension_numbers<[1], [0], [0], [1], [0, 0, 1, 1], [], []>} : vector<8x128xf32>, vector<128x384xf32>, vector<8x384xf32> -> vector<8x384xf32>
    %244 = vector.broadcast %11 : vector<1x384xf32> to vector<8x384xf32>
    %245 = arith.addf %243, %244 : vector<8x384xf32>
    %246 = vector.extract_strided_slice %238 {offsets = [0, 0], sizes = [8, 128], strides = [1, 1]} : vector<8x384xf32> to vector<8x128xf32>
    %247 = vector.extract_strided_slice %242 {offsets = [0, 0], sizes = [8, 128], strides = [1, 1]} : vector<8x384xf32> to vector<8x128xf32>
    %248 = arith.addf %246, %247 : vector<8x128xf32>
    %249 = arith.negf %248 : vector<8x128xf32>
    %250 = math.exp %249 : vector<8x128xf32>
    %cst_39 = arith.constant 1.000000e+00 : f32
    %251 = vector.broadcast %cst_39 : f32 to vector<8x128xf32>
    %252 = arith.addf %251, %250 : vector<8x128xf32>
    %253 = arith.divf %251, %252 : vector<8x128xf32>
    %254 = vector.extract_strided_slice %238 {offsets = [0, 128], sizes = [8, 128], strides = [1, 1]} : vector<8x384xf32> to vector<8x128xf32>
    %255 = vector.extract_strided_slice %242 {offsets = [0, 128], sizes = [8, 128], strides = [1, 1]} : vector<8x384xf32> to vector<8x128xf32>
    %256 = arith.addf %254, %255 : vector<8x128xf32>
    %257 = arith.negf %256 : vector<8x128xf32>
    %258 = math.exp %257 : vector<8x128xf32>
    %cst_40 = arith.constant 1.000000e+00 : f32
    %259 = vector.broadcast %cst_40 : f32 to vector<8x128xf32>
    %260 = arith.addf %259, %258 : vector<8x128xf32>
    %261 = arith.divf %259, %260 : vector<8x128xf32>
    %262 = vector.extract_strided_slice %238 {offsets = [0, 256], sizes = [8, 128], strides = [1, 1]} : vector<8x384xf32> to vector<8x128xf32>
    %263 = vector.extract_strided_slice %242 {offsets = [0, 256], sizes = [8, 128], strides = [1, 1]} : vector<8x384xf32> to vector<8x128xf32>
    %264 = arith.mulf %253, %263 : vector<8x128xf32>
    %265 = arith.addf %262, %264 : vector<8x128xf32>
    %266 = math.tanh %265 : vector<8x128xf32>
    %267 = arith.subf %213, %266 : vector<8x128xf32>
    %268 = arith.mulf %261, %267 : vector<8x128xf32>
    %269 = arith.addf %266, %268 : vector<8x128xf32>
    %270 = vector.extract_strided_slice %239 {offsets = [0, 0], sizes = [8, 128], strides = [1, 1]} : vector<8x384xf32> to vector<8x128xf32>
    %271 = vector.extract_strided_slice %245 {offsets = [0, 0], sizes = [8, 128], strides = [1, 1]} : vector<8x384xf32> to vector<8x128xf32>
    %272 = arith.addf %270, %271 : vector<8x128xf32>
    %273 = arith.negf %272 : vector<8x128xf32>
    %274 = math.exp %273 : vector<8x128xf32>
    %cst_41 = arith.constant 1.000000e+00 : f32
    %275 = vector.broadcast %cst_41 : f32 to vector<8x128xf32>
    %276 = arith.addf %275, %274 : vector<8x128xf32>
    %277 = arith.divf %275, %276 : vector<8x128xf32>
    %278 = vector.extract_strided_slice %239 {offsets = [0, 128], sizes = [8, 128], strides = [1, 1]} : vector<8x384xf32> to vector<8x128xf32>
    %279 = vector.extract_strided_slice %245 {offsets = [0, 128], sizes = [8, 128], strides = [1, 1]} : vector<8x384xf32> to vector<8x128xf32>
    %280 = arith.addf %278, %279 : vector<8x128xf32>
    %281 = arith.negf %280 : vector<8x128xf32>
    %282 = math.exp %281 : vector<8x128xf32>
    %cst_42 = arith.constant 1.000000e+00 : f32
    %283 = vector.broadcast %cst_42 : f32 to vector<8x128xf32>
    %284 = arith.addf %283, %282 : vector<8x128xf32>
    %285 = arith.divf %283, %284 : vector<8x128xf32>
    %286 = vector.extract_strided_slice %239 {offsets = [0, 256], sizes = [8, 128], strides = [1, 1]} : vector<8x384xf32> to vector<8x128xf32>
    %287 = vector.extract_strided_slice %245 {offsets = [0, 256], sizes = [8, 128], strides = [1, 1]} : vector<8x384xf32> to vector<8x128xf32>
    %288 = arith.mulf %277, %287 : vector<8x128xf32>
    %289 = arith.addf %286, %288 : vector<8x128xf32>
    %290 = math.tanh %289 : vector<8x128xf32>
    %291 = arith.subf %237, %290 : vector<8x128xf32>
    %292 = arith.mulf %285, %291 : vector<8x128xf32>
    %293 = arith.addf %290, %292 : vector<8x128xf32>
    %294 = vector.extract_strided_slice %7 {offsets = [40, 0], sizes = [8, 384], strides = [1, 1]} : vector<128x384xf32> to vector<8x384xf32>
    %295 = vector.extract_strided_slice %7 {offsets = [104, 0], sizes = [8, 384], strides = [1, 1]} : vector<128x384xf32> to vector<8x384xf32>
    %cst_43 = arith.constant dense<0.000000e+00> : vector<8x384xf32>
    %296 = tpu.matmul %269, %8, %cst_43 {dimension_numbers = #tpu.dot_dimension_numbers<[1], [0], [0], [1], [0, 0, 1, 1], [], []>} : vector<8x128xf32>, vector<128x384xf32>, vector<8x384xf32> -> vector<8x384xf32>
    %297 = vector.broadcast %10 : vector<1x384xf32> to vector<8x384xf32>
    %298 = arith.addf %296, %297 : vector<8x384xf32>
    %cst_44 = arith.constant dense<0.000000e+00> : vector<8x384xf32>
    %299 = tpu.matmul %293, %9, %cst_44 {dimension_numbers = #tpu.dot_dimension_numbers<[1], [0], [0], [1], [0, 0, 1, 1], [], []>} : vector<8x128xf32>, vector<128x384xf32>, vector<8x384xf32> -> vector<8x384xf32>
    %300 = vector.broadcast %11 : vector<1x384xf32> to vector<8x384xf32>
    %301 = arith.addf %299, %300 : vector<8x384xf32>
    %302 = vector.extract_strided_slice %294 {offsets = [0, 0], sizes = [8, 128], strides = [1, 1]} : vector<8x384xf32> to vector<8x128xf32>
    %303 = vector.extract_strided_slice %298 {offsets = [0, 0], sizes = [8, 128], strides = [1, 1]} : vector<8x384xf32> to vector<8x128xf32>
    %304 = arith.addf %302, %303 : vector<8x128xf32>
    %305 = arith.negf %304 : vector<8x128xf32>
    %306 = math.exp %305 : vector<8x128xf32>
    %cst_45 = arith.constant 1.000000e+00 : f32
    %307 = vector.broadcast %cst_45 : f32 to vector<8x128xf32>
    %308 = arith.addf %307, %306 : vector<8x128xf32>
    %309 = arith.divf %307, %308 : vector<8x128xf32>
    %310 = vector.extract_strided_slice %294 {offsets = [0, 128], sizes = [8, 128], strides = [1, 1]} : vector<8x384xf32> to vector<8x128xf32>
    %311 = vector.extract_strided_slice %298 {offsets = [0, 128], sizes = [8, 128], strides = [1, 1]} : vector<8x384xf32> to vector<8x128xf32>
    %312 = arith.addf %310, %311 : vector<8x128xf32>
    %313 = arith.negf %312 : vector<8x128xf32>
    %314 = math.exp %313 : vector<8x128xf32>
    %cst_46 = arith.constant 1.000000e+00 : f32
    %315 = vector.broadcast %cst_46 : f32 to vector<8x128xf32>
    %316 = arith.addf %315, %314 : vector<8x128xf32>
    %317 = arith.divf %315, %316 : vector<8x128xf32>
    %318 = vector.extract_strided_slice %294 {offsets = [0, 256], sizes = [8, 128], strides = [1, 1]} : vector<8x384xf32> to vector<8x128xf32>
    %319 = vector.extract_strided_slice %298 {offsets = [0, 256], sizes = [8, 128], strides = [1, 1]} : vector<8x384xf32> to vector<8x128xf32>
    %320 = arith.mulf %309, %319 : vector<8x128xf32>
    %321 = arith.addf %318, %320 : vector<8x128xf32>
    %322 = math.tanh %321 : vector<8x128xf32>
    %323 = arith.subf %269, %322 : vector<8x128xf32>
    %324 = arith.mulf %317, %323 : vector<8x128xf32>
    %325 = arith.addf %322, %324 : vector<8x128xf32>
    %326 = vector.extract_strided_slice %295 {offsets = [0, 0], sizes = [8, 128], strides = [1, 1]} : vector<8x384xf32> to vector<8x128xf32>
    %327 = vector.extract_strided_slice %301 {offsets = [0, 0], sizes = [8, 128], strides = [1, 1]} : vector<8x384xf32> to vector<8x128xf32>
    %328 = arith.addf %326, %327 : vector<8x128xf32>
    %329 = arith.negf %328 : vector<8x128xf32>
    %330 = math.exp %329 : vector<8x128xf32>
    %cst_47 = arith.constant 1.000000e+00 : f32
    %331 = vector.broadcast %cst_47 : f32 to vector<8x128xf32>
    %332 = arith.addf %331, %330 : vector<8x128xf32>
    %333 = arith.divf %331, %332 : vector<8x128xf32>
    %334 = vector.extract_strided_slice %295 {offsets = [0, 128], sizes = [8, 128], strides = [1, 1]} : vector<8x384xf32> to vector<8x128xf32>
    %335 = vector.extract_strided_slice %301 {offsets = [0, 128], sizes = [8, 128], strides = [1, 1]} : vector<8x384xf32> to vector<8x128xf32>
    %336 = arith.addf %334, %335 : vector<8x128xf32>
    %337 = arith.negf %336 : vector<8x128xf32>
    %338 = math.exp %337 : vector<8x128xf32>
    %cst_48 = arith.constant 1.000000e+00 : f32
    %339 = vector.broadcast %cst_48 : f32 to vector<8x128xf32>
    %340 = arith.addf %339, %338 : vector<8x128xf32>
    %341 = arith.divf %339, %340 : vector<8x128xf32>
    %342 = vector.extract_strided_slice %295 {offsets = [0, 256], sizes = [8, 128], strides = [1, 1]} : vector<8x384xf32> to vector<8x128xf32>
    %343 = vector.extract_strided_slice %301 {offsets = [0, 256], sizes = [8, 128], strides = [1, 1]} : vector<8x384xf32> to vector<8x128xf32>
    %344 = arith.mulf %333, %343 : vector<8x128xf32>
    %345 = arith.addf %342, %344 : vector<8x128xf32>
    %346 = math.tanh %345 : vector<8x128xf32>
    %347 = arith.subf %293, %346 : vector<8x128xf32>
    %348 = arith.mulf %341, %347 : vector<8x128xf32>
    %349 = arith.addf %346, %348 : vector<8x128xf32>
    %350 = vector.extract_strided_slice %7 {offsets = [48, 0], sizes = [8, 384], strides = [1, 1]} : vector<128x384xf32> to vector<8x384xf32>
    %351 = vector.extract_strided_slice %7 {offsets = [112, 0], sizes = [8, 384], strides = [1, 1]} : vector<128x384xf32> to vector<8x384xf32>
    %cst_49 = arith.constant dense<0.000000e+00> : vector<8x384xf32>
    %352 = tpu.matmul %325, %8, %cst_49 {dimension_numbers = #tpu.dot_dimension_numbers<[1], [0], [0], [1], [0, 0, 1, 1], [], []>} : vector<8x128xf32>, vector<128x384xf32>, vector<8x384xf32> -> vector<8x384xf32>
    %353 = vector.broadcast %10 : vector<1x384xf32> to vector<8x384xf32>
    %354 = arith.addf %352, %353 : vector<8x384xf32>
    %cst_50 = arith.constant dense<0.000000e+00> : vector<8x384xf32>
    %355 = tpu.matmul %349, %9, %cst_50 {dimension_numbers = #tpu.dot_dimension_numbers<[1], [0], [0], [1], [0, 0, 1, 1], [], []>} : vector<8x128xf32>, vector<128x384xf32>, vector<8x384xf32> -> vector<8x384xf32>
    %356 = vector.broadcast %11 : vector<1x384xf32> to vector<8x384xf32>
    %357 = arith.addf %355, %356 : vector<8x384xf32>
    %358 = vector.extract_strided_slice %350 {offsets = [0, 0], sizes = [8, 128], strides = [1, 1]} : vector<8x384xf32> to vector<8x128xf32>
    %359 = vector.extract_strided_slice %354 {offsets = [0, 0], sizes = [8, 128], strides = [1, 1]} : vector<8x384xf32> to vector<8x128xf32>
    %360 = arith.addf %358, %359 : vector<8x128xf32>
    %361 = arith.negf %360 : vector<8x128xf32>
    %362 = math.exp %361 : vector<8x128xf32>
    %cst_51 = arith.constant 1.000000e+00 : f32
    %363 = vector.broadcast %cst_51 : f32 to vector<8x128xf32>
    %364 = arith.addf %363, %362 : vector<8x128xf32>
    %365 = arith.divf %363, %364 : vector<8x128xf32>
    %366 = vector.extract_strided_slice %350 {offsets = [0, 128], sizes = [8, 128], strides = [1, 1]} : vector<8x384xf32> to vector<8x128xf32>
    %367 = vector.extract_strided_slice %354 {offsets = [0, 128], sizes = [8, 128], strides = [1, 1]} : vector<8x384xf32> to vector<8x128xf32>
    %368 = arith.addf %366, %367 : vector<8x128xf32>
    %369 = arith.negf %368 : vector<8x128xf32>
    %370 = math.exp %369 : vector<8x128xf32>
    %cst_52 = arith.constant 1.000000e+00 : f32
    %371 = vector.broadcast %cst_52 : f32 to vector<8x128xf32>
    %372 = arith.addf %371, %370 : vector<8x128xf32>
    %373 = arith.divf %371, %372 : vector<8x128xf32>
    %374 = vector.extract_strided_slice %350 {offsets = [0, 256], sizes = [8, 128], strides = [1, 1]} : vector<8x384xf32> to vector<8x128xf32>
    %375 = vector.extract_strided_slice %354 {offsets = [0, 256], sizes = [8, 128], strides = [1, 1]} : vector<8x384xf32> to vector<8x128xf32>
    %376 = arith.mulf %365, %375 : vector<8x128xf32>
    %377 = arith.addf %374, %376 : vector<8x128xf32>
    %378 = math.tanh %377 : vector<8x128xf32>
    %379 = arith.subf %325, %378 : vector<8x128xf32>
    %380 = arith.mulf %373, %379 : vector<8x128xf32>
    %381 = arith.addf %378, %380 : vector<8x128xf32>
    %382 = vector.extract_strided_slice %351 {offsets = [0, 0], sizes = [8, 128], strides = [1, 1]} : vector<8x384xf32> to vector<8x128xf32>
    %383 = vector.extract_strided_slice %357 {offsets = [0, 0], sizes = [8, 128], strides = [1, 1]} : vector<8x384xf32> to vector<8x128xf32>
    %384 = arith.addf %382, %383 : vector<8x128xf32>
    %385 = arith.negf %384 : vector<8x128xf32>
    %386 = math.exp %385 : vector<8x128xf32>
    %cst_53 = arith.constant 1.000000e+00 : f32
    %387 = vector.broadcast %cst_53 : f32 to vector<8x128xf32>
    %388 = arith.addf %387, %386 : vector<8x128xf32>
    %389 = arith.divf %387, %388 : vector<8x128xf32>
    %390 = vector.extract_strided_slice %351 {offsets = [0, 128], sizes = [8, 128], strides = [1, 1]} : vector<8x384xf32> to vector<8x128xf32>
    %391 = vector.extract_strided_slice %357 {offsets = [0, 128], sizes = [8, 128], strides = [1, 1]} : vector<8x384xf32> to vector<8x128xf32>
    %392 = arith.addf %390, %391 : vector<8x128xf32>
    %393 = arith.negf %392 : vector<8x128xf32>
    %394 = math.exp %393 : vector<8x128xf32>
    %cst_54 = arith.constant 1.000000e+00 : f32
    %395 = vector.broadcast %cst_54 : f32 to vector<8x128xf32>
    %396 = arith.addf %395, %394 : vector<8x128xf32>
    %397 = arith.divf %395, %396 : vector<8x128xf32>
    %398 = vector.extract_strided_slice %351 {offsets = [0, 256], sizes = [8, 128], strides = [1, 1]} : vector<8x384xf32> to vector<8x128xf32>
    %399 = vector.extract_strided_slice %357 {offsets = [0, 256], sizes = [8, 128], strides = [1, 1]} : vector<8x384xf32> to vector<8x128xf32>
    %400 = arith.mulf %389, %399 : vector<8x128xf32>
    %401 = arith.addf %398, %400 : vector<8x128xf32>
    %402 = math.tanh %401 : vector<8x128xf32>
    %403 = arith.subf %349, %402 : vector<8x128xf32>
    %404 = arith.mulf %397, %403 : vector<8x128xf32>
    %405 = arith.addf %402, %404 : vector<8x128xf32>
    %406 = vector.extract_strided_slice %7 {offsets = [56, 0], sizes = [8, 384], strides = [1, 1]} : vector<128x384xf32> to vector<8x384xf32>
    %407 = vector.extract_strided_slice %7 {offsets = [120, 0], sizes = [8, 384], strides = [1, 1]} : vector<128x384xf32> to vector<8x384xf32>
    %cst_55 = arith.constant dense<0.000000e+00> : vector<8x384xf32>
    %408 = tpu.matmul %381, %8, %cst_55 {dimension_numbers = #tpu.dot_dimension_numbers<[1], [0], [0], [1], [0, 0, 1, 1], [], []>} : vector<8x128xf32>, vector<128x384xf32>, vector<8x384xf32> -> vector<8x384xf32>
    %409 = vector.broadcast %10 : vector<1x384xf32> to vector<8x384xf32>
    %410 = arith.addf %408, %409 : vector<8x384xf32>
    %cst_56 = arith.constant dense<0.000000e+00> : vector<8x384xf32>
    %411 = tpu.matmul %405, %9, %cst_56 {dimension_numbers = #tpu.dot_dimension_numbers<[1], [0], [0], [1], [0, 0, 1, 1], [], []>} : vector<8x128xf32>, vector<128x384xf32>, vector<8x384xf32> -> vector<8x384xf32>
    %412 = vector.broadcast %11 : vector<1x384xf32> to vector<8x384xf32>
    %413 = arith.addf %411, %412 : vector<8x384xf32>
    %414 = vector.extract_strided_slice %406 {offsets = [0, 0], sizes = [8, 128], strides = [1, 1]} : vector<8x384xf32> to vector<8x128xf32>
    %415 = vector.extract_strided_slice %410 {offsets = [0, 0], sizes = [8, 128], strides = [1, 1]} : vector<8x384xf32> to vector<8x128xf32>
    %416 = arith.addf %414, %415 : vector<8x128xf32>
    %417 = arith.negf %416 : vector<8x128xf32>
    %418 = math.exp %417 : vector<8x128xf32>
    %cst_57 = arith.constant 1.000000e+00 : f32
    %419 = vector.broadcast %cst_57 : f32 to vector<8x128xf32>
    %420 = arith.addf %419, %418 : vector<8x128xf32>
    %421 = arith.divf %419, %420 : vector<8x128xf32>
    %422 = vector.extract_strided_slice %406 {offsets = [0, 128], sizes = [8, 128], strides = [1, 1]} : vector<8x384xf32> to vector<8x128xf32>
    %423 = vector.extract_strided_slice %410 {offsets = [0, 128], sizes = [8, 128], strides = [1, 1]} : vector<8x384xf32> to vector<8x128xf32>
    %424 = arith.addf %422, %423 : vector<8x128xf32>
    %425 = arith.negf %424 : vector<8x128xf32>
    %426 = math.exp %425 : vector<8x128xf32>
    %cst_58 = arith.constant 1.000000e+00 : f32
    %427 = vector.broadcast %cst_58 : f32 to vector<8x128xf32>
    %428 = arith.addf %427, %426 : vector<8x128xf32>
    %429 = arith.divf %427, %428 : vector<8x128xf32>
    %430 = vector.extract_strided_slice %406 {offsets = [0, 256], sizes = [8, 128], strides = [1, 1]} : vector<8x384xf32> to vector<8x128xf32>
    %431 = vector.extract_strided_slice %410 {offsets = [0, 256], sizes = [8, 128], strides = [1, 1]} : vector<8x384xf32> to vector<8x128xf32>
    %432 = arith.mulf %421, %431 : vector<8x128xf32>
    %433 = arith.addf %430, %432 : vector<8x128xf32>
    %434 = math.tanh %433 : vector<8x128xf32>
    %435 = arith.subf %381, %434 : vector<8x128xf32>
    %436 = arith.mulf %429, %435 : vector<8x128xf32>
    %437 = arith.addf %434, %436 : vector<8x128xf32>
    %438 = vector.extract_strided_slice %407 {offsets = [0, 0], sizes = [8, 128], strides = [1, 1]} : vector<8x384xf32> to vector<8x128xf32>
    %439 = vector.extract_strided_slice %413 {offsets = [0, 0], sizes = [8, 128], strides = [1, 1]} : vector<8x384xf32> to vector<8x128xf32>
    %440 = arith.addf %438, %439 : vector<8x128xf32>
    %441 = arith.negf %440 : vector<8x128xf32>
    %442 = math.exp %441 : vector<8x128xf32>
    %cst_59 = arith.constant 1.000000e+00 : f32
    %443 = vector.broadcast %cst_59 : f32 to vector<8x128xf32>
    %444 = arith.addf %443, %442 : vector<8x128xf32>
    %445 = arith.divf %443, %444 : vector<8x128xf32>
    %446 = vector.extract_strided_slice %407 {offsets = [0, 128], sizes = [8, 128], strides = [1, 1]} : vector<8x384xf32> to vector<8x128xf32>
    %447 = vector.extract_strided_slice %413 {offsets = [0, 128], sizes = [8, 128], strides = [1, 1]} : vector<8x384xf32> to vector<8x128xf32>
    %448 = arith.addf %446, %447 : vector<8x128xf32>
    %449 = arith.negf %448 : vector<8x128xf32>
    %450 = math.exp %449 : vector<8x128xf32>
    %cst_60 = arith.constant 1.000000e+00 : f32
    %451 = vector.broadcast %cst_60 : f32 to vector<8x128xf32>
    %452 = arith.addf %451, %450 : vector<8x128xf32>
    %453 = arith.divf %451, %452 : vector<8x128xf32>
    %454 = vector.extract_strided_slice %407 {offsets = [0, 256], sizes = [8, 128], strides = [1, 1]} : vector<8x384xf32> to vector<8x128xf32>
    %455 = vector.extract_strided_slice %413 {offsets = [0, 256], sizes = [8, 128], strides = [1, 1]} : vector<8x384xf32> to vector<8x128xf32>
    %456 = arith.mulf %445, %455 : vector<8x128xf32>
    %457 = arith.addf %454, %456 : vector<8x128xf32>
    %458 = math.tanh %457 : vector<8x128xf32>
    %459 = arith.subf %405, %458 : vector<8x128xf32>
    %460 = arith.mulf %453, %459 : vector<8x128xf32>
    %461 = arith.addf %458, %460 : vector<8x128xf32>
    %c0_61 = arith.constant 0 : index
    %c0_62 = arith.constant 0 : index
    %462 = vector.load %arg6[%c0_61, %c0_62] : memref<16x128xf32, #tpu.memory_space<vmem>>, vector<8x128xf32>
    tpu.vector_store %arg6[%c0_61, %c0_62], %437 {strides = array<i32>} : memref<16x128xf32, #tpu.memory_space<vmem>>, vector<8x128xf32>,
    %c8 = arith.constant 8 : index
    %c0_63 = arith.constant 0 : index
    %463 = vector.load %arg6[%c8, %c0_63] : memref<16x128xf32, #tpu.memory_space<vmem>>, vector<8x128xf32>
    tpu.vector_store %arg6[%c8, %c0_63], %461 {strides = array<i32>} : memref<16x128xf32, #tpu.memory_space<vmem>>, vector<8x128xf32>,
    return
  }
}

</mosaic_0001>

<llo_original>
// kernel: text_recurrent_layer.1
$region0: #{text_recurrent_layer.1}
  #allocation0 [shape = 'u32[]', space=smem, size = 0x4, offset = 0x4, fixed_abs, tag = 'smem constant byte address 0x4 - core index']
  #allocation1 [shape = 'u32[72,128]{1,0:T(1,128)}', space=vmem, size = 0x9000, scoped, tag = 'internal scratch']
  %s0 = inlined_call_operand.vmem [shape: s32[128,1], index: 0, kind: input, shape index: {}]
  %s1 = inlined_call_operand.hbm [shape: f32[256,384], index: 1, kind: input, shape index: {}]
  %s2 = inlined_call_operand.hbm [shape: f32[128,384], index: 2, kind: input, shape index: {}]
  %s3 = inlined_call_operand.hbm [shape: f32[128,384], index: 3, kind: input, shape index: {}]
  %s4 = inlined_call_operand.vmem [shape: f32[1,384], index: 4, kind: input, shape index: {}]
  %s5 = inlined_call_operand.vmem [shape: f32[1,384], index: 5, kind: input, shape index: {}]
  %s6 = inlined_call_operand.vmem [shape: f32[16,128], index: 6, kind: output, shape index: {}]
  %s7 = sld [smem:[#allocation0]]
  $region46: #{text_recurrent_layer.1} parent=0
    _
  %s9 = ssub.s32 1, %s7
  %s10 = scalar_select 0, %s9, %s7
  $region1: #{text_recurrent_layer.1} parent=0
    #allocation2 [shape = 'u8[393216]{0}', space=vmem, size = 0x60000, scoped, tag = 'input window, operand 1, single buffered']
    #allocation3 [shape = 's32[1]{0}', space=sflag, size = 0x4, scoped, tag = 'scoped memory for text_recurrent_layer.1']
    #allocation4 [shape = 'u8[196608]{0}', space=vmem, size = 0x30000, scoped, tag = 'input window, operand 2, single buffered']
    #allocation5 [shape = 's32[1]{0}', space=sflag, size = 0x4, scoped, tag = 'scoped memory for text_recurrent_layer.1']
    #allocation6 [shape = 'u8[196608]{0}', space=vmem, size = 0x30000, scoped, tag = 'input window, operand 3, single buffered']
    %11 = vsyncpa [#allocation3], 0
    %12 = vsyncpa [#allocation5], 0
    // Predicated region
    $region2: #{text_recurrent_layer.1} parent=1 // pred_check
      _
    $region3: #{text_recurrent_layer.1} parent=1 // pred_check_branch
      %14 = sbr.rel (0) target = $region5
    $region4: #{text_recurrent_layer.1} parent=1 // pred_region
      _
    $region5: #{text_recurrent_layer.1} parent=1 // pred_fallthru
      _
    // Predicated region
    $region6: #{text_recurrent_layer.1} parent=1 // pred_check
      _
    $region7: #{text_recurrent_layer.1} parent=1 // pred_check_branch
      %16 = sbr.rel (0) target = $region9
    $region8: #{text_recurrent_layer.1} parent=1 // pred_region
      %18 = vsyncadd [#allocation3], 0
      %s19 = sshll.u32 %s1, 4
      %s20 = int_to_ptr.hbm [resolvable:$true] %s19
      %s21 = sshll.u32 [#allocation2], 4
      %s22 = int_to_ptr.vmem [resolvable:$true] %s21
      %27 = dma.hbm_to_vmem [thread:$0]  %s20, 12288, %s22, [#allocation3], 384, 384, 24
    $region9: #{text_recurrent_layer.1} parent=1 // pred_fallthru
      _
    // Predicated region
    $region10: #{text_recurrent_layer.1} parent=1 // pred_check
      _
    $region11: #{text_recurrent_layer.1} parent=1 // pred_check_branch
      %29 = sbr.rel (0) target = $region13
    $region12: #{text_recurrent_layer.1} parent=1 // pred_region
      %31 = vsyncadd [#allocation5], 0
      %s32 = sshll.u32 %s2, 4
      %s33 = int_to_ptr.hbm [resolvable:$true] %s32
      %s34 = sshll.u32 [#allocation4], 4
      %s35 = int_to_ptr.vmem [resolvable:$true] %s34
      %40 = dma.hbm_to_vmem [thread:$0]  %s33, 6144, %s35, [#allocation5], 384, 384, 24
    $region13: #{text_recurrent_layer.1} parent=1 // pred_fallthru
      _
    // Predicated region
    $region14: #{text_recurrent_layer.1} parent=1 // pred_check
      _
    $region15: #{text_recurrent_layer.1} parent=1 // pred_check_branch
      %42 = sbr.rel (0) target = $region17
    $region16: #{text_recurrent_layer.1} parent=1 // pred_region
      %44 = vsyncadd [#allocation5], 0
      %s45 = sshll.u32 %s3, 4
      %s46 = int_to_ptr.hbm [resolvable:$true] %s45
      %s47 = sshll.u32 [#allocation6], 4
      %s48 = int_to_ptr.vmem [resolvable:$true] %s47
      %53 = dma.hbm_to_vmem [thread:$0]  %s46, 6144, %s48, [#allocation5], 384, 384, 24
    $region17: #{text_recurrent_layer.1} parent=1 // pred_fallthru
      _
    // Predicated region
    $region18: #{text_recurrent_layer.1} parent=1 // pred_check
      _
    $region19: #{text_recurrent_layer.1} parent=1 // pred_check_branch
      %55 = sbr.rel (0) target = $region21
    $region20: #{text_recurrent_layer.1} parent=1 // pred_region
      _
    $region21: #{text_recurrent_layer.1} parent=1 // pred_fallthru
      _
    // Predicated region
    $region22: #{text_recurrent_layer.1} parent=1 // pred_check
      _
    $region23: #{text_recurrent_layer.1} parent=1 // pred_check_branch
      %57 = sbr.rel (0) target = $region25
    $region24: #{text_recurrent_layer.1} parent=1 // pred_region
      _
    $region25: #{text_recurrent_layer.1} parent=1 // pred_fallthru
      _
    // Predicated region
    $region26: #{text_recurrent_layer.1} parent=1 // pred_check
      _
    $region27: #{text_recurrent_layer.1} parent=1 // pred_check_branch
      %59 = sbr.rel (0) target = $region29
    $region28: #{text_recurrent_layer.1} parent=1 // pred_region
      %61 = dma.done [#allocation3], 12288
    $region29: #{text_recurrent_layer.1} parent=1 // pred_fallthru
      _
    // Predicated region
    $region30: #{text_recurrent_layer.1} parent=1 // pred_check
      _
    $region31: #{text_recurrent_layer.1} parent=1 // pred_check_branch
      %63 = sbr.rel (0) target = $region33
    $region32: #{text_recurrent_layer.1} parent=1 // pred_region
      %65 = dma.done [#allocation5], 6144
    $region33: #{text_recurrent_layer.1} parent=1 // pred_fallthru
      _
    // Predicated region
    $region34: #{text_recurrent_layer.1} parent=1 // pred_check
      _
    $region35: #{text_recurrent_layer.1} parent=1 // pred_check_branch
      %67 = sbr.rel (0) target = $region37
    $region36: #{text_recurrent_layer.1} parent=1 // pred_region
      %69 = dma.done [#allocation5], 6144
    $region37: #{text_recurrent_layer.1} parent=1 // pred_fallthru
      _
    %v70 = vlaneseq
    %v71 = vand.u32 %v70, 127
    %v72 = vadd.s32 %v71, 128
    %v73 = vld [vmem:[%s0] sm:$0xff]
    %v74 = vld [vmem:[%s0 + $0x8] sm:$0xff]
    %v75 = vld [vmem:[%s0 + $0x10] sm:$0xff]
    %v76 = vld [vmem:[%s0 + $0x18] sm:$0xff]
    %v77 = vld [vmem:[%s0 + $0x20] sm:$0xff]
    %v78 = vld [vmem:[%s0 + $0x28] sm:$0xff]
    %v79 = vld [vmem:[%s0 + $0x30] sm:$0xff]
    %v80 = vld [vmem:[%s0 + $0x38] sm:$0xff]
    %v81 = vld [vmem:[%s0 + $0x40] sm:$0xff]
    %v82 = vld [vmem:[%s0 + $0x48] sm:$0xff]
    %v83 = vld [vmem:[%s0 + $0x50] sm:$0xff]
    %v84 = vld [vmem:[%s0 + $0x58] sm:$0xff]
    %v85 = vld [vmem:[%s0 + $0x60] sm:$0xff]
    %v86 = vld [vmem:[%s0 + $0x68] sm:$0xff]
    %v87 = vld [vmem:[%s0 + $0x70] sm:$0xff]
    %v88 = vld [vmem:[%s0 + $0x78] sm:$0xff]
    %89 = vset.pattern.permute.xlu0 0
    %90 = vperm.xlu0 %89, %v73
    %v91 = vpop.permute.xlu0 %90
    %92 = vset.pattern.permute.xlu0 0
    %93 = vperm.xlu0 %92, %v74
    %v94 = vpop.permute.xlu0 %93
    %95 = vset.pattern.permute.xlu0 0
    %96 = vperm.xlu0 %95, %v75
    %v97 = vpop.permute.xlu0 %96
    %98 = vset.pattern.permute.xlu0 0
    %99 = vperm.xlu0 %98, %v76
    %v100 = vpop.permute.xlu0 %99
    %101 = vset.pattern.permute.xlu0 0
    %102 = vperm.xlu0 %101, %v77
    %v103 = vpop.permute.xlu0 %102
    %104 = vset.pattern.permute.xlu0 0
    %105 = vperm.xlu0 %104, %v78
    %v106 = vpop.permute.xlu0 %105
    %107 = vset.pattern.permute.xlu0 0
    %108 = vperm.xlu0 %107, %v79
    %v109 = vpop.permute.xlu0 %108
    %110 = vset.pattern.permute.xlu0 0
    %111 = vperm.xlu0 %110, %v80
    %v112 = vpop.permute.xlu0 %111
    %113 = vset.pattern.permute.xlu0 0
    %114 = vperm.xlu0 %113, %v81
    %v115 = vpop.permute.xlu0 %114
    %116 = vset.pattern.permute.xlu0 0
    %117 = vperm.xlu0 %116, %v82
    %v118 = vpop.permute.xlu0 %117
    %119 = vset.pattern.permute.xlu0 0
    %120 = vperm.xlu0 %119, %v83
    %v121 = vpop.permute.xlu0 %120
    %122 = vset.pattern.permute.xlu0 0
    %123 = vperm.xlu0 %122, %v84
    %v124 = vpop.permute.xlu0 %123
    %125 = vset.pattern.permute.xlu0 0
    %126 = vperm.xlu0 %125, %v85
    %v127 = vpop.permute.xlu0 %126
    %128 = vset.pattern.permute.xlu0 0
    %129 = vperm.xlu0 %128, %v86
    %v130 = vpop.permute.xlu0 %129
    %131 = vset.pattern.permute.xlu0 0
    %132 = vperm.xlu0 %131, %v87
    %v133 = vpop.permute.xlu0 %132
    %134 = vset.pattern.permute.xlu0 0
    %135 = vperm.xlu0 %134, %v88
    %v136 = vpop.permute.xlu0 %135
    %vm137 = vcmp.eq.s32.totalorder %v91, %v71
    %vm138 = vcmp.eq.s32.totalorder %v91, %v72
    %vm139 = vcmp.eq.s32.totalorder %v94, %v71
    %vm140 = vcmp.eq.s32.totalorder %v94, %v72
    %vm141 = vcmp.eq.s32.totalorder %v97, %v71
    %vm142 = vcmp.eq.s32.totalorder %v97, %v72
    %vm143 = vcmp.eq.s32.totalorder %v100, %v71
    %vm144 = vcmp.eq.s32.totalorder %v100, %v72
    %vm145 = vcmp.eq.s32.totalorder %v103, %v71
    %vm146 = vcmp.eq.s32.totalorder %v103, %v72
    %vm147 = vcmp.eq.s32.totalorder %v106, %v71
    %vm148 = vcmp.eq.s32.totalorder %v106, %v72
    %vm149 = vcmp.eq.s32.totalorder %v109, %v71
    %vm150 = vcmp.eq.s32.totalorder %v109, %v72
    %vm151 = vcmp.eq.s32.totalorder %v112, %v71
    %vm152 = vcmp.eq.s32.totalorder %v112, %v72
    %vm153 = vcmp.eq.s32.totalorder %v115, %v71
    %vm154 = vcmp.eq.s32.totalorder %v115, %v72
    %vm155 = vcmp.eq.s32.totalorder %v118, %v71
    %vm156 = vcmp.eq.s32.totalorder %v118, %v72
    %vm157 = vcmp.eq.s32.totalorder %v121, %v71
    %vm158 = vcmp.eq.s32.totalorder %v121, %v72
    %vm159 = vcmp.eq.s32.totalorder %v124, %v71
    %vm160 = vcmp.eq.s32.totalorder %v124, %v72
    %vm161 = vcmp.eq.s32.totalorder %v127, %v71
    %vm162 = vcmp.eq.s32.totalorder %v127, %v72
    %vm163 = vcmp.eq.s32.totalorder %v130, %v71
    %vm164 = vcmp.eq.s32.totalorder %v130, %v72
    %vm165 = vcmp.eq.s32.totalorder %v133, %v71
    %vm166 = vcmp.eq.s32.totalorder %v133, %v72
    %vm167 = vcmp.eq.s32.totalorder %v136, %v71
    %vm168 = vcmp.eq.s32.totalorder %v136, %v72
    %v169 = vsel %vm137, 1, 0
    %v170 = vsel %vm138, 1, 0
    %v171 = vsel %vm139, 1, 0
    %v172 = vsel %vm140, 1, 0
    %v173 = vsel %vm141, 1, 0
    %v174 = vsel %vm142, 1, 0
    %v175 = vsel %vm143, 1, 0
    %v176 = vsel %vm144, 1, 0
    %v177 = vsel %vm145, 1, 0
    %v178 = vsel %vm146, 1, 0
    %v179 = vsel %vm147, 1, 0
    %v180 = vsel %vm148, 1, 0
    %v181 = vsel %vm149, 1, 0
    %v182 = vsel %vm150, 1, 0
    %v183 = vsel %vm151, 1, 0
    %v184 = vsel %vm152, 1, 0
    %v185 = vsel %vm153, 1, 0
    %v186 = vsel %vm154, 1, 0
    %v187 = vsel %vm155, 1, 0
    %v188 = vsel %vm156, 1, 0
    %v189 = vsel %vm157, 1, 0
    %v190 = vsel %vm158, 1, 0
    %v191 = vsel %vm159, 1, 0
    %v192 = vsel %vm160, 1, 0
    %v193 = vsel %vm161, 1, 0
    %v194 = vsel %vm162, 1, 0
    %v195 = vsel %vm163, 1, 0
    %v196 = vsel %vm164, 1, 0
    %v197 = vsel %vm165, 1, 0
    %v198 = vsel %vm166, 1, 0
    %v199 = vsel %vm167, 1, 0
    %v200 = vsel %vm168, 1, 0
    %v201 = vcvt.s32.f32 %v169
    %v202 = vcvt.s32.f32 %v170
    %v203 = vcvt.s32.f32 %v171
    %v204 = vcvt.s32.f32 %v172
    %v205 = vcvt.s32.f32 %v173
    %v206 = vcvt.s32.f32 %v174
    %v207 = vcvt.s32.f32 %v175
    %v208 = vcvt.s32.f32 %v176
    %v209 = vcvt.s32.f32 %v177
    %v210 = vcvt.s32.f32 %v178
    %v211 = vcvt.s32.f32 %v179
    %v212 = vcvt.s32.f32 %v180
    %v213 = vcvt.s32.f32 %v181
    %v214 = vcvt.s32.f32 %v182
    %v215 = vcvt.s32.f32 %v183
    %v216 = vcvt.s32.f32 %v184
    %v217 = vcvt.s32.f32 %v185
    %v218 = vcvt.s32.f32 %v186
    %v219 = vcvt.s32.f32 %v187
    %v220 = vcvt.s32.f32 %v188
    %v221 = vcvt.s32.f32 %v189
    %v222 = vcvt.s32.f32 %v190
    %v223 = vcvt.s32.f32 %v191
    %v224 = vcvt.s32.f32 %v192
    %v225 = vcvt.s32.f32 %v193
    %v226 = vcvt.s32.f32 %v194
    %v227 = vcvt.s32.f32 %v195
    %v228 = vcvt.s32.f32 %v196
    %v229 = vcvt.s32.f32 %v197
    %v230 = vcvt.s32.f32 %v198
    %v231 = vcvt.s32.f32 %v199
    %v232 = vcvt.s32.f32 %v200
    %v233 = vld [vmem:[#allocation2] sm:$0xff]
    %v234 = vld [vmem:[#allocation2 + $0x8] sm:$0xff]
    %v235 = vld [vmem:[#allocation2 + $0x10] sm:$0xff]
    %v236 = vld [vmem:[#allocation2 + $0x18] sm:$0xff]
    %v237 = vld [vmem:[#allocation2 + $0x20] sm:$0xff]
    %v238 = vld [vmem:[#allocation2 + $0x28] sm:$0xff]
    %v239 = vld [vmem:[#allocation2 + $0x30] sm:$0xff]
    %v240 = vld [vmem:[#allocation2 + $0x38] sm:$0xff]
    %v241 = vld [vmem:[#allocation2 + $0x40] sm:$0xff]
    %v242 = vld [vmem:[#allocation2 + $0x48] sm:$0xff]
    %v243 = vld [vmem:[#allocation2 + $0x50] sm:$0xff]
    %v244 = vld [vmem:[#allocation2 + $0x58] sm:$0xff]
    %v245 = vld [vmem:[#allocation2 + $0x60] sm:$0xff]
    %v246 = vld [vmem:[#allocation2 + $0x68] sm:$0xff]
    %v247 = vld [vmem:[#allocation2 + $0x70] sm:$0xff]
    %v248 = vld [vmem:[#allocation2 + $0x78] sm:$0xff]
    %v249 = vld [vmem:[#allocation2 + $0x80] sm:$0xff]
    %v250 = vld [vmem:[#allocation2 + $0x88] sm:$0xff]
    %v251 = vld [vmem:[#allocation2 + $0x90] sm:$0xff]
    %v252 = vld [vmem:[#allocation2 + $0x98] sm:$0xff]
    %v253 = vld [vmem:[#allocation2 + $0xa0] sm:$0xff]
    %v254 = vld [vmem:[#allocation2 + $0xa8] sm:$0xff]
    %v255 = vld [vmem:[#allocation2 + $0xb0] sm:$0xff]
    %v256 = vld [vmem:[#allocation2 + $0xb8] sm:$0xff]
    %v257 = vld [vmem:[#allocation2 + $0xc0] sm:$0xff]
    %v258 = vld [vmem:[#allocation2 + $0xc8] sm:$0xff]
    %v259 = vld [vmem:[#allocation2 + $0xd0] sm:$0xff]
    %v260 = vld [vmem:[#allocation2 + $0xd8] sm:$0xff]
    %v261 = vld [vmem:[#allocation2 + $0xe0] sm:$0xff]
    %v262 = vld [vmem:[#allocation2 + $0xe8] sm:$0xff]
    %v263 = vld [vmem:[#allocation2 + $0xf0] sm:$0xff]
    %v264 = vld [vmem:[#allocation2 + $0xf8] sm:$0xff]
    %v265 = vld [vmem:[#allocation2 + $0x100] sm:$0xff]
    %v266 = vld [vmem:[#allocation2 + $0x108] sm:$0xff]
    %v267 = vld [vmem:[#allocation2 + $0x110] sm:$0xff]
    %v268 = vld [vmem:[#allocation2 + $0x118] sm:$0xff]
    %v269 = vld [vmem:[#allocation2 + $0x120] sm:$0xff]
    %v270 = vld [vmem:[#allocation2 + $0x128] sm:$0xff]
    %v271 = vld [vmem:[#allocation2 + $0x130] sm:$0xff]
    %v272 = vld [vmem:[#allocation2 + $0x138] sm:$0xff]
    %v273 = vld [vmem:[#allocation2 + $0x140] sm:$0xff]
    %v274 = vld [vmem:[#allocation2 + $0x148] sm:$0xff]
    %v275 = vld [vmem:[#allocation2 + $0x150] sm:$0xff]
    %v276 = vld [vmem:[#allocation2 + $0x158] sm:$0xff]
    %v277 = vld [vmem:[#allocation2 + $0x160] sm:$0xff]
    %v278 = vld [vmem:[#allocation2 + $0x168] sm:$0xff]
    %v279 = vld [vmem:[#allocation2 + $0x170] sm:$0xff]
    %v280 = vld [vmem:[#allocation2 + $0x178] sm:$0xff]
    %v281 = vld [vmem:[#allocation2 + $0x180] sm:$0xff]
    %v282 = vld [vmem:[#allocation2 + $0x188] sm:$0xff]
    %v283 = vld [vmem:[#allocation2 + $0x190] sm:$0xff]
    %v284 = vld [vmem:[#allocation2 + $0x198] sm:$0xff]
    %v285 = vld [vmem:[#allocation2 + $0x1a0] sm:$0xff]
    %v286 = vld [vmem:[#allocation2 + $0x1a8] sm:$0xff]
    %v287 = vld [vmem:[#allocation2 + $0x1b0] sm:$0xff]
    %v288 = vld [vmem:[#allocation2 + $0x1b8] sm:$0xff]
    %v289 = vld [vmem:[#allocation2 + $0x1c0] sm:$0xff]
    %v290 = vld [vmem:[#allocation2 + $0x1c8] sm:$0xff]
    %v291 = vld [vmem:[#allocation2 + $0x1d0] sm:$0xff]
    %v292 = vld [vmem:[#allocation2 + $0x1d8] sm:$0xff]
    %v293 = vld [vmem:[#allocation2 + $0x1e0] sm:$0xff]
    %v294 = vld [vmem:[#allocation2 + $0x1e8] sm:$0xff]
    %v295 = vld [vmem:[#allocation2 + $0x1f0] sm:$0xff]
    %v296 = vld [vmem:[#allocation2 + $0x1f8] sm:$0xff]
    %v297 = vld [vmem:[#allocation2 + $0x200] sm:$0xff]
    %v298 = vld [vmem:[#allocation2 + $0x208] sm:$0xff]
    %v299 = vld [vmem:[#allocation2 + $0x210] sm:$0xff]
    %v300 = vld [vmem:[#allocation2 + $0x218] sm:$0xff]
    %v301 = vld [vmem:[#allocation2 + $0x220] sm:$0xff]
    %v302 = vld [vmem:[#allocation2 + $0x228] sm:$0xff]
    %v303 = vld [vmem:[#allocation2 + $0x230] sm:$0xff]
    %v304 = vld [vmem:[#allocation2 + $0x238] sm:$0xff]
    %v305 = vld [vmem:[#allocation2 + $0x240] sm:$0xff]
    %v306 = vld [vmem:[#allocation2 + $0x248] sm:$0xff]
    %v307 = vld [vmem:[#allocation2 + $0x250] sm:$0xff]
    %v308 = vld [vmem:[#allocation2 + $0x258] sm:$0xff]
    %v309 = vld [vmem:[#allocation2 + $0x260] sm:$0xff]
    %v310 = vld [vmem:[#allocation2 + $0x268] sm:$0xff]
    %v311 = vld [vmem:[#allocation2 + $0x270] sm:$0xff]
    %v312 = vld [vmem:[#allocation2 + $0x278] sm:$0xff]
    %v313 = vld [vmem:[#allocation2 + $0x280] sm:$0xff]
    %v314 = vld [vmem:[#allocation2 + $0x288] sm:$0xff]
    %v315 = vld [vmem:[#allocation2 + $0x290] sm:$0xff]
    %v316 = vld [vmem:[#allocation2 + $0x298] sm:$0xff]
    %v317 = vld [vmem:[#allocation2 + $0x2a0] sm:$0xff]
    %v318 = vld [vmem:[#allocation2 + $0x2a8] sm:$0xff]
    %v319 = vld [vmem:[#allocation2 + $0x2b0] sm:$0xff]
    %v320 = vld [vmem:[#allocation2 + $0x2b8] sm:$0xff]
    %v321 = vld [vmem:[#allocation2 + $0x2c0] sm:$0xff]
    %v322 = vld [vmem:[#allocation2 + $0x2c8] sm:$0xff]
    %v323 = vld [vmem:[#allocation2 + $0x2d0] sm:$0xff]
    %v324 = vld [vmem:[#allocation2 + $0x2d8] sm:$0xff]
    %v325 = vld [vmem:[#allocation2 + $0x2e0] sm:$0xff]
    %v326 = vld [vmem:[#allocation2 + $0x2e8] sm:$0xff]
    %v327 = vld [vmem:[#allocation2 + $0x2f0] sm:$0xff]
    %v328 = vld [vmem:[#allocation2 + $0x2f8] sm:$0xff]
    %329 = vmatpush.msra.mxu0 %v278
    %330 = vmatpush.msra.mxu0 %v275
    %331 = vmatpush.msra.mxu0 %v272
    %332 = vmatpush.msra.mxu0 %v269
    %333 = vmatpush.msra.mxu0 %v266
    %334 = vmatpush.msra.mxu0 %v263
    %335 = vmatpush.msra.mxu0 %v260
    %336 = vmatpush.msra.mxu0 %v257
    %337 = vmatpush.msra.mxu0 %v254
    %338 = vmatpush.msra.mxu0 %v251
    %339 = vmatpush.msra.mxu0 %v248
    %340 = vmatpush.msra.mxu0 %v245
    %341 = vmatpush.msra.mxu0 %v242
    %342 = vmatpush.msra.mxu0 %v239
    %343 = vmatpush.msra.mxu0 %v236
    %344 = vmatpush.msra.mxu0 %v233
    %345 = vmatmul.f32.gmra.mxu0 %v201
    %v346 = vpop.f32.mrf.mxu0
    %v347 = vadd.f32 0.0, %v346
    %348 = vmatmul.f32.gmra.mxu0 %v203
    %v349 = vpop.f32.mrf.mxu0
    %v350 = vadd.f32 0.0, %v349
    %351 = vmatmul.f32.gmra.mxu0 %v205
    %v352 = vpop.f32.mrf.mxu0
    %v353 = vadd.f32 0.0, %v352
    %354 = vmatmul.f32.gmra.mxu0 %v207
    %v355 = vpop.f32.mrf.mxu0
    %v356 = vadd.f32 0.0, %v355
    %357 = vmatmul.f32.gmra.mxu0 %v209
    %v358 = vpop.f32.mrf.mxu0
    %v359 = vadd.f32 0.0, %v358
    %360 = vmatmul.f32.gmra.mxu0 %v211
    %v361 = vpop.f32.mrf.mxu0
    %v362 = vadd.f32 0.0, %v361
    %363 = vmatmul.f32.gmra.mxu0 %v213
    %v364 = vpop.f32.mrf.mxu0
    %v365 = vadd.f32 0.0, %v364
    %366 = vmatmul.f32.gmra.mxu0 %v215
    %v367 = vpop.f32.mrf.mxu0
    %v368 = vadd.f32 0.0, %v367
    %369 = vmatmul.f32.gmra.mxu0 %v217
    %v370 = vpop.f32.mrf.mxu0
    %v371 = vadd.f32 0.0, %v370
    %372 = vmatmul.f32.gmra.mxu0 %v219
    %v373 = vpop.f32.mrf.mxu0
    %v374 = vadd.f32 0.0, %v373
    %375 = vmatmul.f32.gmra.mxu0 %v221
    %v376 = vpop.f32.mrf.mxu0
    %v377 = vadd.f32 0.0, %v376
    %378 = vmatmul.f32.gmra.mxu0 %v223
    %v379 = vpop.f32.mrf.mxu0
    %v380 = vadd.f32 0.0, %v379
    %381 = vmatmul.f32.gmra.mxu0 %v225
    %v382 = vpop.f32.mrf.mxu0
    %v383 = vadd.f32 0.0, %v382
    %384 = vmatmul.f32.gmra.mxu0 %v227
    %v385 = vpop.f32.mrf.mxu0
    %v386 = vadd.f32 0.0, %v385
    %387 = vmatmul.f32.gmra.mxu0 %v229
    %v388 = vpop.f32.mrf.mxu0
    %v389 = vadd.f32 0.0, %v388
    %390 = vmatmul.f32.gmra.mxu0 %v231
    %v391 = vpop.f32.mrf.mxu0
    %v392 = vadd.f32 0.0, %v391
    %393 = vdwg.mxu0
    %394 = vmatpush.msra.mxu0 %v326
    %395 = vmatpush.msra.mxu0 %v323
    %396 = vmatpush.msra.mxu0 %v320
    %397 = vmatpush.msra.mxu0 %v317
    %398 = vmatpush.msra.mxu0 %v314
    %399 = vmatpush.msra.mxu0 %v311
    %400 = vmatpush.msra.mxu0 %v308
    %401 = vmatpush.msra.mxu0 %v305
    %402 = vmatpush.msra.mxu0 %v302
    %403 = vmatpush.msra.mxu0 %v299
    %404 = vmatpush.msra.mxu0 %v296
    %405 = vmatpush.msra.mxu0 %v293
    %406 = vmatpush.msra.mxu0 %v290
    %407 = vmatpush.msra.mxu0 %v287
    %408 = vmatpush.msra.mxu0 %v284
    %409 = vmatpush.msra.mxu0 %v281
    %410 = vmatmul.f32.gmra.mxu0 %v202
    %v411 = vpop.f32.mrf.mxu0
    %v412 = vadd.f32 %v347, %v411
    %413 = vmatmul.f32.gmra.mxu0 %v204
    %v414 = vpop.f32.mrf.mxu0
    %v415 = vadd.f32 %v350, %v414
    %416 = vmatmul.f32.gmra.mxu0 %v206
    %v417 = vpop.f32.mrf.mxu0
    %v418 = vadd.f32 %v353, %v417
    %419 = vmatmul.f32.gmra.mxu0 %v208
    %v420 = vpop.f32.mrf.mxu0
    %v421 = vadd.f32 %v356, %v420
    %422 = vmatmul.f32.gmra.mxu0 %v210
    %v423 = vpop.f32.mrf.mxu0
    %v424 = vadd.f32 %v359, %v423
    %425 = vmatmul.f32.gmra.mxu0 %v212
    %v426 = vpop.f32.mrf.mxu0
    %v427 = vadd.f32 %v362, %v426
    %428 = vmatmul.f32.gmra.mxu0 %v214
    %v429 = vpop.f32.mrf.mxu0
    %v430 = vadd.f32 %v365, %v429
    %431 = vmatmul.f32.gmra.mxu0 %v216
    %v432 = vpop.f32.mrf.mxu0
    %v433 = vadd.f32 %v368, %v432
    %434 = vmatmul.f32.gmra.mxu0 %v218
    %v435 = vpop.f32.mrf.mxu0
    %v436 = vadd.f32 %v371, %v435
    %437 = vmatmul.f32.gmra.mxu0 %v220
    %v438 = vpop.f32.mrf.mxu0
    %v439 = vadd.f32 %v374, %v438
    %440 = vmatmul.f32.gmra.mxu0 %v222
    %v441 = vpop.f32.mrf.mxu0
    %v442 = vadd.f32 %v377, %v441
    %443 = vmatmul.f32.gmra.mxu0 %v224
    %v444 = vpop.f32.mrf.mxu0
    %v445 = vadd.f32 %v380, %v444
    %446 = vmatmul.f32.gmra.mxu0 %v226
    %v447 = vpop.f32.mrf.mxu0
    %v448 = vadd.f32 %v383, %v447
    %449 = vmatmul.f32.gmra.mxu0 %v228
    %v450 = vpop.f32.mrf.mxu0
    %v451 = vadd.f32 %v386, %v450
    %452 = vmatmul.f32.gmra.mxu0 %v230
    %v453 = vpop.f32.mrf.mxu0
    %v454 = vadd.f32 %v389, %v453
    %455 = vmatmul.f32.gmra.mxu0 %v232
    %v456 = vpop.f32.mrf.mxu0
    %v457 = vadd.f32 %v392, %v456
    %458 = vdwg.mxu0
    %459 = vmatpush.msra.mxu0 %v279
    %460 = vmatpush.msra.mxu0 %v276
    %461 = vmatpush.msra.mxu0 %v273
    %462 = vmatpush.msra.mxu0 %v270
    %463 = vmatpush.msra.mxu0 %v267
    %464 = vmatpush.msra.mxu0 %v264
    %465 = vmatpush.msra.mxu0 %v261
    %466 = vmatpush.msra.mxu0 %v258
    %467 = vmatpush.msra.mxu0 %v255
    %468 = vmatpush.msra.mxu0 %v252
    %469 = vmatpush.msra.mxu0 %v249
    %470 = vmatpush.msra.mxu0 %v246
    %471 = vmatpush.msra.mxu0 %v243
    %472 = vmatpush.msra.mxu0 %v240
    %473 = vmatpush.msra.mxu0 %v237
    %474 = vmatpush.msra.mxu0 %v234
    %475 = vmatmul.f32.gmra.mxu0 %v201
    %v476 = vpop.f32.mrf.mxu0
    %v477 = vadd.f32 0.0, %v476
    %478 = vmatmul.f32.gmra.mxu0 %v203
    %v479 = vpop.f32.mrf.mxu0
    %v480 = vadd.f32 0.0, %v479
    %481 = vmatmul.f32.gmra.mxu0 %v205
    %v482 = vpop.f32.mrf.mxu0
    %v483 = vadd.f32 0.0, %v482
    %484 = vmatmul.f32.gmra.mxu0 %v207
    %v485 = vpop.f32.mrf.mxu0
    %v486 = vadd.f32 0.0, %v485
    %487 = vmatmul.f32.gmra.mxu0 %v209
    %v488 = vpop.f32.mrf.mxu0
    %v489 = vadd.f32 0.0, %v488
    %490 = vmatmul.f32.gmra.mxu0 %v211
    %v491 = vpop.f32.mrf.mxu0
    %v492 = vadd.f32 0.0, %v491
    %493 = vmatmul.f32.gmra.mxu0 %v213
    %v494 = vpop.f32.mrf.mxu0
    %v495 = vadd.f32 0.0, %v494
    %496 = vmatmul.f32.gmra.mxu0 %v215
    %v497 = vpop.f32.mrf.mxu0
    %v498 = vadd.f32 0.0, %v497
    %499 = vmatmul.f32.gmra.mxu0 %v217
    %v500 = vpop.f32.mrf.mxu0
    %v501 = vadd.f32 0.0, %v500
    %502 = vmatmul.f32.gmra.mxu0 %v219
    %v503 = vpop.f32.mrf.mxu0
    %v504 = vadd.f32 0.0, %v503
    %505 = vmatmul.f32.gmra.mxu0 %v221
    %v506 = vpop.f32.mrf.mxu0
    %v507 = vadd.f32 0.0, %v506
    %508 = vmatmul.f32.gmra.mxu0 %v223
    %v509 = vpop.f32.mrf.mxu0
    %v510 = vadd.f32 0.0, %v509
    %511 = vmatmul.f32.gmra.mxu0 %v225
    %v512 = vpop.f32.mrf.mxu0
    %v513 = vadd.f32 0.0, %v512
    %514 = vmatmul.f32.gmra.mxu0 %v227
    %v515 = vpop.f32.mrf.mxu0
    %v516 = vadd.f32 0.0, %v515
    %517 = vmatmul.f32.gmra.mxu0 %v229
    %v518 = vpop.f32.mrf.mxu0
    %v519 = vadd.f32 0.0, %v518
    %520 = vmatmul.f32.gmra.mxu0 %v231
    %v521 = vpop.f32.mrf.mxu0
    %v522 = vadd.f32 0.0, %v521
    %523 = vdwg.mxu0
    %524 = vmatpush.msra.mxu0 %v327
    %525 = vmatpush.msra.mxu0 %v324
    %526 = vmatpush.msra.mxu0 %v321
    %527 = vmatpush.msra.mxu0 %v318
    %528 = vmatpush.msra.mxu0 %v315
    %529 = vmatpush.msra.mxu0 %v312
    %530 = vmatpush.msra.mxu0 %v309
    %531 = vmatpush.msra.mxu0 %v306
    %532 = vmatpush.msra.mxu0 %v303
    %533 = vmatpush.msra.mxu0 %v300
    %534 = vmatpush.msra.mxu0 %v297
    %535 = vmatpush.msra.mxu0 %v294
    %536 = vmatpush.msra.mxu0 %v291
    %537 = vmatpush.msra.mxu0 %v288
    %538 = vmatpush.msra.mxu0 %v285
    %539 = vmatpush.msra.mxu0 %v282
    %540 = vmatmul.f32.gmra.mxu0 %v202
    %v541 = vpop.f32.mrf.mxu0
    %v542 = vadd.f32 %v477, %v541
    %543 = vmatmul.f32.gmra.mxu0 %v204
    %v544 = vpop.f32.mrf.mxu0
    %v545 = vadd.f32 %v480, %v544
    %546 = vmatmul.f32.gmra.mxu0 %v206
    %v547 = vpop.f32.mrf.mxu0
    %v548 = vadd.f32 %v483, %v547
    %549 = vmatmul.f32.gmra.mxu0 %v208
    %v550 = vpop.f32.mrf.mxu0
    %v551 = vadd.f32 %v486, %v550
    %552 = vmatmul.f32.gmra.mxu0 %v210
    %v553 = vpop.f32.mrf.mxu0
    %v554 = vadd.f32 %v489, %v553
    %555 = vmatmul.f32.gmra.mxu0 %v212
    %v556 = vpop.f32.mrf.mxu0
    %v557 = vadd.f32 %v492, %v556
    %558 = vmatmul.f32.gmra.mxu0 %v214
    %v559 = vpop.f32.mrf.mxu0
    %v560 = vadd.f32 %v495, %v559
    %561 = vmatmul.f32.gmra.mxu0 %v216
    %v562 = vpop.f32.mrf.mxu0
    %v563 = vadd.f32 %v498, %v562
    %564 = vmatmul.f32.gmra.mxu0 %v218
    %v565 = vpop.f32.mrf.mxu0
    %v566 = vadd.f32 %v501, %v565
    %567 = vmatmul.f32.gmra.mxu0 %v220
    %v568 = vpop.f32.mrf.mxu0
    %v569 = vadd.f32 %v504, %v568
    %570 = vmatmul.f32.gmra.mxu0 %v222
    %v571 = vpop.f32.mrf.mxu0
    %v572 = vadd.f32 %v507, %v571
    %573 = vmatmul.f32.gmra.mxu0 %v224
    %v574 = vpop.f32.mrf.mxu0
    %v575 = vadd.f32 %v510, %v574
    %576 = vmatmul.f32.gmra.mxu0 %v226
    %v577 = vpop.f32.mrf.mxu0
    %v578 = vadd.f32 %v513, %v577
    %579 = vmatmul.f32.gmra.mxu0 %v228
    %v580 = vpop.f32.mrf.mxu0
    %v581 = vadd.f32 %v516, %v580
    %582 = vmatmul.f32.gmra.mxu0 %v230
    %v583 = vpop.f32.mrf.mxu0
    %v584 = vadd.f32 %v519, %v583
    %585 = vmatmul.f32.gmra.mxu0 %v232
    %v586 = vpop.f32.mrf.mxu0
    %v587 = vadd.f32 %v522, %v586
    %588 = vdwg.mxu0
    %589 = vmatpush.msra.mxu0 %v280
    %590 = vmatpush.msra.mxu0 %v277
    %591 = vmatpush.msra.mxu0 %v274
    %592 = vmatpush.msra.mxu0 %v271
    %593 = vmatpush.msra.mxu0 %v268
    %594 = vmatpush.msra.mxu0 %v265
    %595 = vmatpush.msra.mxu0 %v262
    %596 = vmatpush.msra.mxu0 %v259
    %597 = vmatpush.msra.mxu0 %v256
    %598 = vmatpush.msra.mxu0 %v253
    %599 = vmatpush.msra.mxu0 %v250
    %600 = vmatpush.msra.mxu0 %v247
    %601 = vmatpush.msra.mxu0 %v244
    %602 = vmatpush.msra.mxu0 %v241
    %603 = vmatpush.msra.mxu0 %v238
    %604 = vmatpush.msra.mxu0 %v235
    %605 = vmatmul.f32.gmra.mxu0 %v201
    %v606 = vpop.f32.mrf.mxu0
    %v607 = vadd.f32 0.0, %v606
    %608 = vmatmul.f32.gmra.mxu0 %v203
    %v609 = vpop.f32.mrf.mxu0
    %v610 = vadd.f32 0.0, %v609
    %611 = vmatmul.f32.gmra.mxu0 %v205
    %v612 = vpop.f32.mrf.mxu0
    %v613 = vadd.f32 0.0, %v612
    %614 = vmatmul.f32.gmra.mxu0 %v207
    %v615 = vpop.f32.mrf.mxu0
    %v616 = vadd.f32 0.0, %v615
    %617 = vmatmul.f32.gmra.mxu0 %v209
    %v618 = vpop.f32.mrf.mxu0
    %v619 = vadd.f32 0.0, %v618
    %620 = vmatmul.f32.gmra.mxu0 %v211
    %v621 = vpop.f32.mrf.mxu0
    %v622 = vadd.f32 0.0, %v621
    %623 = vmatmul.f32.gmra.mxu0 %v213
    %v624 = vpop.f32.mrf.mxu0
    %v625 = vadd.f32 0.0, %v624
    %626 = vmatmul.f32.gmra.mxu0 %v215
    %v627 = vpop.f32.mrf.mxu0
    %v628 = vadd.f32 0.0, %v627
    %629 = vmatmul.f32.gmra.mxu0 %v217
    %v630 = vpop.f32.mrf.mxu0
    %v631 = vadd.f32 0.0, %v630
    %632 = vmatmul.f32.gmra.mxu0 %v219
    %v633 = vpop.f32.mrf.mxu0
    %v634 = vadd.f32 0.0, %v633
    %635 = vmatmul.f32.gmra.mxu0 %v221
    %v636 = vpop.f32.mrf.mxu0
    %v637 = vadd.f32 0.0, %v636
    %638 = vmatmul.f32.gmra.mxu0 %v223
    %v639 = vpop.f32.mrf.mxu0
    %v640 = vadd.f32 0.0, %v639
    %641 = vmatmul.f32.gmra.mxu0 %v225
    %v642 = vpop.f32.mrf.mxu0
    %v643 = vadd.f32 0.0, %v642
    %644 = vmatmul.f32.gmra.mxu0 %v227
    %v645 = vpop.f32.mrf.mxu0
    %v646 = vadd.f32 0.0, %v645
    %647 = vmatmul.f32.gmra.mxu0 %v229
    %v648 = vpop.f32.mrf.mxu0
    %v649 = vadd.f32 0.0, %v648
    %650 = vmatmul.f32.gmra.mxu0 %v231
    %v651 = vpop.f32.mrf.mxu0
    %v652 = vadd.f32 0.0, %v651
    %653 = vdwg.mxu0
    %654 = vmatpush.msra.mxu0 %v328
    %655 = vmatpush.msra.mxu0 %v325
    %656 = vmatpush.msra.mxu0 %v322
    %657 = vmatpush.msra.mxu0 %v319
    %658 = vmatpush.msra.mxu0 %v316
    %659 = vmatpush.msra.mxu0 %v313
    %660 = vmatpush.msra.mxu0 %v310
    %661 = vmatpush.msra.mxu0 %v307
    %662 = vmatpush.msra.mxu0 %v304
    %663 = vmatpush.msra.mxu0 %v301
    %664 = vmatpush.msra.mxu0 %v298
    %665 = vmatpush.msra.mxu0 %v295
    %666 = vmatpush.msra.mxu0 %v292
    %667 = vmatpush.msra.mxu0 %v289
    %668 = vmatpush.msra.mxu0 %v286
    %669 = vmatpush.msra.mxu0 %v283
    %670 = vmatmul.f32.gmra.mxu0 %v202
    %v671 = vpop.f32.mrf.mxu0
    %v672 = vadd.f32 %v607, %v671
    %673 = vmatmul.f32.gmra.mxu0 %v204
    %v674 = vpop.f32.mrf.mxu0
    %v675 = vadd.f32 %v610, %v674
    %676 = vmatmul.f32.gmra.mxu0 %v206
    %v677 = vpop.f32.mrf.mxu0
    %v678 = vadd.f32 %v613, %v677
    %679 = vmatmul.f32.gmra.mxu0 %v208
    %v680 = vpop.f32.mrf.mxu0
    %v681 = vadd.f32 %v616, %v680
    %682 = vmatmul.f32.gmra.mxu0 %v210
    %v683 = vpop.f32.mrf.mxu0
    %v684 = vadd.f32 %v619, %v683
    %685 = vmatmul.f32.gmra.mxu0 %v212
    %v686 = vpop.f32.mrf.mxu0
    %v687 = vadd.f32 %v622, %v686
    %688 = vmatmul.f32.gmra.mxu0 %v214
    %v689 = vpop.f32.mrf.mxu0
    %v690 = vadd.f32 %v625, %v689
    %691 = vmatmul.f32.gmra.mxu0 %v216
    %v692 = vpop.f32.mrf.mxu0
    %v693 = vadd.f32 %v628, %v692
    %694 = vmatmul.f32.gmra.mxu0 %v218
    %v695 = vpop.f32.mrf.mxu0
    %v696 = vadd.f32 %v631, %v695
    %697 = vmatmul.f32.gmra.mxu0 %v220
    %v698 = vpop.f32.mrf.mxu0
    %v699 = vadd.f32 %v634, %v698
    %700 = vmatmul.f32.gmra.mxu0 %v222
    %v701 = vpop.f32.mrf.mxu0
    %v702 = vadd.f32 %v637, %v701
    %703 = vmatmul.f32.gmra.mxu0 %v224
    %v704 = vpop.f32.mrf.mxu0
    %v705 = vadd.f32 %v640, %v704
    %706 = vmatmul.f32.gmra.mxu0 %v226
    %v707 = vpop.f32.mrf.mxu0
    %v708 = vadd.f32 %v643, %v707
    %709 = vmatmul.f32.gmra.mxu0 %v228
    %v710 = vpop.f32.mrf.mxu0
    %v711 = vadd.f32 %v646, %v710
    %712 = vmatmul.f32.gmra.mxu0 %v230
    %v713 = vpop.f32.mrf.mxu0
    %v714 = vadd.f32 %v649, %v713
    %715 = vmatmul.f32.gmra.mxu0 %v232
    %v716 = vpop.f32.mrf.mxu0
    %v717 = vadd.f32 %v652, %v716
    %718 = vdwg.mxu0
    %v719 = vld [vmem:[#allocation4] sm:$0xff]
    %v720 = vld [vmem:[#allocation4 + $0x8] sm:$0xff]
    %v721 = vld [vmem:[#allocation4 + $0x10] sm:$0xff]
    %v722 = vld [vmem:[#allocation4 + $0x18] sm:$0xff]
    %v723 = vld [vmem:[#allocation4 + $0x20] sm:$0xff]
    %v724 = vld [vmem:[#allocation4 + $0x28] sm:$0xff]
    %v725 = vld [vmem:[#allocation4 + $0x30] sm:$0xff]
    %v726 = vld [vmem:[#allocation4 + $0x38] sm:$0xff]
    %v727 = vld [vmem:[#allocation4 + $0x40] sm:$0xff]
    %v728 = vld [vmem:[#allocation4 + $0x48] sm:$0xff]
    %v729 = vld [vmem:[#allocation4 + $0x50] sm:$0xff]
    %v730 = vld [vmem:[#allocation4 + $0x58] sm:$0xff]
    %v731 = vld [vmem:[#allocation4 + $0x60] sm:$0xff]
    %v732 = vld [vmem:[#allocation4 + $0x68] sm:$0xff]
    %v733 = vld [vmem:[#allocation4 + $0x70] sm:$0xff]
    %v734 = vld [vmem:[#allocation4 + $0x78] sm:$0xff]
    %v735 = vld [vmem:[#allocation4 + $0x80] sm:$0xff]
    %v736 = vld [vmem:[#allocation4 + $0x88] sm:$0xff]
    %v737 = vld [vmem:[#allocation4 + $0x90] sm:$0xff]
    %v738 = vld [vmem:[#allocation4 + $0x98] sm:$0xff]
    %v739 = vld [vmem:[#allocation4 + $0xa0] sm:$0xff]
    %v740 = vld [vmem:[#allocation4 + $0xa8] sm:$0xff]
    %v741 = vld [vmem:[#allocation4 + $0xb0] sm:$0xff]
    %v742 = vld [vmem:[#allocation4 + $0xb8] sm:$0xff]
    %v743 = vld [vmem:[#allocation4 + $0xc0] sm:$0xff]
    %v744 = vld [vmem:[#allocation4 + $0xc8] sm:$0xff]
    %v745 = vld [vmem:[#allocation4 + $0xd0] sm:$0xff]
    %v746 = vld [vmem:[#allocation4 + $0xd8] sm:$0xff]
    %v747 = vld [vmem:[#allocation4 + $0xe0] sm:$0xff]
    %v748 = vld [vmem:[#allocation4 + $0xe8] sm:$0xff]
    %v749 = vld [vmem:[#allocation4 + $0xf0] sm:$0xff]
    %v750 = vld [vmem:[#allocation4 + $0xf8] sm:$0xff]
    %v751 = vld [vmem:[#allocation4 + $0x100] sm:$0xff]
    %v752 = vld [vmem:[#allocation4 + $0x108] sm:$0xff]
    %v753 = vld [vmem:[#allocation4 + $0x110] sm:$0xff]
    %v754 = vld [vmem:[#allocation4 + $0x118] sm:$0xff]
    %v755 = vld [vmem:[#allocation4 + $0x120] sm:$0xff]
    %v756 = vld [vmem:[#allocation4 + $0x128] sm:$0xff]
    %v757 = vld [vmem:[#allocation4 + $0x130] sm:$0xff]
    %v758 = vld [vmem:[#allocation4 + $0x138] sm:$0xff]
    %v759 = vld [vmem:[#allocation4 + $0x140] sm:$0xff]
    %v760 = vld [vmem:[#allocation4 + $0x148] sm:$0xff]
    %v761 = vld [vmem:[#allocation4 + $0x150] sm:$0xff]
    %v762 = vld [vmem:[#allocation4 + $0x158] sm:$0xff]
    %v763 = vld [vmem:[#allocation4 + $0x160] sm:$0xff]
    %v764 = vld [vmem:[#allocation4 + $0x168] sm:$0xff]
    %v765 = vld [vmem:[#allocation4 + $0x170] sm:$0xff]
    %v766 = vld [vmem:[#allocation4 + $0x178] sm:$0xff]
    %v767 = vld [vmem:[#allocation6] sm:$0xff]
    %v768 = vld [vmem:[#allocation6 + $0x8] sm:$0xff]
    %v769 = vld [vmem:[#allocation6 + $0x10] sm:$0xff]
    %v770 = vld [vmem:[#allocation6 + $0x18] sm:$0xff]
    %v771 = vld [vmem:[#allocation6 + $0x20] sm:$0xff]
    %v772 = vld [vmem:[#allocation6 + $0x28] sm:$0xff]
    %v773 = vld [vmem:[#allocation6 + $0x30] sm:$0xff]
    %v774 = vld [vmem:[#allocation6 + $0x38] sm:$0xff]
    %v775 = vld [vmem:[#allocation6 + $0x40] sm:$0xff]
    %v776 = vld [vmem:[#allocation6 + $0x48] sm:$0xff]
    %v777 = vld [vmem:[#allocation6 + $0x50] sm:$0xff]
    %v778 = vld [vmem:[#allocation6 + $0x58] sm:$0xff]
    %v779 = vld [vmem:[#allocation6 + $0x60] sm:$0xff]
    %v780 = vld [vmem:[#allocation6 + $0x68] sm:$0xff]
    %v781 = vld [vmem:[#allocation6 + $0x70] sm:$0xff]
    %v782 = vld [vmem:[#allocation6 + $0x78] sm:$0xff]
    %v783 = vld [vmem:[#allocation6 + $0x80] sm:$0xff]
    %v784 = vld [vmem:[#allocation6 + $0x88] sm:$0xff]
    %v785 = vld [vmem:[#allocation6 + $0x90] sm:$0xff]
    %v786 = vld [vmem:[#allocation6 + $0x98] sm:$0xff]
    %v787 = vld [vmem:[#allocation6 + $0xa0] sm:$0xff]
    %v788 = vld [vmem:[#allocation6 + $0xa8] sm:$0xff]
    %v789 = vld [vmem:[#allocation6 + $0xb0] sm:$0xff]
    %v790 = vld [vmem:[#allocation6 + $0xb8] sm:$0xff]
    %v791 = vld [vmem:[#allocation6 + $0xc0] sm:$0xff]
    %v792 = vld [vmem:[#allocation6 + $0xc8] sm:$0xff]
    %v793 = vld [vmem:[#allocation6 + $0xd0] sm:$0xff]
    %v794 = vld [vmem:[#allocation6 + $0xd8] sm:$0xff]
    %v795 = vld [vmem:[#allocation6 + $0xe0] sm:$0xff]
    %v796 = vld [vmem:[#allocation6 + $0xe8] sm:$0xff]
    %v797 = vld [vmem:[#allocation6 + $0xf0] sm:$0xff]
    %v798 = vld [vmem:[#allocation6 + $0xf8] sm:$0xff]
    %v799 = vld [vmem:[#allocation6 + $0x100] sm:$0xff]
    %v800 = vld [vmem:[#allocation6 + $0x108] sm:$0xff]
    %v801 = vld [vmem:[#allocation6 + $0x110] sm:$0xff]
    %v802 = vld [vmem:[#allocation6 + $0x118] sm:$0xff]
    %v803 = vld [vmem:[#allocation6 + $0x120] sm:$0xff]
    %v804 = vld [vmem:[#allocation6 + $0x128] sm:$0xff]
    %v805 = vld [vmem:[#allocation6 + $0x130] sm:$0xff]
    %v806 = vld [vmem:[#allocation6 + $0x138] sm:$0xff]
    %v807 = vld [vmem:[#allocation6 + $0x140] sm:$0xff]
    %v808 = vld [vmem:[#allocation6 + $0x148] sm:$0xff]
    %v809 = vld [vmem:[#allocation6 + $0x150] sm:$0xff]
    %v810 = vld [vmem:[#allocation6 + $0x158] sm:$0xff]
    %v811 = vld [vmem:[#allocation6 + $0x160] sm:$0xff]
    %v812 = vld [vmem:[#allocation6 + $0x168] sm:$0xff]
    %v813 = vld [vmem:[#allocation6 + $0x170] sm:$0xff]
    %v814 = vld [vmem:[#allocation6 + $0x178] sm:$0xff]
    %v815 = vld [vmem:[%s4] sm:$0x7]
    %v816 = vld [vmem:[%s5] sm:$0x7]
    %v818 = vperm.slane %v815, 0
    %v819 = vperm.slane %v815, 1
    %v820 = vperm.slane %v815, 2
    %824 = vmatpush.msra.mxu0 %v764
    %825 = vmatpush.msra.mxu0 %v761
    %826 = vmatpush.msra.mxu0 %v758
    %827 = vmatpush.msra.mxu0 %v755
    %828 = vmatpush.msra.mxu0 %v752
    %829 = vmatpush.msra.mxu0 %v749
    %830 = vmatpush.msra.mxu0 %v746
    %831 = vmatpush.msra.mxu0 %v743
    %832 = vmatpush.msra.mxu0 %v740
    %833 = vmatpush.msra.mxu0 %v737
    %834 = vmatpush.msra.mxu0 %v734
    %835 = vmatpush.msra.mxu0 %v731
    %836 = vmatpush.msra.mxu0 %v728
    %837 = vmatpush.msra.mxu0 %v725
    %838 = vmatpush.msra.mxu0 %v722
    %839 = vmatpush.msra.mxu0 %v719
    %840 = vmatmul.f32.gmra.mxu0 0.0
    %v841 = vpop.f32.mrf.mxu0
    %v842 = vadd.f32 %v818, %v841
    %843 = vdwg.mxu0
    %844 = vmatpush.msra.mxu0 %v765
    %845 = vmatpush.msra.mxu0 %v762
    %846 = vmatpush.msra.mxu0 %v759
    %847 = vmatpush.msra.mxu0 %v756
    %848 = vmatpush.msra.mxu0 %v753
    %849 = vmatpush.msra.mxu0 %v750
    %850 = vmatpush.msra.mxu0 %v747
    %851 = vmatpush.msra.mxu0 %v744
    %852 = vmatpush.msra.mxu0 %v741
    %853 = vmatpush.msra.mxu0 %v738
    %854 = vmatpush.msra.mxu0 %v735
    %855 = vmatpush.msra.mxu0 %v732
    %856 = vmatpush.msra.mxu0 %v729
    %857 = vmatpush.msra.mxu0 %v726
    %858 = vmatpush.msra.mxu0 %v723
    %859 = vmatpush.msra.mxu0 %v720
    %860 = vmatmul.f32.gmra.mxu0 0.0
    %v861 = vpop.f32.mrf.mxu0
    %v862 = vadd.f32 %v819, %v861
    %863 = vdwg.mxu0
    %864 = vmatpush.msra.mxu0 %v766
    %865 = vmatpush.msra.mxu0 %v763
    %866 = vmatpush.msra.mxu0 %v760
    %867 = vmatpush.msra.mxu0 %v757
    %868 = vmatpush.msra.mxu0 %v754
    %869 = vmatpush.msra.mxu0 %v751
    %870 = vmatpush.msra.mxu0 %v748
    %871 = vmatpush.msra.mxu0 %v745
    %872 = vmatpush.msra.mxu0 %v742
    %873 = vmatpush.msra.mxu0 %v739
    %874 = vmatpush.msra.mxu0 %v736
    %875 = vmatpush.msra.mxu0 %v733
    %876 = vmatpush.msra.mxu0 %v730
    %877 = vmatpush.msra.mxu0 %v727
    %878 = vmatpush.msra.mxu0 %v724
    %879 = vmatpush.msra.mxu0 %v721
    %880 = vmatmul.f32.gmra.mxu0 0.0
    %v881 = vpop.f32.mrf.mxu0
    %v882 = vadd.f32 %v820, %v881
    %883 = vdwg.mxu0
    %v885 = vperm.slane %v816, 0
    %v886 = vperm.slane %v816, 1
    %v887 = vperm.slane %v816, 2
    %891 = vmatpush.msra.mxu0 %v812
    %892 = vmatpush.msra.mxu0 %v809
    %893 = vmatpush.msra.mxu0 %v806
    %894 = vmatpush.msra.mxu0 %v803
    %895 = vmatpush.msra.mxu0 %v800
    %896 = vmatpush.msra.mxu0 %v797
    %897 = vmatpush.msra.mxu0 %v794
    %898 = vmatpush.msra.mxu0 %v791
    %899 = vmatpush.msra.mxu0 %v788
    %900 = vmatpush.msra.mxu0 %v785
    %901 = vmatpush.msra.mxu0 %v782
    %902 = vmatpush.msra.mxu0 %v779
    %903 = vmatpush.msra.mxu0 %v776
    %904 = vmatpush.msra.mxu0 %v773
    %905 = vmatpush.msra.mxu0 %v770
    %906 = vmatpush.msra.mxu0 %v767
    %907 = vmatmul.f32.gmra.mxu0 0.0
    %v908 = vpop.f32.mrf.mxu0
    %v909 = vadd.f32 %v885, %v908
    %910 = vdwg.mxu0
    %911 = vmatpush.msra.mxu0 %v813
    %912 = vmatpush.msra.mxu0 %v810
    %913 = vmatpush.msra.mxu0 %v807
    %914 = vmatpush.msra.mxu0 %v804
    %915 = vmatpush.msra.mxu0 %v801
    %916 = vmatpush.msra.mxu0 %v798
    %917 = vmatpush.msra.mxu0 %v795
    %918 = vmatpush.msra.mxu0 %v792
    %919 = vmatpush.msra.mxu0 %v789
    %920 = vmatpush.msra.mxu0 %v786
    %921 = vmatpush.msra.mxu0 %v783
    %922 = vmatpush.msra.mxu0 %v780
    %923 = vmatpush.msra.mxu0 %v777
    %924 = vmatpush.msra.mxu0 %v774
    %925 = vmatpush.msra.mxu0 %v771
    %926 = vmatpush.msra.mxu0 %v768
    %927 = vmatmul.f32.gmra.mxu0 0.0
    %v928 = vpop.f32.mrf.mxu0
    %v929 = vadd.f32 %v886, %v928
    %930 = vdwg.mxu0
    %931 = vmatpush.msra.mxu0 %v814
    %932 = vmatpush.msra.mxu0 %v811
    %933 = vmatpush.msra.mxu0 %v808
    %934 = vmatpush.msra.mxu0 %v805
    %935 = vmatpush.msra.mxu0 %v802
    %936 = vmatpush.msra.mxu0 %v799
    %937 = vmatpush.msra.mxu0 %v796
    %938 = vmatpush.msra.mxu0 %v793
    %939 = vmatpush.msra.mxu0 %v790
    %940 = vmatpush.msra.mxu0 %v787
    %941 = vmatpush.msra.mxu0 %v784
    %942 = vmatpush.msra.mxu0 %v781
    %943 = vmatpush.msra.mxu0 %v778
    %944 = vmatpush.msra.mxu0 %v775
    %945 = vmatpush.msra.mxu0 %v772
    %946 = vmatpush.msra.mxu0 %v769
    %947 = vmatmul.f32.gmra.mxu0 0.0
    %v948 = vpop.f32.mrf.mxu0
    %v949 = vadd.f32 %v887, %v948
    %950 = vdwg.mxu0
    %v951 = vadd.f32 %v412, %v842
    %v952 = vxor.u32 %v951, 2147483648
    %v953 = vmul.f32 %v952, 1.442695
    %v954 = vpow.pop %v953
    %v955 = vadd.f32 %v954, 1.0
    %v956 = vrcp.pop %v955
    %v957 = vmul.f32 %v955, %v956
    %v958 = vsub.f32 1.0, %v957
    %v959 = vmul.f32 %v956, %v958
    %v960 = vadd.f32 %v956, %v959
    %vm961 = vweird.f32 %v955
    %vm962 = vweird.f32 %v956
    %vm963 = vmor %vm961, %vm962
    %v964 = vsel %vm963, %v956, %v960
    %v965 = vand.u32 2147483647, %v955
    %vm966 = vcmp.eq.f32.partialorder %v965, 8.507059e+37
    %v967 = vand.u32 %v955, 2147483648
    %v968 = vor.u32 1.1754944e-38, %v967
    %v969 = vsel %vm966, %v968, %v964
    %v970 = vmul.f32 1.0, %v969
    %v971 = vadd.f32 %v542, %v862
    %v972 = vxor.u32 %v971, 2147483648
    %v973 = vmul.f32 %v972, 1.442695
    %v974 = vpow.pop %v973
    %v975 = vadd.f32 %v974, 1.0
    %v976 = vrcp.pop %v975
    %v977 = vmul.f32 %v975, %v976
    %v978 = vsub.f32 1.0, %v977
    %v979 = vmul.f32 %v976, %v978
    %v980 = vadd.f32 %v976, %v979
    %vm981 = vweird.f32 %v975
    %vm982 = vweird.f32 %v976
    %vm983 = vmor %vm981, %vm982
    %v984 = vsel %vm983, %v976, %v980
    %v985 = vand.u32 2147483647, %v975
    %vm986 = vcmp.eq.f32.partialorder %v985, 8.507059e+37
    %v987 = vand.u32 %v975, 2147483648
    %v988 = vor.u32 1.1754944e-38, %v987
    %v989 = vsel %vm986, %v988, %v984
    %v990 = vmul.f32 1.0, %v989
    %v991 = vmul.f32 %v970, %v882
    %v992 = vadd.f32 %v672, %v991
    %v993 = vtanh.pop %v992
    %v994 = vsub.f32 0.0, %v993
    %v995 = vmul.f32 %v990, %v994
    %v996 = vadd.f32 %v993, %v995
    %v997 = vadd.f32 %v436, %v909
    %v998 = vxor.u32 %v997, 2147483648
    %v999 = vmul.f32 %v998, 1.442695
    %v1000 = vpow.pop %v999
    %v1001 = vadd.f32 %v1000, 1.0
    %v1002 = vrcp.pop %v1001
    %v1003 = vmul.f32 %v1001, %v1002
    %v1004 = vsub.f32 1.0, %v1003
    %v1005 = vmul.f32 %v1002, %v1004
    %v1006 = vadd.f32 %v1002, %v1005
    %vm1007 = vweird.f32 %v1001
    %vm1008 = vweird.f32 %v1002
    %vm1009 = vmor %vm1007, %vm1008
    %v1010 = vsel %vm1009, %v1002, %v1006
    %v1011 = vand.u32 2147483647, %v1001
    %vm1012 = vcmp.eq.f32.partialorder %v1011, 8.507059e+37
    %v1013 = vand.u32 %v1001, 2147483648
    %v1014 = vor.u32 1.1754944e-38, %v1013
    %v1015 = vsel %vm1012, %v1014, %v1010
    %v1016 = vmul.f32 1.0, %v1015
    %v1017 = vadd.f32 %v566, %v929
    %v1018 = vxor.u32 %v1017, 2147483648
    %v1019 = vmul.f32 %v1018, 1.442695
    %v1020 = vpow.pop %v1019
    %v1021 = vadd.f32 %v1020, 1.0
    %v1022 = vrcp.pop %v1021
    %v1023 = vmul.f32 %v1021, %v1022
    %v1024 = vsub.f32 1.0, %v1023
    %v1025 = vmul.f32 %v1022, %v1024
    %v1026 = vadd.f32 %v1022, %v1025
    %vm1027 = vweird.f32 %v1021
    %vm1028 = vweird.f32 %v1022
    %vm1029 = vmor %vm1027, %vm1028
    %v1030 = vsel %vm1029, %v1022, %v1026
    %v1031 = vand.u32 2147483647, %v1021
    %vm1032 = vcmp.eq.f32.partialorder %v1031, 8.507059e+37
    %v1033 = vand.u32 %v1021, 2147483648
    %v1034 = vor.u32 1.1754944e-38, %v1033
    %v1035 = vsel %vm1032, %v1034, %v1030
    %v1036 = vmul.f32 1.0, %v1035
    %v1037 = vmul.f32 %v1016, %v949
    %v1038 = vadd.f32 %v696, %v1037
    %v1039 = vtanh.pop %v1038
    %v1040 = vsub.f32 0.0, %v1039
    %v1041 = vmul.f32 %v1036, %v1040
    %v1042 = vadd.f32 %v1039, %v1041
    %1043 = vmatpush.msra.mxu0 %v764
    %1044 = vmatpush.msra.mxu0 %v761
    %1045 = vmatpush.msra.mxu0 %v758
    %1046 = vmatpush.msra.mxu0 %v755
    %1047 = vmatpush.msra.mxu0 %v752
    %1048 = vmatpush.msra.mxu0 %v749
    %1049 = vmatpush.msra.mxu0 %v746
    %1050 = vmatpush.msra.mxu0 %v743
    %1051 = vmatpush.msra.mxu0 %v740
    %1052 = vmatpush.msra.mxu0 %v737
    %1053 = vmatpush.msra.mxu0 %v734
    %1054 = vmatpush.msra.mxu0 %v731
    %1055 = vmatpush.msra.mxu0 %v728
    %1056 = vmatpush.msra.mxu0 %v725
    %1057 = vmatpush.msra.mxu0 %v722
    %1058 = vmatpush.msra.mxu0 %v719
    %1059 = vmatmul.f32.gmra.mxu0 %v996
    %v1060 = vpop.f32.mrf.mxu0
    %v1061 = vadd.f32 %v818, %v1060
    %1062 = vdwg.mxu0
    %1063 = vmatpush.msra.mxu0 %v765
    %1064 = vmatpush.msra.mxu0 %v762
    %1065 = vmatpush.msra.mxu0 %v759
    %1066 = vmatpush.msra.mxu0 %v756
    %1067 = vmatpush.msra.mxu0 %v753
    %1068 = vmatpush.msra.mxu0 %v750
    %1069 = vmatpush.msra.mxu0 %v747
    %1070 = vmatpush.msra.mxu0 %v744
    %1071 = vmatpush.msra.mxu0 %v741
    %1072 = vmatpush.msra.mxu0 %v738
    %1073 = vmatpush.msra.mxu0 %v735
    %1074 = vmatpush.msra.mxu0 %v732
    %1075 = vmatpush.msra.mxu0 %v729
    %1076 = vmatpush.msra.mxu0 %v726
    %1077 = vmatpush.msra.mxu0 %v723
    %1078 = vmatpush.msra.mxu0 %v720
    %1079 = vmatmul.f32.gmra.mxu0 %v996
    %v1080 = vpop.f32.mrf.mxu0
    %v1081 = vadd.f32 %v819, %v1080
    %1082 = vdwg.mxu0
    %1083 = vmatpush.msra.mxu0 %v766
    %1084 = vmatpush.msra.mxu0 %v763
    %1085 = vmatpush.msra.mxu0 %v760
    %1086 = vmatpush.msra.mxu0 %v757
    %1087 = vmatpush.msra.mxu0 %v754
    %1088 = vmatpush.msra.mxu0 %v751
    %1089 = vmatpush.msra.mxu0 %v748
    %1090 = vmatpush.msra.mxu0 %v745
    %1091 = vmatpush.msra.mxu0 %v742
    %1092 = vmatpush.msra.mxu0 %v739
    %1093 = vmatpush.msra.mxu0 %v736
    %1094 = vmatpush.msra.mxu0 %v733
    %1095 = vmatpush.msra.mxu0 %v730
    %1096 = vmatpush.msra.mxu0 %v727
    %1097 = vmatpush.msra.mxu0 %v724
    %1098 = vmatpush.msra.mxu0 %v721
    %1099 = vmatmul.f32.gmra.mxu0 %v996
    %v1100 = vpop.f32.mrf.mxu0
    %v1101 = vadd.f32 %v820, %v1100
    %1102 = vdwg.mxu0
    %1103 = vmatpush.msra.mxu0 %v812
    %1104 = vmatpush.msra.mxu0 %v809
    %1105 = vmatpush.msra.mxu0 %v806
    %1106 = vmatpush.msra.mxu0 %v803
    %1107 = vmatpush.msra.mxu0 %v800
    %1108 = vmatpush.msra.mxu0 %v797
    %1109 = vmatpush.msra.mxu0 %v794
    %1110 = vmatpush.msra.mxu0 %v791
    %1111 = vmatpush.msra.mxu0 %v788
    %1112 = vmatpush.msra.mxu0 %v785
    %1113 = vmatpush.msra.mxu0 %v782
    %1114 = vmatpush.msra.mxu0 %v779
    %1115 = vmatpush.msra.mxu0 %v776
    %1116 = vmatpush.msra.mxu0 %v773
    %1117 = vmatpush.msra.mxu0 %v770
    %1118 = vmatpush.msra.mxu0 %v767
    %1119 = vmatmul.f32.gmra.mxu0 %v1042
    %v1120 = vpop.f32.mrf.mxu0
    %v1121 = vadd.f32 %v885, %v1120
    %1122 = vdwg.mxu0
    %1123 = vmatpush.msra.mxu0 %v813
    %1124 = vmatpush.msra.mxu0 %v810
    %1125 = vmatpush.msra.mxu0 %v807
    %1126 = vmatpush.msra.mxu0 %v804
    %1127 = vmatpush.msra.mxu0 %v801
    %1128 = vmatpush.msra.mxu0 %v798
    %1129 = vmatpush.msra.mxu0 %v795
    %1130 = vmatpush.msra.mxu0 %v792
    %1131 = vmatpush.msra.mxu0 %v789
    %1132 = vmatpush.msra.mxu0 %v786
    %1133 = vmatpush.msra.mxu0 %v783
    %1134 = vmatpush.msra.mxu0 %v780
    %1135 = vmatpush.msra.mxu0 %v777
    %1136 = vmatpush.msra.mxu0 %v774
    %1137 = vmatpush.msra.mxu0 %v771
    %1138 = vmatpush.msra.mxu0 %v768
    %1139 = vmatmul.f32.gmra.mxu0 %v1042
    %v1140 = vpop.f32.mrf.mxu0
    %v1141 = vadd.f32 %v886, %v1140
    %1142 = vdwg.mxu0
    %1143 = vmatpush.msra.mxu0 %v814
    %1144 = vmatpush.msra.mxu0 %v811
    %1145 = vmatpush.msra.mxu0 %v808
    %1146 = vmatpush.msra.mxu0 %v805
    %1147 = vmatpush.msra.mxu0 %v802
    %1148 = vmatpush.msra.mxu0 %v799
    %1149 = vmatpush.msra.mxu0 %v796
    %1150 = vmatpush.msra.mxu0 %v793
    %1151 = vmatpush.msra.mxu0 %v790
    %1152 = vmatpush.msra.mxu0 %v787
    %1153 = vmatpush.msra.mxu0 %v784
    %1154 = vmatpush.msra.mxu0 %v781
    %1155 = vmatpush.msra.mxu0 %v778
    %1156 = vmatpush.msra.mxu0 %v775
    %1157 = vmatpush.msra.mxu0 %v772
    %1158 = vmatpush.msra.mxu0 %v769
    %1159 = vmatmul.f32.gmra.mxu0 %v1042
    %v1160 = vpop.f32.mrf.mxu0
    %v1161 = vadd.f32 %v887, %v1160
    %1162 = vdwg.mxu0
    %v1163 = vadd.f32 %v415, %v1061
    %v1164 = vxor.u32 %v1163, 2147483648
    %v1165 = vmul.f32 %v1164, 1.442695
    %v1166 = vpow.pop %v1165
    %v1167 = vadd.f32 %v1166, 1.0
    %v1168 = vrcp.pop %v1167
    %v1169 = vmul.f32 %v1167, %v1168
    %v1170 = vsub.f32 1.0, %v1169
    %v1171 = vmul.f32 %v1168, %v1170
    %v1172 = vadd.f32 %v1168, %v1171
    %vm1173 = vweird.f32 %v1167
    %vm1174 = vweird.f32 %v1168
    %vm1175 = vmor %vm1173, %vm1174
    %v1176 = vsel %vm1175, %v1168, %v1172
    %v1177 = vand.u32 2147483647, %v1167
    %vm1178 = vcmp.eq.f32.partialorder %v1177, 8.507059e+37
    %v1179 = vand.u32 %v1167, 2147483648
    %v1180 = vor.u32 1.1754944e-38, %v1179
    %v1181 = vsel %vm1178, %v1180, %v1176
    %v1182 = vmul.f32 1.0, %v1181
    %v1183 = vadd.f32 %v545, %v1081
    %v1184 = vxor.u32 %v1183, 2147483648
    %v1185 = vmul.f32 %v1184, 1.442695
    %v1186 = vpow.pop %v1185
    %v1187 = vadd.f32 %v1186, 1.0
    %v1188 = vrcp.pop %v1187
    %v1189 = vmul.f32 %v1187, %v1188
    %v1190 = vsub.f32 1.0, %v1189
    %v1191 = vmul.f32 %v1188, %v1190
    %v1192 = vadd.f32 %v1188, %v1191
    %vm1193 = vweird.f32 %v1187
    %vm1194 = vweird.f32 %v1188
    %vm1195 = vmor %vm1193, %vm1194
    %v1196 = vsel %vm1195, %v1188, %v1192
    %v1197 = vand.u32 2147483647, %v1187
    %vm1198 = vcmp.eq.f32.partialorder %v1197, 8.507059e+37
    %v1199 = vand.u32 %v1187, 2147483648
    %v1200 = vor.u32 1.1754944e-38, %v1199
    %v1201 = vsel %vm1198, %v1200, %v1196
    %v1202 = vmul.f32 1.0, %v1201
    %v1203 = vmul.f32 %v1182, %v1101
    %v1204 = vadd.f32 %v675, %v1203
    %v1205 = vtanh.pop %v1204
    %v1206 = vsub.f32 %v996, %v1205
    %v1207 = vmul.f32 %v1202, %v1206
    %v1208 = vadd.f32 %v1205, %v1207
    %v1209 = vadd.f32 %v439, %v1121
    %v1210 = vxor.u32 %v1209, 2147483648
    %v1211 = vmul.f32 %v1210, 1.442695
    %v1212 = vpow.pop %v1211
    %v1213 = vadd.f32 %v1212, 1.0
    %v1214 = vrcp.pop %v1213
    %v1215 = vmul.f32 %v1213, %v1214
    %v1216 = vsub.f32 1.0, %v1215
    %v1217 = vmul.f32 %v1214, %v1216
    %v1218 = vadd.f32 %v1214, %v1217
    %vm1219 = vweird.f32 %v1213
    %vm1220 = vweird.f32 %v1214
    %vm1221 = vmor %vm1219, %vm1220
    %v1222 = vsel %vm1221, %v1214, %v1218
    %v1223 = vand.u32 2147483647, %v1213
    %vm1224 = vcmp.eq.f32.partialorder %v1223, 8.507059e+37
    %v1225 = vand.u32 %v1213, 2147483648
    %v1226 = vor.u32 1.1754944e-38, %v1225
    %v1227 = vsel %vm1224, %v1226, %v1222
    %v1228 = vmul.f32 1.0, %v1227
    %v1229 = vadd.f32 %v569, %v1141
    %v1230 = vxor.u32 %v1229, 2147483648
    %v1231 = vmul.f32 %v1230, 1.442695
    %v1232 = vpow.pop %v1231
    %v1233 = vadd.f32 %v1232, 1.0
    %v1234 = vrcp.pop %v1233
    %v1235 = vmul.f32 %v1233, %v1234
    %v1236 = vsub.f32 1.0, %v1235
    %v1237 = vmul.f32 %v1234, %v1236
    %v1238 = vadd.f32 %v1234, %v1237
    %vm1239 = vweird.f32 %v1233
    %vm1240 = vweird.f32 %v1234
    %vm1241 = vmor %vm1239, %vm1240
    %v1242 = vsel %vm1241, %v1234, %v1238
    %v1243 = vand.u32 2147483647, %v1233
    %vm1244 = vcmp.eq.f32.partialorder %v1243, 8.507059e+37
    %v1245 = vand.u32 %v1233, 2147483648
    %v1246 = vor.u32 1.1754944e-38, %v1245
    %v1247 = vsel %vm1244, %v1246, %v1242
    %v1248 = vmul.f32 1.0, %v1247
    %v1249 = vmul.f32 %v1228, %v1161
    %v1250 = vadd.f32 %v699, %v1249
    %v1251 = vtanh.pop %v1250
    %v1252 = vsub.f32 %v1042, %v1251
    %v1253 = vmul.f32 %v1248, %v1252
    %v1254 = vadd.f32 %v1251, %v1253
    %1255 = vmatpush.msra.mxu0 %v764
    %1256 = vmatpush.msra.mxu0 %v761
    %1257 = vmatpush.msra.mxu0 %v758
    %1258 = vmatpush.msra.mxu0 %v755
    %1259 = vmatpush.msra.mxu0 %v752
    %1260 = vmatpush.msra.mxu0 %v749
    %1261 = vmatpush.msra.mxu0 %v746
    %1262 = vmatpush.msra.mxu0 %v743
    %1263 = vmatpush.msra.mxu0 %v740
    %1264 = vmatpush.msra.mxu0 %v737
    %1265 = vmatpush.msra.mxu0 %v734
    %1266 = vmatpush.msra.mxu0 %v731
    %1267 = vmatpush.msra.mxu0 %v728
    %1268 = vmatpush.msra.mxu0 %v725
    %1269 = vmatpush.msra.mxu0 %v722
    %1270 = vmatpush.msra.mxu0 %v719
    %1271 = vmatmul.f32.gmra.mxu0 %v1208
    %v1272 = vpop.f32.mrf.mxu0
    %v1273 = vadd.f32 %v818, %v1272
    %1274 = vdwg.mxu0
    %1275 = vmatpush.msra.mxu0 %v765
    %1276 = vmatpush.msra.mxu0 %v762
    %1277 = vmatpush.msra.mxu0 %v759
    %1278 = vmatpush.msra.mxu0 %v756
    %1279 = vmatpush.msra.mxu0 %v753
    %1280 = vmatpush.msra.mxu0 %v750
    %1281 = vmatpush.msra.mxu0 %v747
    %1282 = vmatpush.msra.mxu0 %v744
    %1283 = vmatpush.msra.mxu0 %v741
    %1284 = vmatpush.msra.mxu0 %v738
    %1285 = vmatpush.msra.mxu0 %v735
    %1286 = vmatpush.msra.mxu0 %v732
    %1287 = vmatpush.msra.mxu0 %v729
    %1288 = vmatpush.msra.mxu0 %v726
    %1289 = vmatpush.msra.mxu0 %v723
    %1290 = vmatpush.msra.mxu0 %v720
    %1291 = vmatmul.f32.gmra.mxu0 %v1208
    %v1292 = vpop.f32.mrf.mxu0
    %v1293 = vadd.f32 %v819, %v1292
    %1294 = vdwg.mxu0
    %1295 = vmatpush.msra.mxu0 %v766
    %1296 = vmatpush.msra.mxu0 %v763
    %1297 = vmatpush.msra.mxu0 %v760
    %1298 = vmatpush.msra.mxu0 %v757
    %1299 = vmatpush.msra.mxu0 %v754
    %1300 = vmatpush.msra.mxu0 %v751
    %1301 = vmatpush.msra.mxu0 %v748
    %1302 = vmatpush.msra.mxu0 %v745
    %1303 = vmatpush.msra.mxu0 %v742
    %1304 = vmatpush.msra.mxu0 %v739
    %1305 = vmatpush.msra.mxu0 %v736
    %1306 = vmatpush.msra.mxu0 %v733
    %1307 = vmatpush.msra.mxu0 %v730
    %1308 = vmatpush.msra.mxu0 %v727
    %1309 = vmatpush.msra.mxu0 %v724
    %1310 = vmatpush.msra.mxu0 %v721
    %1311 = vmatmul.f32.gmra.mxu0 %v1208
    %v1312 = vpop.f32.mrf.mxu0
    %v1313 = vadd.f32 %v820, %v1312
    %1314 = vdwg.mxu0
    %1315 = vmatpush.msra.mxu0 %v812
    %1316 = vmatpush.msra.mxu0 %v809
    %1317 = vmatpush.msra.mxu0 %v806
    %1318 = vmatpush.msra.mxu0 %v803
    %1319 = vmatpush.msra.mxu0 %v800
    %1320 = vmatpush.msra.mxu0 %v797
    %1321 = vmatpush.msra.mxu0 %v794
    %1322 = vmatpush.msra.mxu0 %v791
    %1323 = vmatpush.msra.mxu0 %v788
    %1324 = vmatpush.msra.mxu0 %v785
    %1325 = vmatpush.msra.mxu0 %v782
    %1326 = vmatpush.msra.mxu0 %v779
    %1327 = vmatpush.msra.mxu0 %v776
    %1328 = vmatpush.msra.mxu0 %v773
    %1329 = vmatpush.msra.mxu0 %v770
    %1330 = vmatpush.msra.mxu0 %v767
    %1331 = vmatmul.f32.gmra.mxu0 %v1254
    %v1332 = vpop.f32.mrf.mxu0
    %v1333 = vadd.f32 %v885, %v1332
    %1334 = vdwg.mxu0
    %1335 = vmatpush.msra.mxu0 %v813
    %1336 = vmatpush.msra.mxu0 %v810
    %1337 = vmatpush.msra.mxu0 %v807
    %1338 = vmatpush.msra.mxu0 %v804
    %1339 = vmatpush.msra.mxu0 %v801
    %1340 = vmatpush.msra.mxu0 %v798
    %1341 = vmatpush.msra.mxu0 %v795
    %1342 = vmatpush.msra.mxu0 %v792
    %1343 = vmatpush.msra.mxu0 %v789
    %1344 = vmatpush.msra.mxu0 %v786
    %1345 = vmatpush.msra.mxu0 %v783
    %1346 = vmatpush.msra.mxu0 %v780
    %1347 = vmatpush.msra.mxu0 %v777
    %1348 = vmatpush.msra.mxu0 %v774
    %1349 = vmatpush.msra.mxu0 %v771
    %1350 = vmatpush.msra.mxu0 %v768
    %1351 = vmatmul.f32.gmra.mxu0 %v1254
    %v1352 = vpop.f32.mrf.mxu0
    %v1353 = vadd.f32 %v886, %v1352
    %1354 = vdwg.mxu0
    %1355 = vmatpush.msra.mxu0 %v814
    %1356 = vmatpush.msra.mxu0 %v811
    %1357 = vmatpush.msra.mxu0 %v808
    %1358 = vmatpush.msra.mxu0 %v805
    %1359 = vmatpush.msra.mxu0 %v802
    %1360 = vmatpush.msra.mxu0 %v799
    %1361 = vmatpush.msra.mxu0 %v796
    %1362 = vmatpush.msra.mxu0 %v793
    %1363 = vmatpush.msra.mxu0 %v790
    %1364 = vmatpush.msra.mxu0 %v787
    %1365 = vmatpush.msra.mxu0 %v784
    %1366 = vmatpush.msra.mxu0 %v781
    %1367 = vmatpush.msra.mxu0 %v778
    %1368 = vmatpush.msra.mxu0 %v775
    %1369 = vmatpush.msra.mxu0 %v772
    %1370 = vmatpush.msra.mxu0 %v769
    %1371 = vmatmul.f32.gmra.mxu0 %v1254
    %v1372 = vpop.f32.mrf.mxu0
    %v1373 = vadd.f32 %v887, %v1372
    %1374 = vdwg.mxu0
    %v1375 = vadd.f32 %v418, %v1273
    %v1376 = vxor.u32 %v1375, 2147483648
    %v1377 = vmul.f32 %v1376, 1.442695
    %v1378 = vpow.pop %v1377
    %v1379 = vadd.f32 %v1378, 1.0
    %v1380 = vrcp.pop %v1379
    %v1381 = vmul.f32 %v1379, %v1380
    %v1382 = vsub.f32 1.0, %v1381
    %v1383 = vmul.f32 %v1380, %v1382
    %v1384 = vadd.f32 %v1380, %v1383
    %vm1385 = vweird.f32 %v1379
    %vm1386 = vweird.f32 %v1380
    %vm1387 = vmor %vm1385, %vm1386
    %v1388 = vsel %vm1387, %v1380, %v1384
    %v1389 = vand.u32 2147483647, %v1379
    %vm1390 = vcmp.eq.f32.partialorder %v1389, 8.507059e+37
    %v1391 = vand.u32 %v1379, 2147483648
    %v1392 = vor.u32 1.1754944e-38, %v1391
    %v1393 = vsel %vm1390, %v1392, %v1388
    %v1394 = vmul.f32 1.0, %v1393
    %v1395 = vadd.f32 %v548, %v1293
    %v1396 = vxor.u32 %v1395, 2147483648
    %v1397 = vmul.f32 %v1396, 1.442695
    %v1398 = vpow.pop %v1397
    %v1399 = vadd.f32 %v1398, 1.0
    %v1400 = vrcp.pop %v1399
    %v1401 = vmul.f32 %v1399, %v1400
    %v1402 = vsub.f32 1.0, %v1401
    %v1403 = vmul.f32 %v1400, %v1402
    %v1404 = vadd.f32 %v1400, %v1403
    %vm1405 = vweird.f32 %v1399
    %vm1406 = vweird.f32 %v1400
    %vm1407 = vmor %vm1405, %vm1406
    %v1408 = vsel %vm1407, %v1400, %v1404
    %v1409 = vand.u32 2147483647, %v1399
    %vm1410 = vcmp.eq.f32.partialorder %v1409, 8.507059e+37
    %v1411 = vand.u32 %v1399, 2147483648
    %v1412 = vor.u32 1.1754944e-38, %v1411
    %v1413 = vsel %vm1410, %v1412, %v1408
    %v1414 = vmul.f32 1.0, %v1413
    %v1415 = vmul.f32 %v1394, %v1313
    %v1416 = vadd.f32 %v678, %v1415
    %v1417 = vtanh.pop %v1416
    %v1418 = vsub.f32 %v1208, %v1417
    %v1419 = vmul.f32 %v1414, %v1418
    %v1420 = vadd.f32 %v1417, %v1419
    %v1421 = vadd.f32 %v442, %v1333
    %v1422 = vxor.u32 %v1421, 2147483648
    %v1423 = vmul.f32 %v1422, 1.442695
    %v1424 = vpow.pop %v1423
    %v1425 = vadd.f32 %v1424, 1.0
    %v1426 = vrcp.pop %v1425
    %v1427 = vmul.f32 %v1425, %v1426
    %v1428 = vsub.f32 1.0, %v1427
    %v1429 = vmul.f32 %v1426, %v1428
    %v1430 = vadd.f32 %v1426, %v1429
    %vm1431 = vweird.f32 %v1425
    %vm1432 = vweird.f32 %v1426
    %vm1433 = vmor %vm1431, %vm1432
    %v1434 = vsel %vm1433, %v1426, %v1430
    %v1435 = vand.u32 2147483647, %v1425
    %vm1436 = vcmp.eq.f32.partialorder %v1435, 8.507059e+37
    %v1437 = vand.u32 %v1425, 2147483648
    %v1438 = vor.u32 1.1754944e-38, %v1437
    %v1439 = vsel %vm1436, %v1438, %v1434
    %v1440 = vmul.f32 1.0, %v1439
    %v1441 = vadd.f32 %v572, %v1353
    %v1442 = vxor.u32 %v1441, 2147483648
    %v1443 = vmul.f32 %v1442, 1.442695
    %v1444 = vpow.pop %v1443
    %v1445 = vadd.f32 %v1444, 1.0
    %v1446 = vrcp.pop %v1445
    %v1447 = vmul.f32 %v1445, %v1446
    %v1448 = vsub.f32 1.0, %v1447
    %v1449 = vmul.f32 %v1446, %v1448
    %v1450 = vadd.f32 %v1446, %v1449
    %vm1451 = vweird.f32 %v1445
    %vm1452 = vweird.f32 %v1446
    %vm1453 = vmor %vm1451, %vm1452
    %v1454 = vsel %vm1453, %v1446, %v1450
    %v1455 = vand.u32 2147483647, %v1445
    %vm1456 = vcmp.eq.f32.partialorder %v1455, 8.507059e+37
    %v1457 = vand.u32 %v1445, 2147483648
    %v1458 = vor.u32 1.1754944e-38, %v1457
    %v1459 = vsel %vm1456, %v1458, %v1454
    %v1460 = vmul.f32 1.0, %v1459
    %v1461 = vmul.f32 %v1440, %v1373
    %v1462 = vadd.f32 %v702, %v1461
    %v1463 = vtanh.pop %v1462
    %v1464 = vsub.f32 %v1254, %v1463
    %v1465 = vmul.f32 %v1460, %v1464
    %v1466 = vadd.f32 %v1463, %v1465
    %1467 = vmatpush.msra.mxu0 %v764
    %1468 = vmatpush.msra.mxu0 %v761
    %1469 = vmatpush.msra.mxu0 %v758
    %1470 = vmatpush.msra.mxu0 %v755
    %1471 = vmatpush.msra.mxu0 %v752
    %1472 = vmatpush.msra.mxu0 %v749
    %1473 = vmatpush.msra.mxu0 %v746
    %1474 = vmatpush.msra.mxu0 %v743
    %1475 = vmatpush.msra.mxu0 %v740
    %1476 = vmatpush.msra.mxu0 %v737
    %1477 = vmatpush.msra.mxu0 %v734
    %1478 = vmatpush.msra.mxu0 %v731
    %1479 = vmatpush.msra.mxu0 %v728
    %1480 = vmatpush.msra.mxu0 %v725
    %1481 = vmatpush.msra.mxu0 %v722
    %1482 = vmatpush.msra.mxu0 %v719
    %1483 = vmatmul.f32.gmra.mxu0 %v1420
    %v1484 = vpop.f32.mrf.mxu0
    %v1485 = vadd.f32 %v818, %v1484
    %1486 = vdwg.mxu0
    %1487 = vmatpush.msra.mxu0 %v765
    %1488 = vmatpush.msra.mxu0 %v762
    %1489 = vmatpush.msra.mxu0 %v759
    %1490 = vmatpush.msra.mxu0 %v756
    %1491 = vmatpush.msra.mxu0 %v753
    %1492 = vmatpush.msra.mxu0 %v750
    %1493 = vmatpush.msra.mxu0 %v747
    %1494 = vmatpush.msra.mxu0 %v744
    %1495 = vmatpush.msra.mxu0 %v741
    %1496 = vmatpush.msra.mxu0 %v738
    %1497 = vmatpush.msra.mxu0 %v735
    %1498 = vmatpush.msra.mxu0 %v732
    %1499 = vmatpush.msra.mxu0 %v729
    %1500 = vmatpush.msra.mxu0 %v726
    %1501 = vmatpush.msra.mxu0 %v723
    %1502 = vmatpush.msra.mxu0 %v720
    %1503 = vmatmul.f32.gmra.mxu0 %v1420
    %v1504 = vpop.f32.mrf.mxu0
    %v1505 = vadd.f32 %v819, %v1504
    %1506 = vdwg.mxu0
    %1507 = vmatpush.msra.mxu0 %v766
    %1508 = vmatpush.msra.mxu0 %v763
    %1509 = vmatpush.msra.mxu0 %v760
    %1510 = vmatpush.msra.mxu0 %v757
    %1511 = vmatpush.msra.mxu0 %v754
    %1512 = vmatpush.msra.mxu0 %v751
    %1513 = vmatpush.msra.mxu0 %v748
    %1514 = vmatpush.msra.mxu0 %v745
    %1515 = vmatpush.msra.mxu0 %v742
    %1516 = vmatpush.msra.mxu0 %v739
    %1517 = vmatpush.msra.mxu0 %v736
    %1518 = vmatpush.msra.mxu0 %v733
    %1519 = vmatpush.msra.mxu0 %v730
    %1520 = vmatpush.msra.mxu0 %v727
    %1521 = vmatpush.msra.mxu0 %v724
    %1522 = vmatpush.msra.mxu0 %v721
    %1523 = vmatmul.f32.gmra.mxu0 %v1420
    %v1524 = vpop.f32.mrf.mxu0
    %v1525 = vadd.f32 %v820, %v1524
    %1526 = vdwg.mxu0
    %1527 = vmatpush.msra.mxu0 %v812
    %1528 = vmatpush.msra.mxu0 %v809
    %1529 = vmatpush.msra.mxu0 %v806
    %1530 = vmatpush.msra.mxu0 %v803
    %1531 = vmatpush.msra.mxu0 %v800
    %1532 = vmatpush.msra.mxu0 %v797
    %1533 = vmatpush.msra.mxu0 %v794
    %1534 = vmatpush.msra.mxu0 %v791
    %1535 = vmatpush.msra.mxu0 %v788
    %1536 = vmatpush.msra.mxu0 %v785
    %1537 = vmatpush.msra.mxu0 %v782
    %1538 = vmatpush.msra.mxu0 %v779
    %1539 = vmatpush.msra.mxu0 %v776
    %1540 = vmatpush.msra.mxu0 %v773
    %1541 = vmatpush.msra.mxu0 %v770
    %1542 = vmatpush.msra.mxu0 %v767
    %1543 = vmatmul.f32.gmra.mxu0 %v1466
    %v1544 = vpop.f32.mrf.mxu0
    %v1545 = vadd.f32 %v885, %v1544
    %1546 = vdwg.mxu0
    %1547 = vmatpush.msra.mxu0 %v813
    %1548 = vmatpush.msra.mxu0 %v810
    %1549 = vmatpush.msra.mxu0 %v807
    %1550 = vmatpush.msra.mxu0 %v804
    %1551 = vmatpush.msra.mxu0 %v801
    %1552 = vmatpush.msra.mxu0 %v798
    %1553 = vmatpush.msra.mxu0 %v795
    %1554 = vmatpush.msra.mxu0 %v792
    %1555 = vmatpush.msra.mxu0 %v789
    %1556 = vmatpush.msra.mxu0 %v786
    %1557 = vmatpush.msra.mxu0 %v783
    %1558 = vmatpush.msra.mxu0 %v780
    %1559 = vmatpush.msra.mxu0 %v777
    %1560 = vmatpush.msra.mxu0 %v774
    %1561 = vmatpush.msra.mxu0 %v771
    %1562 = vmatpush.msra.mxu0 %v768
    %1563 = vmatmul.f32.gmra.mxu0 %v1466
    %v1564 = vpop.f32.mrf.mxu0
    %v1565 = vadd.f32 %v886, %v1564
    %1566 = vdwg.mxu0
    %1567 = vmatpush.msra.mxu0 %v814
    %1568 = vmatpush.msra.mxu0 %v811
    %1569 = vmatpush.msra.mxu0 %v808
    %1570 = vmatpush.msra.mxu0 %v805
    %1571 = vmatpush.msra.mxu0 %v802
    %1572 = vmatpush.msra.mxu0 %v799
    %1573 = vmatpush.msra.mxu0 %v796
    %1574 = vmatpush.msra.mxu0 %v793
    %1575 = vmatpush.msra.mxu0 %v790
    %1576 = vmatpush.msra.mxu0 %v787
    %1577 = vmatpush.msra.mxu0 %v784
    %1578 = vmatpush.msra.mxu0 %v781
    %1579 = vmatpush.msra.mxu0 %v778
    %1580 = vmatpush.msra.mxu0 %v775
    %1581 = vmatpush.msra.mxu0 %v772
    %1582 = vmatpush.msra.mxu0 %v769
    %1583 = vmatmul.f32.gmra.mxu0 %v1466
    %v1584 = vpop.f32.mrf.mxu0
    %v1585 = vadd.f32 %v887, %v1584
    %1586 = vdwg.mxu0
    %v1587 = vadd.f32 %v421, %v1485
    %v1588 = vxor.u32 %v1587, 2147483648
    %v1589 = vmul.f32 %v1588, 1.442695
    %v1590 = vpow.pop %v1589
    %v1591 = vadd.f32 %v1590, 1.0
    %v1592 = vrcp.pop %v1591
    %v1593 = vmul.f32 %v1591, %v1592
    %v1594 = vsub.f32 1.0, %v1593
    %v1595 = vmul.f32 %v1592, %v1594
    %v1596 = vadd.f32 %v1592, %v1595
    %vm1597 = vweird.f32 %v1591
    %vm1598 = vweird.f32 %v1592
    %vm1599 = vmor %vm1597, %vm1598
    %v1600 = vsel %vm1599, %v1592, %v1596
    %v1601 = vand.u32 2147483647, %v1591
    %vm1602 = vcmp.eq.f32.partialorder %v1601, 8.507059e+37
    %v1603 = vand.u32 %v1591, 2147483648
    %v1604 = vor.u32 1.1754944e-38, %v1603
    %v1605 = vsel %vm1602, %v1604, %v1600
    %v1606 = vmul.f32 1.0, %v1605
    %v1607 = vadd.f32 %v551, %v1505
    %v1608 = vxor.u32 %v1607, 2147483648
    %v1609 = vmul.f32 %v1608, 1.442695
    %v1610 = vpow.pop %v1609
    %v1611 = vadd.f32 %v1610, 1.0
    %v1612 = vrcp.pop %v1611
    %v1613 = vmul.f32 %v1611, %v1612
    %v1614 = vsub.f32 1.0, %v1613
    %v1615 = vmul.f32 %v1612, %v1614
    %v1616 = vadd.f32 %v1612, %v1615
    %vm1617 = vweird.f32 %v1611
    %vm1618 = vweird.f32 %v1612
    %vm1619 = vmor %vm1617, %vm1618
    %v1620 = vsel %vm1619, %v1612, %v1616
    %v1621 = vand.u32 2147483647, %v1611
    %vm1622 = vcmp.eq.f32.partialorder %v1621, 8.507059e+37
    %v1623 = vand.u32 %v1611, 2147483648
    %v1624 = vor.u32 1.1754944e-38, %v1623
    %v1625 = vsel %vm1622, %v1624, %v1620
    %v1626 = vmul.f32 1.0, %v1625
    %v1627 = vmul.f32 %v1606, %v1525
    %v1628 = vadd.f32 %v681, %v1627
    %v1629 = vtanh.pop %v1628
    %v1630 = vsub.f32 %v1420, %v1629
    %v1631 = vmul.f32 %v1626, %v1630
    %v1632 = vadd.f32 %v1629, %v1631
    %v1633 = vadd.f32 %v445, %v1545
    %v1634 = vxor.u32 %v1633, 2147483648
    %v1635 = vmul.f32 %v1634, 1.442695
    %v1636 = vpow.pop %v1635
    %v1637 = vadd.f32 %v1636, 1.0
    %v1638 = vrcp.pop %v1637
    %v1639 = vmul.f32 %v1637, %v1638
    %v1640 = vsub.f32 1.0, %v1639
    %v1641 = vmul.f32 %v1638, %v1640
    %v1642 = vadd.f32 %v1638, %v1641
    %vm1643 = vweird.f32 %v1637
    %vm1644 = vweird.f32 %v1638
    %vm1645 = vmor %vm1643, %vm1644
    %v1646 = vsel %vm1645, %v1638, %v1642
    %v1647 = vand.u32 2147483647, %v1637
    %vm1648 = vcmp.eq.f32.partialorder %v1647, 8.507059e+37
    %v1649 = vand.u32 %v1637, 2147483648
    %v1650 = vor.u32 1.1754944e-38, %v1649
    %v1651 = vsel %vm1648, %v1650, %v1646
    %v1652 = vmul.f32 1.0, %v1651
    %v1653 = vadd.f32 %v575, %v1565
    %v1654 = vxor.u32 %v1653, 2147483648
    %v1655 = vmul.f32 %v1654, 1.442695
    %v1656 = vpow.pop %v1655
    %v1657 = vadd.f32 %v1656, 1.0
    %v1658 = vrcp.pop %v1657
    %v1659 = vmul.f32 %v1657, %v1658
    %v1660 = vsub.f32 1.0, %v1659
    %v1661 = vmul.f32 %v1658, %v1660
    %v1662 = vadd.f32 %v1658, %v1661
    %vm1663 = vweird.f32 %v1657
    %vm1664 = vweird.f32 %v1658
    %vm1665 = vmor %vm1663, %vm1664
    %v1666 = vsel %vm1665, %v1658, %v1662
    %v1667 = vand.u32 2147483647, %v1657
    %vm1668 = vcmp.eq.f32.partialorder %v1667, 8.507059e+37
    %v1669 = vand.u32 %v1657, 2147483648
    %v1670 = vor.u32 1.1754944e-38, %v1669
    %v1671 = vsel %vm1668, %v1670, %v1666
    %v1672 = vmul.f32 1.0, %v1671
    %v1673 = vmul.f32 %v1652, %v1585
    %v1674 = vadd.f32 %v705, %v1673
    %v1675 = vtanh.pop %v1674
    %v1676 = vsub.f32 %v1466, %v1675
    %v1677 = vmul.f32 %v1672, %v1676
    %v1678 = vadd.f32 %v1675, %v1677
    %1679 = vmatpush.msra.mxu0 %v764
    %1680 = vmatpush.msra.mxu0 %v761
    %1681 = vmatpush.msra.mxu0 %v758
    %1682 = vmatpush.msra.mxu0 %v755
    %1683 = vmatpush.msra.mxu0 %v752
    %1684 = vmatpush.msra.mxu0 %v749
    %1685 = vmatpush.msra.mxu0 %v746
    %1686 = vmatpush.msra.mxu0 %v743
    %1687 = vmatpush.msra.mxu0 %v740
    %1688 = vmatpush.msra.mxu0 %v737
    %1689 = vmatpush.msra.mxu0 %v734
    %1690 = vmatpush.msra.mxu0 %v731
    %1691 = vmatpush.msra.mxu0 %v728
    %1692 = vmatpush.msra.mxu0 %v725
    %1693 = vmatpush.msra.mxu0 %v722
    %1694 = vmatpush.msra.mxu0 %v719
    %1695 = vmatmul.f32.gmra.mxu0 %v1632
    %v1696 = vpop.f32.mrf.mxu0
    %v1697 = vadd.f32 %v818, %v1696
    %1698 = vdwg.mxu0
    %1699 = vmatpush.msra.mxu0 %v765
    %1700 = vmatpush.msra.mxu0 %v762
    %1701 = vmatpush.msra.mxu0 %v759
    %1702 = vmatpush.msra.mxu0 %v756
    %1703 = vmatpush.msra.mxu0 %v753
    %1704 = vmatpush.msra.mxu0 %v750
    %1705 = vmatpush.msra.mxu0 %v747
    %1706 = vmatpush.msra.mxu0 %v744
    %1707 = vmatpush.msra.mxu0 %v741
    %1708 = vmatpush.msra.mxu0 %v738
    %1709 = vmatpush.msra.mxu0 %v735
    %1710 = vmatpush.msra.mxu0 %v732
    %1711 = vmatpush.msra.mxu0 %v729
    %1712 = vmatpush.msra.mxu0 %v726
    %1713 = vmatpush.msra.mxu0 %v723
    %1714 = vmatpush.msra.mxu0 %v720
    %1715 = vmatmul.f32.gmra.mxu0 %v1632
    %v1716 = vpop.f32.mrf.mxu0
    %v1717 = vadd.f32 %v819, %v1716
    %1718 = vdwg.mxu0
    %1719 = vmatpush.msra.mxu0 %v766
    %1720 = vmatpush.msra.mxu0 %v763
    %1721 = vmatpush.msra.mxu0 %v760
    %1722 = vmatpush.msra.mxu0 %v757
    %1723 = vmatpush.msra.mxu0 %v754
    %1724 = vmatpush.msra.mxu0 %v751
    %1725 = vmatpush.msra.mxu0 %v748
    %1726 = vmatpush.msra.mxu0 %v745
    %1727 = vmatpush.msra.mxu0 %v742
    %1728 = vmatpush.msra.mxu0 %v739
    %1729 = vmatpush.msra.mxu0 %v736
    %1730 = vmatpush.msra.mxu0 %v733
    %1731 = vmatpush.msra.mxu0 %v730
    %1732 = vmatpush.msra.mxu0 %v727
    %1733 = vmatpush.msra.mxu0 %v724
    %1734 = vmatpush.msra.mxu0 %v721
    %1735 = vmatmul.f32.gmra.mxu0 %v1632
    %v1736 = vpop.f32.mrf.mxu0
    %v1737 = vadd.f32 %v820, %v1736
    %1738 = vdwg.mxu0
    %1739 = vmatpush.msra.mxu0 %v812
    %1740 = vmatpush.msra.mxu0 %v809
    %1741 = vmatpush.msra.mxu0 %v806
    %1742 = vmatpush.msra.mxu0 %v803
    %1743 = vmatpush.msra.mxu0 %v800
    %1744 = vmatpush.msra.mxu0 %v797
    %1745 = vmatpush.msra.mxu0 %v794
    %1746 = vmatpush.msra.mxu0 %v791
    %1747 = vmatpush.msra.mxu0 %v788
    %1748 = vmatpush.msra.mxu0 %v785
    %1749 = vmatpush.msra.mxu0 %v782
    %1750 = vmatpush.msra.mxu0 %v779
    %1751 = vmatpush.msra.mxu0 %v776
    %1752 = vmatpush.msra.mxu0 %v773
    %1753 = vmatpush.msra.mxu0 %v770
    %1754 = vmatpush.msra.mxu0 %v767
    %1755 = vmatmul.f32.gmra.mxu0 %v1678
    %v1756 = vpop.f32.mrf.mxu0
    %v1757 = vadd.f32 %v885, %v1756
    %1758 = vdwg.mxu0
    %1759 = vmatpush.msra.mxu0 %v813
    %1760 = vmatpush.msra.mxu0 %v810
    %1761 = vmatpush.msra.mxu0 %v807
    %1762 = vmatpush.msra.mxu0 %v804
    %1763 = vmatpush.msra.mxu0 %v801
    %1764 = vmatpush.msra.mxu0 %v798
    %1765 = vmatpush.msra.mxu0 %v795
    %1766 = vmatpush.msra.mxu0 %v792
    %1767 = vmatpush.msra.mxu0 %v789
    %1768 = vmatpush.msra.mxu0 %v786
    %1769 = vmatpush.msra.mxu0 %v783
    %1770 = vmatpush.msra.mxu0 %v780
    %1771 = vmatpush.msra.mxu0 %v777
    %1772 = vmatpush.msra.mxu0 %v774
    %1773 = vmatpush.msra.mxu0 %v771
    %1774 = vmatpush.msra.mxu0 %v768
    %1775 = vmatmul.f32.gmra.mxu0 %v1678
    %v1776 = vpop.f32.mrf.mxu0
    %v1777 = vadd.f32 %v886, %v1776
    %1778 = vdwg.mxu0
    %1779 = vmatpush.msra.mxu0 %v814
    %1780 = vmatpush.msra.mxu0 %v811
    %1781 = vmatpush.msra.mxu0 %v808
    %1782 = vmatpush.msra.mxu0 %v805
    %1783 = vmatpush.msra.mxu0 %v802
    %1784 = vmatpush.msra.mxu0 %v799
    %1785 = vmatpush.msra.mxu0 %v796
    %1786 = vmatpush.msra.mxu0 %v793
    %1787 = vmatpush.msra.mxu0 %v790
    %1788 = vmatpush.msra.mxu0 %v787
    %1789 = vmatpush.msra.mxu0 %v784
    %1790 = vmatpush.msra.mxu0 %v781
    %1791 = vmatpush.msra.mxu0 %v778
    %1792 = vmatpush.msra.mxu0 %v775
    %1793 = vmatpush.msra.mxu0 %v772
    %1794 = vmatpush.msra.mxu0 %v769
    %1795 = vmatmul.f32.gmra.mxu0 %v1678
    %v1796 = vpop.f32.mrf.mxu0
    %v1797 = vadd.f32 %v887, %v1796
    %1798 = vdwg.mxu0
    %v1799 = vadd.f32 %v424, %v1697
    %v1800 = vxor.u32 %v1799, 2147483648
    %v1801 = vmul.f32 %v1800, 1.442695
    %v1802 = vpow.pop %v1801
    %v1803 = vadd.f32 %v1802, 1.0
    %v1804 = vrcp.pop %v1803
    %v1805 = vmul.f32 %v1803, %v1804
    %v1806 = vsub.f32 1.0, %v1805
    %v1807 = vmul.f32 %v1804, %v1806
    %v1808 = vadd.f32 %v1804, %v1807
    %vm1809 = vweird.f32 %v1803
    %vm1810 = vweird.f32 %v1804
    %vm1811 = vmor %vm1809, %vm1810
    %v1812 = vsel %vm1811, %v1804, %v1808
    %v1813 = vand.u32 2147483647, %v1803
    %vm1814 = vcmp.eq.f32.partialorder %v1813, 8.507059e+37
    %v1815 = vand.u32 %v1803, 2147483648
    %v1816 = vor.u32 1.1754944e-38, %v1815
    %v1817 = vsel %vm1814, %v1816, %v1812
    %v1818 = vmul.f32 1.0, %v1817
    %v1819 = vadd.f32 %v554, %v1717
    %v1820 = vxor.u32 %v1819, 2147483648
    %v1821 = vmul.f32 %v1820, 1.442695
    %v1822 = vpow.pop %v1821
    %v1823 = vadd.f32 %v1822, 1.0
    %v1824 = vrcp.pop %v1823
    %v1825 = vmul.f32 %v1823, %v1824
    %v1826 = vsub.f32 1.0, %v1825
    %v1827 = vmul.f32 %v1824, %v1826
    %v1828 = vadd.f32 %v1824, %v1827
    %vm1829 = vweird.f32 %v1823
    %vm1830 = vweird.f32 %v1824
    %vm1831 = vmor %vm1829, %vm1830
    %v1832 = vsel %vm1831, %v1824, %v1828
    %v1833 = vand.u32 2147483647, %v1823
    %vm1834 = vcmp.eq.f32.partialorder %v1833, 8.507059e+37
    %v1835 = vand.u32 %v1823, 2147483648
    %v1836 = vor.u32 1.1754944e-38, %v1835
    %v1837 = vsel %vm1834, %v1836, %v1832
    %v1838 = vmul.f32 1.0, %v1837
    %v1839 = vmul.f32 %v1818, %v1737
    %v1840 = vadd.f32 %v684, %v1839
    %v1841 = vtanh.pop %v1840
    %v1842 = vsub.f32 %v1632, %v1841
    %v1843 = vmul.f32 %v1838, %v1842
    %v1844 = vadd.f32 %v1841, %v1843
    %v1845 = vadd.f32 %v448, %v1757
    %v1846 = vxor.u32 %v1845, 2147483648
    %v1847 = vmul.f32 %v1846, 1.442695
    %v1848 = vpow.pop %v1847
    %v1849 = vadd.f32 %v1848, 1.0
    %v1850 = vrcp.pop %v1849
    %v1851 = vmul.f32 %v1849, %v1850
    %v1852 = vsub.f32 1.0, %v1851
    %v1853 = vmul.f32 %v1850, %v1852
    %v1854 = vadd.f32 %v1850, %v1853
    %vm1855 = vweird.f32 %v1849
    %vm1856 = vweird.f32 %v1850
    %vm1857 = vmor %vm1855, %vm1856
    %v1858 = vsel %vm1857, %v1850, %v1854
    %v1859 = vand.u32 2147483647, %v1849
    %vm1860 = vcmp.eq.f32.partialorder %v1859, 8.507059e+37
    %v1861 = vand.u32 %v1849, 2147483648
    %v1862 = vor.u32 1.1754944e-38, %v1861
    %v1863 = vsel %vm1860, %v1862, %v1858
    %v1864 = vmul.f32 1.0, %v1863
    %v1865 = vadd.f32 %v578, %v1777
    %v1866 = vxor.u32 %v1865, 2147483648
    %v1867 = vmul.f32 %v1866, 1.442695
    %v1868 = vpow.pop %v1867
    %v1869 = vadd.f32 %v1868, 1.0
    %v1870 = vrcp.pop %v1869
    %v1871 = vmul.f32 %v1869, %v1870
    %v1872 = vsub.f32 1.0, %v1871
    %v1873 = vmul.f32 %v1870, %v1872
    %v1874 = vadd.f32 %v1870, %v1873
    %vm1875 = vweird.f32 %v1869
    %vm1876 = vweird.f32 %v1870
    %vm1877 = vmor %vm1875, %vm1876
    %v1878 = vsel %vm1877, %v1870, %v1874
    %v1879 = vand.u32 2147483647, %v1869
    %vm1880 = vcmp.eq.f32.partialorder %v1879, 8.507059e+37
    %v1881 = vand.u32 %v1869, 2147483648
    %v1882 = vor.u32 1.1754944e-38, %v1881
    %v1883 = vsel %vm1880, %v1882, %v1878
    %v1884 = vmul.f32 1.0, %v1883
    %v1885 = vmul.f32 %v1864, %v1797
    %v1886 = vadd.f32 %v708, %v1885
    %v1887 = vtanh.pop %v1886
    %v1888 = vsub.f32 %v1678, %v1887
    %v1889 = vmul.f32 %v1884, %v1888
    %v1890 = vadd.f32 %v1887, %v1889
    %1891 = vmatpush.msra.mxu0 %v764
    %1892 = vmatpush.msra.mxu0 %v761
    %1893 = vmatpush.msra.mxu0 %v758
    %1894 = vmatpush.msra.mxu0 %v755
    %1895 = vmatpush.msra.mxu0 %v752
    %1896 = vmatpush.msra.mxu0 %v749
    %1897 = vmatpush.msra.mxu0 %v746
    %1898 = vmatpush.msra.mxu0 %v743
    %1899 = vmatpush.msra.mxu0 %v740
    %1900 = vmatpush.msra.mxu0 %v737
    %1901 = vmatpush.msra.mxu0 %v734
    %1902 = vmatpush.msra.mxu0 %v731
    %1903 = vmatpush.msra.mxu0 %v728
    %1904 = vmatpush.msra.mxu0 %v725
    %1905 = vmatpush.msra.mxu0 %v722
    %1906 = vmatpush.msra.mxu0 %v719
    %1907 = vmatmul.f32.gmra.mxu0 %v1844
    %v1908 = vpop.f32.mrf.mxu0
    %v1909 = vadd.f32 %v818, %v1908
    %1910 = vdwg.mxu0
    %1911 = vmatpush.msra.mxu0 %v765
    %1912 = vmatpush.msra.mxu0 %v762
    %1913 = vmatpush.msra.mxu0 %v759
    %1914 = vmatpush.msra.mxu0 %v756
    %1915 = vmatpush.msra.mxu0 %v753
    %1916 = vmatpush.msra.mxu0 %v750
    %1917 = vmatpush.msra.mxu0 %v747
    %1918 = vmatpush.msra.mxu0 %v744
    %1919 = vmatpush.msra.mxu0 %v741
    %1920 = vmatpush.msra.mxu0 %v738
    %1921 = vmatpush.msra.mxu0 %v735
    %1922 = vmatpush.msra.mxu0 %v732
    %1923 = vmatpush.msra.mxu0 %v729
    %1924 = vmatpush.msra.mxu0 %v726
    %1925 = vmatpush.msra.mxu0 %v723
    %1926 = vmatpush.msra.mxu0 %v720
    %1927 = vmatmul.f32.gmra.mxu0 %v1844
    %v1928 = vpop.f32.mrf.mxu0
    %v1929 = vadd.f32 %v819, %v1928
    %1930 = vdwg.mxu0
    %1931 = vmatpush.msra.mxu0 %v766
    %1932 = vmatpush.msra.mxu0 %v763
    %1933 = vmatpush.msra.mxu0 %v760
    %1934 = vmatpush.msra.mxu0 %v757
    %1935 = vmatpush.msra.mxu0 %v754
    %1936 = vmatpush.msra.mxu0 %v751
    %1937 = vmatpush.msra.mxu0 %v748
    %1938 = vmatpush.msra.mxu0 %v745
    %1939 = vmatpush.msra.mxu0 %v742
    %1940 = vmatpush.msra.mxu0 %v739
    %1941 = vmatpush.msra.mxu0 %v736
    %1942 = vmatpush.msra.mxu0 %v733
    %1943 = vmatpush.msra.mxu0 %v730
    %1944 = vmatpush.msra.mxu0 %v727
    %1945 = vmatpush.msra.mxu0 %v724
    %1946 = vmatpush.msra.mxu0 %v721
    %1947 = vmatmul.f32.gmra.mxu0 %v1844
    %v1948 = vpop.f32.mrf.mxu0
    %v1949 = vadd.f32 %v820, %v1948
    %1950 = vdwg.mxu0
    %1951 = vmatpush.msra.mxu0 %v812
    %1952 = vmatpush.msra.mxu0 %v809
    %1953 = vmatpush.msra.mxu0 %v806
    %1954 = vmatpush.msra.mxu0 %v803
    %1955 = vmatpush.msra.mxu0 %v800
    %1956 = vmatpush.msra.mxu0 %v797
    %1957 = vmatpush.msra.mxu0 %v794
    %1958 = vmatpush.msra.mxu0 %v791
    %1959 = vmatpush.msra.mxu0 %v788
    %1960 = vmatpush.msra.mxu0 %v785
    %1961 = vmatpush.msra.mxu0 %v782
    %1962 = vmatpush.msra.mxu0 %v779
    %1963 = vmatpush.msra.mxu0 %v776
    %1964 = vmatpush.msra.mxu0 %v773
    %1965 = vmatpush.msra.mxu0 %v770
    %1966 = vmatpush.msra.mxu0 %v767
    %1967 = vmatmul.f32.gmra.mxu0 %v1890
    %v1968 = vpop.f32.mrf.mxu0
    %v1969 = vadd.f32 %v885, %v1968
    %1970 = vdwg.mxu0
    %1971 = vmatpush.msra.mxu0 %v813
    %1972 = vmatpush.msra.mxu0 %v810
    %1973 = vmatpush.msra.mxu0 %v807
    %1974 = vmatpush.msra.mxu0 %v804
    %1975 = vmatpush.msra.mxu0 %v801
    %1976 = vmatpush.msra.mxu0 %v798
    %1977 = vmatpush.msra.mxu0 %v795
    %1978 = vmatpush.msra.mxu0 %v792
    %1979 = vmatpush.msra.mxu0 %v789
    %1980 = vmatpush.msra.mxu0 %v786
    %1981 = vmatpush.msra.mxu0 %v783
    %1982 = vmatpush.msra.mxu0 %v780
    %1983 = vmatpush.msra.mxu0 %v777
    %1984 = vmatpush.msra.mxu0 %v774
    %1985 = vmatpush.msra.mxu0 %v771
    %1986 = vmatpush.msra.mxu0 %v768
    %1987 = vmatmul.f32.gmra.mxu0 %v1890
    %v1988 = vpop.f32.mrf.mxu0
    %v1989 = vadd.f32 %v886, %v1988
    %1990 = vdwg.mxu0
    %1991 = vmatpush.msra.mxu0 %v814
    %1992 = vmatpush.msra.mxu0 %v811
    %1993 = vmatpush.msra.mxu0 %v808
    %1994 = vmatpush.msra.mxu0 %v805
    %1995 = vmatpush.msra.mxu0 %v802
    %1996 = vmatpush.msra.mxu0 %v799
    %1997 = vmatpush.msra.mxu0 %v796
    %1998 = vmatpush.msra.mxu0 %v793
    %1999 = vmatpush.msra.mxu0 %v790
    %2000 = vmatpush.msra.mxu0 %v787
    %2001 = vmatpush.msra.mxu0 %v784
    %2002 = vmatpush.msra.mxu0 %v781
    %2003 = vmatpush.msra.mxu0 %v778
    %2004 = vmatpush.msra.mxu0 %v775
    %2005 = vmatpush.msra.mxu0 %v772
    %2006 = vmatpush.msra.mxu0 %v769
    %2007 = vmatmul.f32.gmra.mxu0 %v1890
    %v2008 = vpop.f32.mrf.mxu0
    %v2009 = vadd.f32 %v887, %v2008
    %2010 = vdwg.mxu0
    %v2011 = vadd.f32 %v427, %v1909
    %v2012 = vxor.u32 %v2011, 2147483648
    %v2013 = vmul.f32 %v2012, 1.442695
    %v2014 = vpow.pop %v2013
    %v2015 = vadd.f32 %v2014, 1.0
    %v2016 = vrcp.pop %v2015
    %v2017 = vmul.f32 %v2015, %v2016
    %v2018 = vsub.f32 1.0, %v2017
    %v2019 = vmul.f32 %v2016, %v2018
    %v2020 = vadd.f32 %v2016, %v2019
    %vm2021 = vweird.f32 %v2015
    %vm2022 = vweird.f32 %v2016
    %vm2023 = vmor %vm2021, %vm2022
    %v2024 = vsel %vm2023, %v2016, %v2020
    %v2025 = vand.u32 2147483647, %v2015
    %vm2026 = vcmp.eq.f32.partialorder %v2025, 8.507059e+37
    %v2027 = vand.u32 %v2015, 2147483648
    %v2028 = vor.u32 1.1754944e-38, %v2027
    %v2029 = vsel %vm2026, %v2028, %v2024
    %v2030 = vmul.f32 1.0, %v2029
    %v2031 = vadd.f32 %v557, %v1929
    %v2032 = vxor.u32 %v2031, 2147483648
    %v2033 = vmul.f32 %v2032, 1.442695
    %v2034 = vpow.pop %v2033
    %v2035 = vadd.f32 %v2034, 1.0
    %v2036 = vrcp.pop %v2035
    %v2037 = vmul.f32 %v2035, %v2036
    %v2038 = vsub.f32 1.0, %v2037
    %v2039 = vmul.f32 %v2036, %v2038
    %v2040 = vadd.f32 %v2036, %v2039
    %vm2041 = vweird.f32 %v2035
    %vm2042 = vweird.f32 %v2036
    %vm2043 = vmor %vm2041, %vm2042
    %v2044 = vsel %vm2043, %v2036, %v2040
    %v2045 = vand.u32 2147483647, %v2035
    %vm2046 = vcmp.eq.f32.partialorder %v2045, 8.507059e+37
    %v2047 = vand.u32 %v2035, 2147483648
    %v2048 = vor.u32 1.1754944e-38, %v2047
    %v2049 = vsel %vm2046, %v2048, %v2044
    %v2050 = vmul.f32 1.0, %v2049
    %v2051 = vmul.f32 %v2030, %v1949
    %v2052 = vadd.f32 %v687, %v2051
    %v2053 = vtanh.pop %v2052
    %v2054 = vsub.f32 %v1844, %v2053
    %v2055 = vmul.f32 %v2050, %v2054
    %v2056 = vadd.f32 %v2053, %v2055
    %v2057 = vadd.f32 %v451, %v1969
    %v2058 = vxor.u32 %v2057, 2147483648
    %v2059 = vmul.f32 %v2058, 1.442695
    %v2060 = vpow.pop %v2059
    %v2061 = vadd.f32 %v2060, 1.0
    %v2062 = vrcp.pop %v2061
    %v2063 = vmul.f32 %v2061, %v2062
    %v2064 = vsub.f32 1.0, %v2063
    %v2065 = vmul.f32 %v2062, %v2064
    %v2066 = vadd.f32 %v2062, %v2065
    %vm2067 = vweird.f32 %v2061
    %vm2068 = vweird.f32 %v2062
    %vm2069 = vmor %vm2067, %vm2068
    %v2070 = vsel %vm2069, %v2062, %v2066
    %v2071 = vand.u32 2147483647, %v2061
    %vm2072 = vcmp.eq.f32.partialorder %v2071, 8.507059e+37
    %v2073 = vand.u32 %v2061, 2147483648
    %v2074 = vor.u32 1.1754944e-38, %v2073
    %v2075 = vsel %vm2072, %v2074, %v2070
    %v2076 = vmul.f32 1.0, %v2075
    %v2077 = vadd.f32 %v581, %v1989
    %v2078 = vxor.u32 %v2077, 2147483648
    %v2079 = vmul.f32 %v2078, 1.442695
    %v2080 = vpow.pop %v2079
    %v2081 = vadd.f32 %v2080, 1.0
    %v2082 = vrcp.pop %v2081
    %v2083 = vmul.f32 %v2081, %v2082
    %v2084 = vsub.f32 1.0, %v2083
    %v2085 = vmul.f32 %v2082, %v2084
    %v2086 = vadd.f32 %v2082, %v2085
    %vm2087 = vweird.f32 %v2081
    %vm2088 = vweird.f32 %v2082
    %vm2089 = vmor %vm2087, %vm2088
    %v2090 = vsel %vm2089, %v2082, %v2086
    %v2091 = vand.u32 2147483647, %v2081
    %vm2092 = vcmp.eq.f32.partialorder %v2091, 8.507059e+37
    %v2093 = vand.u32 %v2081, 2147483648
    %v2094 = vor.u32 1.1754944e-38, %v2093
    %v2095 = vsel %vm2092, %v2094, %v2090
    %v2096 = vmul.f32 1.0, %v2095
    %v2097 = vmul.f32 %v2076, %v2009
    %v2098 = vadd.f32 %v711, %v2097
    %v2099 = vtanh.pop %v2098
    %v2100 = vsub.f32 %v1890, %v2099
    %v2101 = vmul.f32 %v2096, %v2100
    %v2102 = vadd.f32 %v2099, %v2101
    %2103 = vmatpush.msra.mxu0 %v764
    %2104 = vmatpush.msra.mxu0 %v761
    %2105 = vmatpush.msra.mxu0 %v758
    %2106 = vmatpush.msra.mxu0 %v755
    %2107 = vmatpush.msra.mxu0 %v752
    %2108 = vmatpush.msra.mxu0 %v749
    %2109 = vmatpush.msra.mxu0 %v746
    %2110 = vmatpush.msra.mxu0 %v743
    %2111 = vmatpush.msra.mxu0 %v740
    %2112 = vmatpush.msra.mxu0 %v737
    %2113 = vmatpush.msra.mxu0 %v734
    %2114 = vmatpush.msra.mxu0 %v731
    %2115 = vmatpush.msra.mxu0 %v728
    %2116 = vmatpush.msra.mxu0 %v725
    %2117 = vmatpush.msra.mxu0 %v722
    %2118 = vmatpush.msra.mxu0 %v719
    %2119 = vmatmul.f32.gmra.mxu0 %v2056
    %v2120 = vpop.f32.mrf.mxu0
    %v2121 = vadd.f32 %v818, %v2120
    %2122 = vdwg.mxu0
    %2123 = vmatpush.msra.mxu0 %v765
    %2124 = vmatpush.msra.mxu0 %v762
    %2125 = vmatpush.msra.mxu0 %v759
    %2126 = vmatpush.msra.mxu0 %v756
    %2127 = vmatpush.msra.mxu0 %v753
    %2128 = vmatpush.msra.mxu0 %v750
    %2129 = vmatpush.msra.mxu0 %v747
    %2130 = vmatpush.msra.mxu0 %v744
    %2131 = vmatpush.msra.mxu0 %v741
    %2132 = vmatpush.msra.mxu0 %v738
    %2133 = vmatpush.msra.mxu0 %v735
    %2134 = vmatpush.msra.mxu0 %v732
    %2135 = vmatpush.msra.mxu0 %v729
    %2136 = vmatpush.msra.mxu0 %v726
    %2137 = vmatpush.msra.mxu0 %v723
    %2138 = vmatpush.msra.mxu0 %v720
    %2139 = vmatmul.f32.gmra.mxu0 %v2056
    %v2140 = vpop.f32.mrf.mxu0
    %v2141 = vadd.f32 %v819, %v2140
    %2142 = vdwg.mxu0
    %2143 = vmatpush.msra.mxu0 %v766
    %2144 = vmatpush.msra.mxu0 %v763
    %2145 = vmatpush.msra.mxu0 %v760
    %2146 = vmatpush.msra.mxu0 %v757
    %2147 = vmatpush.msra.mxu0 %v754
    %2148 = vmatpush.msra.mxu0 %v751
    %2149 = vmatpush.msra.mxu0 %v748
    %2150 = vmatpush.msra.mxu0 %v745
    %2151 = vmatpush.msra.mxu0 %v742
    %2152 = vmatpush.msra.mxu0 %v739
    %2153 = vmatpush.msra.mxu0 %v736
    %2154 = vmatpush.msra.mxu0 %v733
    %2155 = vmatpush.msra.mxu0 %v730
    %2156 = vmatpush.msra.mxu0 %v727
    %2157 = vmatpush.msra.mxu0 %v724
    %2158 = vmatpush.msra.mxu0 %v721
    %2159 = vmatmul.f32.gmra.mxu0 %v2056
    %v2160 = vpop.f32.mrf.mxu0
    %v2161 = vadd.f32 %v820, %v2160
    %2162 = vdwg.mxu0
    %2163 = vmatpush.msra.mxu0 %v812
    %2164 = vmatpush.msra.mxu0 %v809
    %2165 = vmatpush.msra.mxu0 %v806
    %2166 = vmatpush.msra.mxu0 %v803
    %2167 = vmatpush.msra.mxu0 %v800
    %2168 = vmatpush.msra.mxu0 %v797
    %2169 = vmatpush.msra.mxu0 %v794
    %2170 = vmatpush.msra.mxu0 %v791
    %2171 = vmatpush.msra.mxu0 %v788
    %2172 = vmatpush.msra.mxu0 %v785
    %2173 = vmatpush.msra.mxu0 %v782
    %2174 = vmatpush.msra.mxu0 %v779
    %2175 = vmatpush.msra.mxu0 %v776
    %2176 = vmatpush.msra.mxu0 %v773
    %2177 = vmatpush.msra.mxu0 %v770
    %2178 = vmatpush.msra.mxu0 %v767
    %2179 = vmatmul.f32.gmra.mxu0 %v2102
    %v2180 = vpop.f32.mrf.mxu0
    %v2181 = vadd.f32 %v885, %v2180
    %2182 = vdwg.mxu0
    %2183 = vmatpush.msra.mxu0 %v813
    %2184 = vmatpush.msra.mxu0 %v810
    %2185 = vmatpush.msra.mxu0 %v807
    %2186 = vmatpush.msra.mxu0 %v804
    %2187 = vmatpush.msra.mxu0 %v801
    %2188 = vmatpush.msra.mxu0 %v798
    %2189 = vmatpush.msra.mxu0 %v795
    %2190 = vmatpush.msra.mxu0 %v792
    %2191 = vmatpush.msra.mxu0 %v789
    %2192 = vmatpush.msra.mxu0 %v786
    %2193 = vmatpush.msra.mxu0 %v783
    %2194 = vmatpush.msra.mxu0 %v780
    %2195 = vmatpush.msra.mxu0 %v777
    %2196 = vmatpush.msra.mxu0 %v774
    %2197 = vmatpush.msra.mxu0 %v771
    %2198 = vmatpush.msra.mxu0 %v768
    %2199 = vmatmul.f32.gmra.mxu0 %v2102
    %v2200 = vpop.f32.mrf.mxu0
    %v2201 = vadd.f32 %v886, %v2200
    %2202 = vdwg.mxu0
    %2203 = vmatpush.msra.mxu0 %v814
    %2204 = vmatpush.msra.mxu0 %v811
    %2205 = vmatpush.msra.mxu0 %v808
    %2206 = vmatpush.msra.mxu0 %v805
    %2207 = vmatpush.msra.mxu0 %v802
    %2208 = vmatpush.msra.mxu0 %v799
    %2209 = vmatpush.msra.mxu0 %v796
    %2210 = vmatpush.msra.mxu0 %v793
    %2211 = vmatpush.msra.mxu0 %v790
    %2212 = vmatpush.msra.mxu0 %v787
    %2213 = vmatpush.msra.mxu0 %v784
    %2214 = vmatpush.msra.mxu0 %v781
    %2215 = vmatpush.msra.mxu0 %v778
    %2216 = vmatpush.msra.mxu0 %v775
    %2217 = vmatpush.msra.mxu0 %v772
    %2218 = vmatpush.msra.mxu0 %v769
    %2219 = vmatmul.f32.gmra.mxu0 %v2102
    %v2220 = vpop.f32.mrf.mxu0
    %v2221 = vadd.f32 %v887, %v2220
    %2222 = vdwg.mxu0
    %v2223 = vadd.f32 %v430, %v2121
    %v2224 = vxor.u32 %v2223, 2147483648
    %v2225 = vmul.f32 %v2224, 1.442695
    %v2226 = vpow.pop %v2225
    %v2227 = vadd.f32 %v2226, 1.0
    %v2228 = vrcp.pop %v2227
    %v2229 = vmul.f32 %v2227, %v2228
    %v2230 = vsub.f32 1.0, %v2229
    %v2231 = vmul.f32 %v2228, %v2230
    %v2232 = vadd.f32 %v2228, %v2231
    %vm2233 = vweird.f32 %v2227
    %vm2234 = vweird.f32 %v2228
    %vm2235 = vmor %vm2233, %vm2234
    %v2236 = vsel %vm2235, %v2228, %v2232
    %v2237 = vand.u32 2147483647, %v2227
    %vm2238 = vcmp.eq.f32.partialorder %v2237, 8.507059e+37
    %v2239 = vand.u32 %v2227, 2147483648
    %v2240 = vor.u32 1.1754944e-38, %v2239
    %v2241 = vsel %vm2238, %v2240, %v2236
    %v2242 = vmul.f32 1.0, %v2241
    %v2243 = vadd.f32 %v560, %v2141
    %v2244 = vxor.u32 %v2243, 2147483648
    %v2245 = vmul.f32 %v2244, 1.442695
    %v2246 = vpow.pop %v2245
    %v2247 = vadd.f32 %v2246, 1.0
    %v2248 = vrcp.pop %v2247
    %v2249 = vmul.f32 %v2247, %v2248
    %v2250 = vsub.f32 1.0, %v2249
    %v2251 = vmul.f32 %v2248, %v2250
    %v2252 = vadd.f32 %v2248, %v2251
    %vm2253 = vweird.f32 %v2247
    %vm2254 = vweird.f32 %v2248
    %vm2255 = vmor %vm2253, %vm2254
    %v2256 = vsel %vm2255, %v2248, %v2252
    %v2257 = vand.u32 2147483647, %v2247
    %vm2258 = vcmp.eq.f32.partialorder %v2257, 8.507059e+37
    %v2259 = vand.u32 %v2247, 2147483648
    %v2260 = vor.u32 1.1754944e-38, %v2259
    %v2261 = vsel %vm2258, %v2260, %v2256
    %v2262 = vmul.f32 1.0, %v2261
    %v2263 = vmul.f32 %v2242, %v2161
    %v2264 = vadd.f32 %v690, %v2263
    %v2265 = vtanh.pop %v2264
    %v2266 = vsub.f32 %v2056, %v2265
    %v2267 = vmul.f32 %v2262, %v2266
    %v2268 = vadd.f32 %v2265, %v2267
    %v2269 = vadd.f32 %v454, %v2181
    %v2270 = vxor.u32 %v2269, 2147483648
    %v2271 = vmul.f32 %v2270, 1.442695
    %v2272 = vpow.pop %v2271
    %v2273 = vadd.f32 %v2272, 1.0
    %v2274 = vrcp.pop %v2273
    %v2275 = vmul.f32 %v2273, %v2274
    %v2276 = vsub.f32 1.0, %v2275
    %v2277 = vmul.f32 %v2274, %v2276
    %v2278 = vadd.f32 %v2274, %v2277
    %vm2279 = vweird.f32 %v2273
    %vm2280 = vweird.f32 %v2274
    %vm2281 = vmor %vm2279, %vm2280
    %v2282 = vsel %vm2281, %v2274, %v2278
    %v2283 = vand.u32 2147483647, %v2273
    %vm2284 = vcmp.eq.f32.partialorder %v2283, 8.507059e+37
    %v2285 = vand.u32 %v2273, 2147483648
    %v2286 = vor.u32 1.1754944e-38, %v2285
    %v2287 = vsel %vm2284, %v2286, %v2282
    %v2288 = vmul.f32 1.0, %v2287
    %v2289 = vadd.f32 %v584, %v2201
    %v2290 = vxor.u32 %v2289, 2147483648
    %v2291 = vmul.f32 %v2290, 1.442695
    %v2292 = vpow.pop %v2291
    %v2293 = vadd.f32 %v2292, 1.0
    %v2294 = vrcp.pop %v2293
    %v2295 = vmul.f32 %v2293, %v2294
    %v2296 = vsub.f32 1.0, %v2295
    %v2297 = vmul.f32 %v2294, %v2296
    %v2298 = vadd.f32 %v2294, %v2297
    %vm2299 = vweird.f32 %v2293
    %vm2300 = vweird.f32 %v2294
    %vm2301 = vmor %vm2299, %vm2300
    %v2302 = vsel %vm2301, %v2294, %v2298
    %v2303 = vand.u32 2147483647, %v2293
    %vm2304 = vcmp.eq.f32.partialorder %v2303, 8.507059e+37
    %v2305 = vand.u32 %v2293, 2147483648
    %v2306 = vor.u32 1.1754944e-38, %v2305
    %v2307 = vsel %vm2304, %v2306, %v2302
    %v2308 = vmul.f32 1.0, %v2307
    %v2309 = vmul.f32 %v2288, %v2221
    %v2310 = vadd.f32 %v714, %v2309
    %v2311 = vtanh.pop %v2310
    %v2312 = vsub.f32 %v2102, %v2311
    %v2313 = vmul.f32 %v2308, %v2312
    %v2314 = vadd.f32 %v2311, %v2313
    %2315 = vmatpush.msra.mxu0 %v764
    %2316 = vmatpush.msra.mxu0 %v761
    %2317 = vmatpush.msra.mxu0 %v758
    %2318 = vmatpush.msra.mxu0 %v755
    %2319 = vmatpush.msra.mxu0 %v752
    %2320 = vmatpush.msra.mxu0 %v749
    %2321 = vmatpush.msra.mxu0 %v746
    %2322 = vmatpush.msra.mxu0 %v743
    %2323 = vmatpush.msra.mxu0 %v740
    %2324 = vmatpush.msra.mxu0 %v737
    %2325 = vmatpush.msra.mxu0 %v734
    %2326 = vmatpush.msra.mxu0 %v731
    %2327 = vmatpush.msra.mxu0 %v728
    %2328 = vmatpush.msra.mxu0 %v725
    %2329 = vmatpush.msra.mxu0 %v722
    %2330 = vmatpush.msra.mxu0 %v719
    %2331 = vmatmul.f32.gmra.mxu0 %v2268
    %v2332 = vpop.f32.mrf.mxu0
    %v2333 = vadd.f32 %v818, %v2332
    %2334 = vdwg.mxu0
    %2335 = vmatpush.msra.mxu0 %v765
    %2336 = vmatpush.msra.mxu0 %v762
    %2337 = vmatpush.msra.mxu0 %v759
    %2338 = vmatpush.msra.mxu0 %v756
    %2339 = vmatpush.msra.mxu0 %v753
    %2340 = vmatpush.msra.mxu0 %v750
    %2341 = vmatpush.msra.mxu0 %v747
    %2342 = vmatpush.msra.mxu0 %v744
    %2343 = vmatpush.msra.mxu0 %v741
    %2344 = vmatpush.msra.mxu0 %v738
    %2345 = vmatpush.msra.mxu0 %v735
    %2346 = vmatpush.msra.mxu0 %v732
    %2347 = vmatpush.msra.mxu0 %v729
    %2348 = vmatpush.msra.mxu0 %v726
    %2349 = vmatpush.msra.mxu0 %v723
    %2350 = vmatpush.msra.mxu0 %v720
    %2351 = vmatmul.f32.gmra.mxu0 %v2268
    %v2352 = vpop.f32.mrf.mxu0
    %v2353 = vadd.f32 %v819, %v2352
    %2354 = vdwg.mxu0
    %2355 = vmatpush.msra.mxu0 %v766
    %2356 = vmatpush.msra.mxu0 %v763
    %2357 = vmatpush.msra.mxu0 %v760
    %2358 = vmatpush.msra.mxu0 %v757
    %2359 = vmatpush.msra.mxu0 %v754
    %2360 = vmatpush.msra.mxu0 %v751
    %2361 = vmatpush.msra.mxu0 %v748
    %2362 = vmatpush.msra.mxu0 %v745
    %2363 = vmatpush.msra.mxu0 %v742
    %2364 = vmatpush.msra.mxu0 %v739
    %2365 = vmatpush.msra.mxu0 %v736
    %2366 = vmatpush.msra.mxu0 %v733
    %2367 = vmatpush.msra.mxu0 %v730
    %2368 = vmatpush.msra.mxu0 %v727
    %2369 = vmatpush.msra.mxu0 %v724
    %2370 = vmatpush.msra.mxu0 %v721
    %2371 = vmatmul.f32.gmra.mxu0 %v2268
    %v2372 = vpop.f32.mrf.mxu0
    %v2373 = vadd.f32 %v820, %v2372
    %2374 = vdwg.mxu0
    %2375 = vmatpush.msra.mxu0 %v812
    %2376 = vmatpush.msra.mxu0 %v809
    %2377 = vmatpush.msra.mxu0 %v806
    %2378 = vmatpush.msra.mxu0 %v803
    %2379 = vmatpush.msra.mxu0 %v800
    %2380 = vmatpush.msra.mxu0 %v797
    %2381 = vmatpush.msra.mxu0 %v794
    %2382 = vmatpush.msra.mxu0 %v791
    %2383 = vmatpush.msra.mxu0 %v788
    %2384 = vmatpush.msra.mxu0 %v785
    %2385 = vmatpush.msra.mxu0 %v782
    %2386 = vmatpush.msra.mxu0 %v779
    %2387 = vmatpush.msra.mxu0 %v776
    %2388 = vmatpush.msra.mxu0 %v773
    %2389 = vmatpush.msra.mxu0 %v770
    %2390 = vmatpush.msra.mxu0 %v767
    %2391 = vmatmul.f32.gmra.mxu0 %v2314
    %v2392 = vpop.f32.mrf.mxu0
    %v2393 = vadd.f32 %v885, %v2392
    %2394 = vdwg.mxu0
    %2395 = vmatpush.msra.mxu0 %v813
    %2396 = vmatpush.msra.mxu0 %v810
    %2397 = vmatpush.msra.mxu0 %v807
    %2398 = vmatpush.msra.mxu0 %v804
    %2399 = vmatpush.msra.mxu0 %v801
    %2400 = vmatpush.msra.mxu0 %v798
    %2401 = vmatpush.msra.mxu0 %v795
    %2402 = vmatpush.msra.mxu0 %v792
    %2403 = vmatpush.msra.mxu0 %v789
    %2404 = vmatpush.msra.mxu0 %v786
    %2405 = vmatpush.msra.mxu0 %v783
    %2406 = vmatpush.msra.mxu0 %v780
    %2407 = vmatpush.msra.mxu0 %v777
    %2408 = vmatpush.msra.mxu0 %v774
    %2409 = vmatpush.msra.mxu0 %v771
    %2410 = vmatpush.msra.mxu0 %v768
    %2411 = vmatmul.f32.gmra.mxu0 %v2314
    %v2412 = vpop.f32.mrf.mxu0
    %v2413 = vadd.f32 %v886, %v2412
    %2414 = vdwg.mxu0
    %2415 = vmatpush.msra.mxu0 %v814
    %2416 = vmatpush.msra.mxu0 %v811
    %2417 = vmatpush.msra.mxu0 %v808
    %2418 = vmatpush.msra.mxu0 %v805
    %2419 = vmatpush.msra.mxu0 %v802
    %2420 = vmatpush.msra.mxu0 %v799
    %2421 = vmatpush.msra.mxu0 %v796
    %2422 = vmatpush.msra.mxu0 %v793
    %2423 = vmatpush.msra.mxu0 %v790
    %2424 = vmatpush.msra.mxu0 %v787
    %2425 = vmatpush.msra.mxu0 %v784
    %2426 = vmatpush.msra.mxu0 %v781
    %2427 = vmatpush.msra.mxu0 %v778
    %2428 = vmatpush.msra.mxu0 %v775
    %2429 = vmatpush.msra.mxu0 %v772
    %2430 = vmatpush.msra.mxu0 %v769
    %2431 = vmatmul.f32.gmra.mxu0 %v2314
    %v2432 = vpop.f32.mrf.mxu0
    %v2433 = vadd.f32 %v887, %v2432
    %2434 = vdwg.mxu0
    %v2435 = vadd.f32 %v433, %v2333
    %v2436 = vxor.u32 %v2435, 2147483648
    %v2437 = vmul.f32 %v2436, 1.442695
    %v2438 = vpow.pop %v2437
    %v2439 = vadd.f32 %v2438, 1.0
    %v2440 = vrcp.pop %v2439
    %v2441 = vmul.f32 %v2439, %v2440
    %v2442 = vsub.f32 1.0, %v2441
    %v2443 = vmul.f32 %v2440, %v2442
    %v2444 = vadd.f32 %v2440, %v2443
    %vm2445 = vweird.f32 %v2439
    %vm2446 = vweird.f32 %v2440
    %vm2447 = vmor %vm2445, %vm2446
    %v2448 = vsel %vm2447, %v2440, %v2444
    %v2449 = vand.u32 2147483647, %v2439
    %vm2450 = vcmp.eq.f32.partialorder %v2449, 8.507059e+37
    %v2451 = vand.u32 %v2439, 2147483648
    %v2452 = vor.u32 1.1754944e-38, %v2451
    %v2453 = vsel %vm2450, %v2452, %v2448
    %v2454 = vmul.f32 1.0, %v2453
    %v2455 = vadd.f32 %v563, %v2353
    %v2456 = vxor.u32 %v2455, 2147483648
    %v2457 = vmul.f32 %v2456, 1.442695
    %v2458 = vpow.pop %v2457
    %v2459 = vadd.f32 %v2458, 1.0
    %v2460 = vrcp.pop %v2459
    %v2461 = vmul.f32 %v2459, %v2460
    %v2462 = vsub.f32 1.0, %v2461
    %v2463 = vmul.f32 %v2460, %v2462
    %v2464 = vadd.f32 %v2460, %v2463
    %vm2465 = vweird.f32 %v2459
    %vm2466 = vweird.f32 %v2460
    %vm2467 = vmor %vm2465, %vm2466
    %v2468 = vsel %vm2467, %v2460, %v2464
    %v2469 = vand.u32 2147483647, %v2459
    %vm2470 = vcmp.eq.f32.partialorder %v2469, 8.507059e+37
    %v2471 = vand.u32 %v2459, 2147483648
    %v2472 = vor.u32 1.1754944e-38, %v2471
    %v2473 = vsel %vm2470, %v2472, %v2468
    %v2474 = vmul.f32 1.0, %v2473
    %v2475 = vmul.f32 %v2454, %v2373
    %v2476 = vadd.f32 %v693, %v2475
    %v2477 = vtanh.pop %v2476
    %v2478 = vsub.f32 %v2268, %v2477
    %v2479 = vmul.f32 %v2474, %v2478
    %v2480 = vadd.f32 %v2477, %v2479
    %v2481 = vadd.f32 %v457, %v2393
    %v2482 = vxor.u32 %v2481, 2147483648
    %v2483 = vmul.f32 %v2482, 1.442695
    %v2484 = vpow.pop %v2483
    %v2485 = vadd.f32 %v2484, 1.0
    %v2486 = vrcp.pop %v2485
    %v2487 = vmul.f32 %v2485, %v2486
    %v2488 = vsub.f32 1.0, %v2487
    %v2489 = vmul.f32 %v2486, %v2488
    %v2490 = vadd.f32 %v2486, %v2489
    %vm2491 = vweird.f32 %v2485
    %vm2492 = vweird.f32 %v2486
    %vm2493 = vmor %vm2491, %vm2492
    %v2494 = vsel %vm2493, %v2486, %v2490
    %v2495 = vand.u32 2147483647, %v2485
    %vm2496 = vcmp.eq.f32.partialorder %v2495, 8.507059e+37
    %v2497 = vand.u32 %v2485, 2147483648
    %v2498 = vor.u32 1.1754944e-38, %v2497
    %v2499 = vsel %vm2496, %v2498, %v2494
    %v2500 = vmul.f32 1.0, %v2499
    %v2501 = vadd.f32 %v587, %v2413
    %v2502 = vxor.u32 %v2501, 2147483648
    %v2503 = vmul.f32 %v2502, 1.442695
    %v2504 = vpow.pop %v2503
    %v2505 = vadd.f32 %v2504, 1.0
    %v2506 = vrcp.pop %v2505
    %v2507 = vmul.f32 %v2505, %v2506
    %v2508 = vsub.f32 1.0, %v2507
    %v2509 = vmul.f32 %v2506, %v2508
    %v2510 = vadd.f32 %v2506, %v2509
    %vm2511 = vweird.f32 %v2505
    %vm2512 = vweird.f32 %v2506
    %vm2513 = vmor %vm2511, %vm2512
    %v2514 = vsel %vm2513, %v2506, %v2510
    %v2515 = vand.u32 2147483647, %v2505
    %vm2516 = vcmp.eq.f32.partialorder %v2515, 8.507059e+37
    %v2517 = vand.u32 %v2505, 2147483648
    %v2518 = vor.u32 1.1754944e-38, %v2517
    %v2519 = vsel %vm2516, %v2518, %v2514
    %v2520 = vmul.f32 1.0, %v2519
    %v2521 = vmul.f32 %v2500, %v2433
    %v2522 = vadd.f32 %v717, %v2521
    %v2523 = vtanh.pop %v2522
    %v2524 = vsub.f32 %v2314, %v2523
    %v2525 = vmul.f32 %v2520, %v2524
    %v2526 = vadd.f32 %v2523, %v2525
    %2527 = vst [vmem:[%s6] sm:$0xff] %v2480
    %2528 = vst [vmem:[%s6 + $0x8] sm:$0xff] %v2526
    // Predicated region
    $region38: #{text_recurrent_layer.1} parent=1 // pred_check
      _
    $region39: #{text_recurrent_layer.1} parent=1 // pred_check_branch
      %2530 = sbr.rel (0) target = $region41
    $region40: #{text_recurrent_layer.1} parent=1 // pred_region
      _
    $region41: #{text_recurrent_layer.1} parent=1 // pred_fallthru
      _
    // Predicated region
    $region42: #{text_recurrent_layer.1} parent=1 // pred_check
      _
    $region43: #{text_recurrent_layer.1} parent=1 // pred_check_branch
      %2532 = sbr.rel (0) target = $region45
    $region44: #{text_recurrent_layer.1} parent=1 // pred_region
      _
    $region45: #{text_recurrent_layer.1} parent=1 // pred_fallthru
      _
    %2533 = vsyncpa [#allocation3], 1
    %2534 = vsyncpa [#allocation5], 1

</llo_original>
